<compile_context>
chip_gen: v6e
topology: v6e:2x2x1
jax: 0.10.0
libtpu: 0.0.40
codegen_flags: <defaults>
</compile_context>

<pallas_src>
import jax
import jax.numpy as jnp
from jax.experimental import pallas as pl
from jax.experimental.pallas import tpu as pltpu  # noqa: F401  (TPU backend)

# ---------------- sizes (small, consistent with the module) ----------------
B = 2                    # batch
C = 4                    # image channels
IMG = 16                 # image H = W
PATCH = 4                # patch size for the stand-in encoder
P = (IMG // PATCH) ** 2  # num_pixels = 16
PATCH_DIM = C * PATCH * PATCH  # 64
ENC_DIM = 32             # encoder_dim (2048 in the real model)
ATT_DIM = 16             # attention_dim
EMB_DIM = 16             # embed_dim
HID_DIM = 32             # hidden_dim
VOCAB = 40               # vocab_size
FC_PAD = 64              # fc output zero-padded to 64 lanes (lanes 40..63 = 0)
OUT_W = 128              # packed output width: [preds 0:40 | ... | alpha 64:80]
CAP_LEN = 8              # caption length

# -------- row offsets inside the single packed weight slab (all 8-aligned) --
R_W_PATCH = 0                         # (PATCH_DIM, ENC_DIM)
R_W_EA = R_W_PATCH + PATCH_DIM        # (ENC_DIM, ATT_DIM)
R_W_HATT = R_W_EA + ENC_DIM           # (HID_DIM, ATT_DIM + ENC_DIM)
R_W_INIT = R_W_HATT + HID_DIM         # (ENC_DIM, 2*HID_DIM)
R_W_EMB = R_W_INIT + ENC_DIM          # (EMB_DIM, 4*HID_DIM)
R_W_CTX = R_W_EMB + EMB_DIM           # (ENC_DIM, 4*HID_DIM)
R_W_H = R_W_CTX + ENC_DIM             # (HID_DIM, 4*HID_DIM)
R_W_FC = R_W_H + HID_DIM              # (HID_DIM, FC_PAD)
R_BIAS = R_W_FC + HID_DIM             # 8 bias rows
SLAB_ROWS = R_BIAS + 8                # 280


# ------------------------------ fused kernel -------------------------------
def _caption_kernel(patches_ref, emb_ref, mask_ref, wslab_ref, out_ref):
    npix = P
    bsz = patches_ref.shape[0] // npix
    tb = emb_ref.shape[0]
    T = tb // bsz

    # ---- weights / biases: static slices of the single packed slab ----
    w_patch = wslab_ref[R_W_PATCH:R_W_PATCH + PATCH_DIM, :ENC_DIM]
    w_ea = wslab_ref[R_W_EA:R_W_EA + ENC_DIM, :ATT_DIM]
    w_hatt = wslab_ref[R_W_HATT:R_W_HATT + HID_DIM, :ATT_DIM + ENC_DIM]
    w_init = wslab_ref[R_W_INIT:R_W_INIT + ENC_DIM, :2 * HID_DIM]
    w_emb = wslab_ref[R_W_EMB:R_W_EMB + EMB_DIM, :]
    w_ctx = wslab_ref[R_W_CTX:R_W_CTX + ENC_DIM, :]
    w_hid = wslab_ref[R_W_H:R_W_H + HID_DIM, :]
    w_fc = wslab_ref[R_W_FC:R_W_FC + HID_DIM, :FC_PAD]
    b_patch = wslab_ref[R_BIAS + 0:R_BIAS + 1, :ENC_DIM]
    b_ea = wslab_ref[R_BIAS + 1:R_BIAS + 2, :ATT_DIM]
    b_hatt = wslab_ref[R_BIAS + 2:R_BIAS + 3, :ATT_DIM + ENC_DIM]
    w_ca = wslab_ref[R_BIAS + 3:R_BIAS + 4, :ATT_DIM]
    b_ca = wslab_ref[R_BIAS + 3:R_BIAS + 4, ATT_DIM:ATT_DIM + 1]
    b_init = wslab_ref[R_BIAS + 4:R_BIAS + 5, :2 * HID_DIM]
    b_lstm = wslab_ref[R_BIAS + 5:R_BIAS + 6, :]
    b_fc = wslab_ref[R_BIAS + 6:R_BIAS + 7, :FC_PAD]

    # ---- encoder stand-in: patch projection, one matmul ----
    patches = patches_ref[...]                                   # (B*P, PATCH_DIM)
    enc2 = jnp.dot(patches, w_patch,
                   preferred_element_type=jnp.float32) + b_patch  # (B*P, E)

    # enc_att is h-independent -> hoisted out of the time loop
    enc_att2 = jnp.dot(enc2, w_ea,
                       preferred_element_type=jnp.float32) + b_ea   # (B*P, A)
    enc_att3 = enc_att2.reshape(bsz, npix, ATT_DIM)                 # (B, P, A)

    # per-batch encoder slices, reused by the mean and the attention matvec
    enc_parts = [enc2[b * npix:(b + 1) * npix, :] for b in range(bsz)]   # (P, E)

    # init_lstm_state: one fused (E, 2H) matmul = [init_h | init_c]
    enc_mean = jnp.concatenate(
        [jnp.mean(enc_parts[b], axis=0, keepdims=True) for b in range(bsz)],
        axis=0)                                                      # (B, E)
    hc0 = jnp.dot(enc_mean, w_init,
                  preferred_element_type=jnp.float32) + b_init       # (B, 2H)
    h = hc0[:, :HID_DIM]
    c = hc0[:, HID_DIM:]

    # embedding -> gates contribution hoisted out of the loop (one matmul)
    emb_gates = jnp.dot(emb_ref[...], w_emb,
                        preferred_element_type=jnp.float32) + b_lstm  # (T*B, 4H)
    mask_all = mask_ref[...]                                          # (T*B, 1)

    h_steps = []
    alpha_steps = []
    # Static, small T -> fully-unrolled time loop; h/c carried in registers.
    for t in range(T):
        m = mask_all[t * bsz:(t + 1) * bsz, :]                        # (B, 1)

        # ------------------------------ Attention ---------------------------
        hatt = jnp.dot(h, w_hatt,
                       preferred_element_type=jnp.float32) + b_hatt   # (B, A+E)
        comb = jnp.maximum(enc_att3 + hatt[:, None, :ATT_DIM], 0.0)   # (B, P, A)
        score = jnp.sum(comb * w_ca, axis=-1) + b_ca                  # (B, P)
        score = score - jnp.max(score, axis=-1, keepdims=True)
        ex = jnp.exp(score)
        alpha = ex * pl.reciprocal(jnp.sum(ex, axis=-1, keepdims=True),
                                   approx=True)                       # (B, P)
        # weighted encoder sum on the MXU: per-batch (1,P)x(P,E) matmuls
        weighted = jnp.concatenate(
            [jnp.dot(alpha[b:b + 1, :], enc_parts[b],
                     preferred_element_type=jnp.float32) for b in range(bsz)],
            axis=0)                                                    # (B, E)
        weighted = jax.nn.sigmoid(hatt[:, ATT_DIM:]) * weighted       # beta gate

        # ---------------- LSTMCell, gate layout [i|f|o|g] --------------------
        gates = (emb_gates[t * bsz:(t + 1) * bsz, :]
                 + jnp.dot(weighted, w_ctx, preferred_element_type=jnp.float32)
                 + jnp.dot(h, w_hid, preferred_element_type=jnp.float32))  # (B, 4H)
        sig = jax.nn.sigmoid(gates[:, :3 * HID_DIM])
        i_g = sig[:, :HID_DIM]
        f_g = sig[:, HID_DIM:2 * HID_DIM]
        o_g = sig[:, 2 * HID_DIM:]
        g_g = jnp.tanh(gates[:, 3 * HID_DIM:])
        c_new = f_g * c + i_g * g_g
        h_new = o_g * jnp.tanh(c_new)

        # state only advances for rows whose caption is still active
        h = m * h_new + (1.0 - m) * h
        c = m * c_new + (1.0 - m) * c

        h_steps.append(h_new)
        alpha_steps.append(alpha)

    # -------- fc head + packed output: one matmul, one dense 128-lane store --
    h_all = jnp.concatenate(h_steps, axis=0)                          # (T*B, H)
    alpha_all = jnp.concatenate(alpha_steps, axis=0)                  # (T*B, P)
    preds = jnp.dot(h_all, w_fc,
                    preferred_element_type=jnp.float32) + b_fc        # (T*B, FC_PAD)
    packed = jnp.concatenate(
        [preds, alpha_all,
         jnp.zeros((tb, OUT_W - FC_PAD - npix), jnp.float32)], axis=1)  # (T*B, 128)
    # zero rows for finished captions, matching the torch zero-initialized buffers
    out_ref[...] = mask_all * packed


# ------------------------------- forward pass -------------------------------
def image_captioning_forward(params, x, encoded_captions, caption_lengths):
    bsz, ch, ih, iw = x.shape
    gh, gw = ih // PATCH, iw // PATCH
    npix = gh * gw

    # patch extraction: pure layout plumbing, stays in XLA; pre-flattened 2-D
    patches = x.reshape(bsz, ch, gh, PATCH, gw, PATCH)
    patches = jnp.transpose(patches, (0, 2, 4, 1, 3, 5)).reshape(
        bsz * npix, ch * PATCH * PATCH).astype(jnp.float32)

    lens = [int(l) - 1 for l in caption_lengths]
    T = max(lens)

    # per-(t, b) active mask replicating torch's shrinking [:batch_size_max_L]
    # slicing for sorted-descending lengths (lengths are Python ints).
    mask = jnp.array([[1.0 if lens[b] > t else 0.0]
                      for t in range(T) for b in range(bsz)], jnp.float32)  # (T*B, 1)

    # embedding lookup (gather) stays in XLA; flattened time-major (T*B, EMB)
    emb_all = jnp.take(params['embedding'], encoded_captions, axis=0)       # (B, L, Em)
    emb2d = jnp.transpose(emb_all[:, :T, :], (1, 0, 2)).reshape(
        T * bsz, EMB_DIM).astype(jnp.float32)

    out = pl.pallas_call(
        _caption_kernel,
        out_shape=jax.ShapeDtypeStruct((T * bsz, OUT_W), jnp.float32),
    )(patches, emb2d, mask, params['w_slab'])

    out3 = out.reshape(T, bsz, OUT_W)
    predictions = jnp.transpose(out3[:, :, :VOCAB], (1, 0, 2))              # (B, T, V)
    alphas = jnp.transpose(out3[:, :, FC_PAD:FC_PAD + npix], (1, 0, 2))     # (B, T, P)
    # argmax of zero-filled (finished) rows returns token 0, same as PyTorch's
    # argmax over the zero-initialized prediction buffer.
    token_ids = jnp.argmax(predictions, axis=2)                             # (B, T)
    return predictions, token_ids, alphas


# ------------------------------- parameters --------------------------------
def init_params(key):
    ks = jax.random.split(key, 13)

    def lin(k, din, dout, scale=0.1):
        kw, kb = jax.random.split(k)
        w = jax.random.uniform(kw, (din, dout), jnp.float32, -scale, scale)
        b = jax.random.uniform(kb, (1, dout), jnp.float32, -scale, scale)
        return w, b

    w_patch, b_patch = lin(ks[0], PATCH_DIM, ENC_DIM)   # stand-in encoder projection
    w_ea, b_ea = lin(ks[1], ENC_DIM, ATT_DIM)           # encoderAttentionLayer
    w_ha, b_ha = lin(ks[2], HID_DIM, ATT_DIM)           # hiddenAttentionLayer
    w_ca, b_ca = lin(ks[3], ATT_DIM, 1)                 # combineAttentionLayer
    w_beta, b_beta = lin(ks[4], HID_DIM, ENC_DIM)       # beta gate
    w_h0, b_h0 = lin(ks[5], ENC_DIM, HID_DIM)           # init_h
    w_c0, b_c0 = lin(ks[6], ENC_DIM, HID_DIM)           # init_c

    # torch nn.LSTMCell layout: weight_ih (4H, EMB+ENC), weight_hh (4H, H),
    # gate row-blocks [i, f, g, o]; biases b_ih, b_hh.
    w_ih = jax.random.uniform(ks[7], (4 * HID_DIM, EMB_DIM + ENC_DIM),
                              jnp.float32, -0.1, 0.1)
    w_hh = jax.random.uniform(ks[8], (4 * HID_DIM, HID_DIM), jnp.float32, -0.1, 0.1)
    b_ih = jax.random.uniform(ks[9], (4 * HID_DIM,), jnp.float32, -0.1, 0.1)
    b_hh = jax.random.uniform(ks[10], (4 * HID_DIM,), jnp.float32, -0.1, 0.1)

    # repack gates as [i, f, o, g] so one sigmoid covers a contiguous 3H slice
    def regate(m):                                       # m: (4H, X)
        H = HID_DIM
        return jnp.concatenate([m[0:H], m[H:2 * H], m[3 * H:4 * H], m[2 * H:3 * H]],
                               axis=0)
    w_ih = regate(w_ih)
    w_hh = regate(w_hh)
    b_lstm = regate((b_ih + b_hh)[:, None])[:, 0][None, :]            # (1, 4H)
    w_emb = w_ih[:, :EMB_DIM].T                                       # (EMB, 4H)
    w_ctx = w_ih[:, EMB_DIM:].T                                       # (ENC, 4H)
    w_hid = w_hh.T                                                    # (HID, 4H)

    # fc: bias = 0, weight ~ U(-0.1, 0.1) (matches Decoder.init_weights)
    w_fc = jax.random.uniform(ks[11], (HID_DIM, VOCAB), jnp.float32, -0.1, 0.1)

    # ----- pack every weight/bias into ONE 128-lane f32 slab (one input DMA) ---
    slab = jnp.zeros((SLAB_ROWS, OUT_W), jnp.float32)

    def put(s, row, arr):
        r, c = arr.shape
        return s.at[row:row + r, 0:c].set(arr)

    slab = put(slab, R_W_PATCH, w_patch)
    slab = put(slab, R_W_EA, w_ea)
    slab = put(slab, R_W_HATT, jnp.concatenate([w_ha, w_beta], axis=1))     # (H, A+E)
    slab = put(slab, R_W_INIT, jnp.concatenate([w_h0, w_c0], axis=1))       # (E, 2H)
    slab = put(slab, R_W_EMB, w_emb)
    slab = put(slab, R_W_CTX, w_ctx)
    slab = put(slab, R_W_H, w_hid)
    slab = put(slab, R_W_FC, w_fc)                       # cols VOCAB:FC_PAD stay zero
    slab = put(slab, R_BIAS + 0, b_patch)
    slab = put(slab, R_BIAS + 1, b_ea)
    slab = put(slab, R_BIAS + 2, jnp.concatenate([b_ha, b_beta], axis=1))
    slab = put(slab, R_BIAS + 3, jnp.concatenate([w_ca.T, b_ca], axis=1))   # [w_ca|b_ca]
    slab = put(slab, R_BIAS + 4, jnp.concatenate([b_h0, b_c0], axis=1))
    slab = put(slab, R_BIAS + 5, b_lstm)
    # R_BIAS + 6: fc bias row stays zero (fc.bias.data.fill_(0))

    # frozen embedding (deterministic stand-in for the w2v-initialized table)
    embedding = jax.random.normal(ks[12], (VOCAB, EMB_DIM), jnp.float32)
    return {'w_slab': slab, 'embedding': embedding}


if __name__ == "__main__":
    key = jax.random.PRNGKey(0)
    kp, kx, kc = jax.random.split(key, 3)
    params = init_params(kp)

    x = jax.random.normal(kx, (B, C, IMG, IMG), jnp.float32)          # NCHW image batch
    encoded_captions = jax.random.randint(kc, (B, CAP_LEN), 0, VOCAB)
    caption_lengths = [CAP_LEN, CAP_LEN - 2]   # sorted descending, as the torch loop requires

    predictions, token_ids, alphas = image_captioning_forward(
        params, x, encoded_captions, caption_lengths)
    jax.block_until_ready((predictions, token_ids, alphas))

    T = max(caption_lengths) - 1
    assert predictions.shape == (B, T, VOCAB)
    assert token_ids.shape == (B, T)
    assert alphas.shape == (B, T, P)
    print("KERNEL_OK")
</pallas_src>

<mosaic_0001>
module attributes {stable_mosaic.version = 11 : i64} {
  func.func @_caption_kernel(%arg0: memref<32x64xf32, #tpu.memory_space<vmem>>, %arg1: memref<14x16xf32, #tpu.memory_space<vmem>>, %arg2: memref<14x1xf32, #tpu.memory_space<vmem>>, %arg3: memref<280x128xf32, #tpu.memory_space<vmem>>, %arg4: memref<14x128xf32, #tpu.memory_space<vmem>>) attributes {dimension_semantics = [], scalar_prefetch = 0 : i64, scratch_operands = 0 : i64, tpu.core_type = #tpu.core_type<tc>} {
    %c0 = arith.constant 0 : index
    %c0_0 = arith.constant 0 : index
    %0 = vector.load %arg3[%c0, %c0_0] : memref<280x128xf32, #tpu.memory_space<vmem>>, vector<64x32xf32>
    %c64 = arith.constant 64 : index
    %c0_1 = arith.constant 0 : index
    %1 = vector.load %arg3[%c64, %c0_1] : memref<280x128xf32, #tpu.memory_space<vmem>>, vector<32x16xf32>
    %c96 = arith.constant 96 : index
    %c0_2 = arith.constant 0 : index
    %2 = vector.load %arg3[%c96, %c0_2] : memref<280x128xf32, #tpu.memory_space<vmem>>, vector<32x48xf32>
    %c128 = arith.constant 128 : index
    %c0_3 = arith.constant 0 : index
    %3 = vector.load %arg3[%c128, %c0_3] : memref<280x128xf32, #tpu.memory_space<vmem>>, vector<32x64xf32>
    %c160 = arith.constant 160 : index
    %c0_4 = arith.constant 0 : index
    %4 = vector.load %arg3[%c160, %c0_4] : memref<280x128xf32, #tpu.memory_space<vmem>>, vector<16x128xf32>
    %c176 = arith.constant 176 : index
    %c0_5 = arith.constant 0 : index
    %5 = vector.load %arg3[%c176, %c0_5] : memref<280x128xf32, #tpu.memory_space<vmem>>, vector<32x128xf32>
    %c208 = arith.constant 208 : index
    %c0_6 = arith.constant 0 : index
    %6 = vector.load %arg3[%c208, %c0_6] : memref<280x128xf32, #tpu.memory_space<vmem>>, vector<32x128xf32>
    %c240 = arith.constant 240 : index
    %c0_7 = arith.constant 0 : index
    %7 = vector.load %arg3[%c240, %c0_7] : memref<280x128xf32, #tpu.memory_space<vmem>>, vector<32x64xf32>
    %c272 = arith.constant 272 : index
    %c0_8 = arith.constant 0 : index
    %8 = vector.load %arg3[%c272, %c0_8] : memref<280x128xf32, #tpu.memory_space<vmem>>, vector<1x32xf32>
    %c273 = arith.constant 273 : index
    %c0_9 = arith.constant 0 : index
    %9 = vector.load %arg3[%c273, %c0_9] : memref<280x128xf32, #tpu.memory_space<vmem>>, vector<1x16xf32>
    %c274 = arith.constant 274 : index
    %c0_10 = arith.constant 0 : index
    %10 = vector.load %arg3[%c274, %c0_10] : memref<280x128xf32, #tpu.memory_space<vmem>>, vector<1x48xf32>
    %c275 = arith.constant 275 : index
    %c0_11 = arith.constant 0 : index
    %11 = vector.load %arg3[%c275, %c0_11] : memref<280x128xf32, #tpu.memory_space<vmem>>, vector<1x16xf32>
    %c275_12 = arith.constant 275 : index
    %c16 = arith.constant 16 : index
    %12 = vector.load %arg3[%c275_12, %c16] : memref<280x128xf32, #tpu.memory_space<vmem>>, vector<1x1xf32>
    %c276 = arith.constant 276 : index
    %c0_13 = arith.constant 0 : index
    %13 = vector.load %arg3[%c276, %c0_13] : memref<280x128xf32, #tpu.memory_space<vmem>>, vector<1x64xf32>
    %c277 = arith.constant 277 : index
    %c0_14 = arith.constant 0 : index
    %14 = vector.load %arg3[%c277, %c0_14] : memref<280x128xf32, #tpu.memory_space<vmem>>, vector<1x128xf32>
    %c278 = arith.constant 278 : index
    %c0_15 = arith.constant 0 : index
    %15 = vector.load %arg3[%c278, %c0_15] : memref<280x128xf32, #tpu.memory_space<vmem>>, vector<1x64xf32>
    %c0_16 = arith.constant 0 : index
    %c0_17 = arith.constant 0 : index
    %16 = vector.load %arg0[%c0_16, %c0_17] : memref<32x64xf32, #tpu.memory_space<vmem>>, vector<32x64xf32>
    %cst = arith.constant dense<0.000000e+00> : vector<32x32xf32>
    %17 = tpu.matmul %16, %0, %cst {dimension_numbers = #tpu.dot_dimension_numbers<[1], [0], [0], [1], [0, 0, 1, 1], [], []>} : vector<32x64xf32>, vector<64x32xf32>, vector<32x32xf32> -> vector<32x32xf32>
    %18 = vector.broadcast %8 : vector<1x32xf32> to vector<32x32xf32>
    %19 = arith.addf %17, %18 : vector<32x32xf32>
    %cst_18 = arith.constant dense<0.000000e+00> : vector<32x16xf32>
    %20 = tpu.matmul %19, %1, %cst_18 {dimension_numbers = #tpu.dot_dimension_numbers<[1], [0], [0], [1], [0, 0, 1, 1], [], []>} : vector<32x32xf32>, vector<32x16xf32>, vector<32x16xf32> -> vector<32x16xf32>
    %21 = vector.broadcast %9 : vector<1x16xf32> to vector<32x16xf32>
    %22 = arith.addf %20, %21 : vector<32x16xf32>
    %23 = vector.shape_cast %22 : vector<32x16xf32> to vector<2x16x16xf32>
    %24 = vector.extract_strided_slice %19 {offsets = [0, 0], sizes = [16, 32], strides = [1, 1]} : vector<32x32xf32> to vector<16x32xf32>
    %25 = vector.extract_strided_slice %19 {offsets = [16, 0], sizes = [16, 32], strides = [1, 1]} : vector<32x32xf32> to vector<16x32xf32>
    %cst_19 = arith.constant dense<0.000000e+00> : vector<32xf32>
    %26 = vector.multi_reduction <add>, %24, %cst_19 [0] : vector<16x32xf32> to vector<32xf32>
    %27 = vector.shape_cast %26 : vector<32xf32> to vector<1x32xf32>
    %cst_20 = arith.constant 1.600000e+01 : f32
    %28 = vector.broadcast %cst_20 : f32 to vector<1x32xf32>
    %29 = arith.divf %27, %28 : vector<1x32xf32>
    %cst_21 = arith.constant dense<0.000000e+00> : vector<32xf32>
    %30 = vector.multi_reduction <add>, %25, %cst_21 [0] : vector<16x32xf32> to vector<32xf32>
    %31 = vector.shape_cast %30 : vector<32xf32> to vector<1x32xf32>
    %cst_22 = arith.constant 1.600000e+01 : f32
    %32 = vector.broadcast %cst_22 : f32 to vector<1x32xf32>
    %33 = arith.divf %31, %32 : vector<1x32xf32>
    %34 = tpu.concatenate %29, %33 in 0 : vector<1x32xf32>, vector<1x32xf32> -> vector<2x32xf32>
    %cst_23 = arith.constant dense<0.000000e+00> : vector<2x64xf32>
    %35 = tpu.matmul %34, %3, %cst_23 {dimension_numbers = #tpu.dot_dimension_numbers<[1], [0], [0], [1], [0, 0, 1, 1], [], []>} : vector<2x32xf32>, vector<32x64xf32>, vector<2x64xf32> -> vector<2x64xf32>
    %36 = vector.broadcast %13 : vector<1x64xf32> to vector<2x64xf32>
    %37 = arith.addf %35, %36 : vector<2x64xf32>
    %38 = vector.extract_strided_slice %37 {offsets = [0, 0], sizes = [2, 32], strides = [1, 1]} : vector<2x64xf32> to vector<2x32xf32>
    %39 = vector.extract_strided_slice %37 {offsets = [0, 32], sizes = [2, 32], strides = [1, 1]} : vector<2x64xf32> to vector<2x32xf32>
    %c0_24 = arith.constant 0 : index
    %c0_25 = arith.constant 0 : index
    %40 = vector.load %arg1[%c0_24, %c0_25] : memref<14x16xf32, #tpu.memory_space<vmem>>, vector<14x16xf32>
    %cst_26 = arith.constant dense<0.000000e+00> : vector<14x128xf32>
    %41 = tpu.matmul %40, %4, %cst_26 {dimension_numbers = #tpu.dot_dimension_numbers<[1], [0], [0], [1], [0, 0, 1, 1], [], []>} : vector<14x16xf32>, vector<16x128xf32>, vector<14x128xf32> -> vector<14x128xf32>
    %42 = vector.broadcast %14 : vector<1x128xf32> to vector<14x128xf32>
    %43 = arith.addf %41, %42 : vector<14x128xf32>
    %c0_27 = arith.constant 0 : index
    %c0_28 = arith.constant 0 : index
    %44 = vector.load %arg2[%c0_27, %c0_28] : memref<14x1xf32, #tpu.memory_space<vmem>>, vector<14x1xf32>
    %45 = vector.extract_strided_slice %44 {offsets = [0, 0], sizes = [2, 1], strides = [1, 1]} : vector<14x1xf32> to vector<2x1xf32>
    %cst_29 = arith.constant dense<0.000000e+00> : vector<2x48xf32>
    %46 = tpu.matmul %38, %2, %cst_29 {dimension_numbers = #tpu.dot_dimension_numbers<[1], [0], [0], [1], [0, 0, 1, 1], [], []>} : vector<2x32xf32>, vector<32x48xf32>, vector<2x48xf32> -> vector<2x48xf32>
    %47 = vector.broadcast %10 : vector<1x48xf32> to vector<2x48xf32>
    %48 = arith.addf %46, %47 : vector<2x48xf32>
    %49 = vector.extract_strided_slice %48 {offsets = [0, 0], sizes = [2, 16], strides = [1, 1]} : vector<2x48xf32> to vector<2x16xf32>
    %50 = vector.shape_cast %49 : vector<2x16xf32> to vector<2x1x16xf32>
    %51 = vector.broadcast %50 : vector<2x1x16xf32> to vector<2x16x16xf32>
    %52 = arith.addf %23, %51 : vector<2x16x16xf32>
    %cst_30 = arith.constant 0.000000e+00 : f32
    %53 = vector.broadcast %cst_30 : f32 to vector<2x16x16xf32>
    %54 = arith.maximumf %52, %53 : vector<2x16x16xf32>
    %55 = vector.shape_cast %11 : vector<1x16xf32> to vector<1x1x16xf32>
    %56 = vector.broadcast %55 : vector<1x1x16xf32> to vector<2x16x16xf32>
    %57 = arith.mulf %54, %56 : vector<2x16x16xf32>
    %cst_31 = arith.constant dense<0.000000e+00> : vector<2x16xf32>
    %58 = vector.multi_reduction <add>, %57, %cst_31 [2] : vector<2x16x16xf32> to vector<2x16xf32>
    %59 = vector.broadcast %12 : vector<1x1xf32> to vector<2x16xf32>
    %60 = arith.addf %58, %59 : vector<2x16xf32>
    %cst_32 = arith.constant dense<0xFF800000> : vector<2xf32>
    %61 = vector.multi_reduction <maximumf>, %60, %cst_32 [1] : vector<2x16xf32> to vector<2xf32>
    %62 = vector.shape_cast %61 : vector<2xf32> to vector<2x1xf32>
    %63 = vector.broadcast %62 : vector<2x1xf32> to vector<2x16xf32>
    %64 = arith.subf %60, %63 : vector<2x16xf32>
    %65 = math.exp %64 : vector<2x16xf32>
    %cst_33 = arith.constant dense<0.000000e+00> : vector<2xf32>
    %66 = vector.multi_reduction <add>, %65, %cst_33 [1] : vector<2x16xf32> to vector<2xf32>
    %67 = vector.shape_cast %66 : vector<2xf32> to vector<2x1xf32>
    %68 = tpu.reciprocal %67 {approx = true} : vector<2x1xf32> -> vector<2x1xf32>
    %69 = vector.broadcast %68 : vector<2x1xf32> to vector<2x16xf32>
    %70 = arith.mulf %65, %69 : vector<2x16xf32>
    %71 = vector.extract_strided_slice %70 {offsets = [0, 0], sizes = [1, 16], strides = [1, 1]} : vector<2x16xf32> to vector<1x16xf32>
    %cst_34 = arith.constant dense<0.000000e+00> : vector<1x32xf32>
    %72 = tpu.matmul %71, %24, %cst_34 {dimension_numbers = #tpu.dot_dimension_numbers<[1], [0], [0], [1], [0, 0, 1, 1], [], []>} : vector<1x16xf32>, vector<16x32xf32>, vector<1x32xf32> -> vector<1x32xf32>
    %73 = vector.extract_strided_slice %70 {offsets = [1, 0], sizes = [1, 16], strides = [1, 1]} : vector<2x16xf32> to vector<1x16xf32>
    %cst_35 = arith.constant dense<0.000000e+00> : vector<1x32xf32>
    %74 = tpu.matmul %73, %25, %cst_35 {dimension_numbers = #tpu.dot_dimension_numbers<[1], [0], [0], [1], [0, 0, 1, 1], [], []>} : vector<1x16xf32>, vector<16x32xf32>, vector<1x32xf32> -> vector<1x32xf32>
    %75 = tpu.concatenate %72, %74 in 0 : vector<1x32xf32>, vector<1x32xf32> -> vector<2x32xf32>
    %76 = vector.extract_strided_slice %48 {offsets = [0, 16], sizes = [2, 32], strides = [1, 1]} : vector<2x48xf32> to vector<2x32xf32>
    %77 = arith.negf %76 : vector<2x32xf32>
    %78 = math.exp %77 : vector<2x32xf32>
    %cst_36 = arith.constant 1.000000e+00 : f32
    %79 = vector.broadcast %cst_36 : f32 to vector<2x32xf32>
    %80 = arith.addf %79, %78 : vector<2x32xf32>
    %81 = arith.divf %79, %80 : vector<2x32xf32>
    %82 = arith.mulf %81, %75 : vector<2x32xf32>
    %83 = vector.extract_strided_slice %43 {offsets = [0, 0], sizes = [2, 128], strides = [1, 1]} : vector<14x128xf32> to vector<2x128xf32>
    %cst_37 = arith.constant dense<0.000000e+00> : vector<2x128xf32>
    %84 = tpu.matmul %82, %5, %cst_37 {dimension_numbers = #tpu.dot_dimension_numbers<[1], [0], [0], [1], [0, 0, 1, 1], [], []>} : vector<2x32xf32>, vector<32x128xf32>, vector<2x128xf32> -> vector<2x128xf32>
    %85 = arith.addf %83, %84 : vector<2x128xf32>
    %cst_38 = arith.constant dense<0.000000e+00> : vector<2x128xf32>
    %86 = tpu.matmul %38, %6, %cst_38 {dimension_numbers = #tpu.dot_dimension_numbers<[1], [0], [0], [1], [0, 0, 1, 1], [], []>} : vector<2x32xf32>, vector<32x128xf32>, vector<2x128xf32> -> vector<2x128xf32>
    %87 = arith.addf %85, %86 : vector<2x128xf32>
    %88 = vector.extract_strided_slice %87 {offsets = [0, 0], sizes = [2, 96], strides = [1, 1]} : vector<2x128xf32> to vector<2x96xf32>
    %89 = arith.negf %88 : vector<2x96xf32>
    %90 = math.exp %89 : vector<2x96xf32>
    %cst_39 = arith.constant 1.000000e+00 : f32
    %91 = vector.broadcast %cst_39 : f32 to vector<2x96xf32>
    %92 = arith.addf %91, %90 : vector<2x96xf32>
    %93 = arith.divf %91, %92 : vector<2x96xf32>
    %94 = vector.extract_strided_slice %93 {offsets = [0, 0], sizes = [2, 32], strides = [1, 1]} : vector<2x96xf32> to vector<2x32xf32>
    %95 = vector.extract_strided_slice %93 {offsets = [0, 32], sizes = [2, 32], strides = [1, 1]} : vector<2x96xf32> to vector<2x32xf32>
    %96 = vector.extract_strided_slice %93 {offsets = [0, 64], sizes = [2, 32], strides = [1, 1]} : vector<2x96xf32> to vector<2x32xf32>
    %97 = vector.extract_strided_slice %87 {offsets = [0, 96], sizes = [2, 32], strides = [1, 1]} : vector<2x128xf32> to vector<2x32xf32>
    %98 = math.tanh %97 : vector<2x32xf32>
    %99 = arith.mulf %95, %39 : vector<2x32xf32>
    %100 = arith.mulf %94, %98 : vector<2x32xf32>
    %101 = arith.addf %99, %100 : vector<2x32xf32>
    %102 = math.tanh %101 : vector<2x32xf32>
    %103 = arith.mulf %96, %102 : vector<2x32xf32>
    %104 = vector.broadcast %45 : vector<2x1xf32> to vector<2x32xf32>
    %105 = arith.mulf %104, %103 : vector<2x32xf32>
    %cst_40 = arith.constant 1.000000e+00 : f32
    %106 = vector.broadcast %cst_40 : f32 to vector<2x1xf32>
    %107 = arith.subf %106, %45 : vector<2x1xf32>
    %108 = vector.broadcast %107 : vector<2x1xf32> to vector<2x32xf32>
    %109 = arith.mulf %108, %38 : vector<2x32xf32>
    %110 = arith.addf %105, %109 : vector<2x32xf32>
    %111 = vector.broadcast %45 : vector<2x1xf32> to vector<2x32xf32>
    %112 = arith.mulf %111, %101 : vector<2x32xf32>
    %cst_41 = arith.constant 1.000000e+00 : f32
    %113 = vector.broadcast %cst_41 : f32 to vector<2x1xf32>
    %114 = arith.subf %113, %45 : vector<2x1xf32>
    %115 = vector.broadcast %114 : vector<2x1xf32> to vector<2x32xf32>
    %116 = arith.mulf %115, %39 : vector<2x32xf32>
    %117 = arith.addf %112, %116 : vector<2x32xf32>
    %118 = vector.extract_strided_slice %44 {offsets = [2, 0], sizes = [2, 1], strides = [1, 1]} : vector<14x1xf32> to vector<2x1xf32>
    %cst_42 = arith.constant dense<0.000000e+00> : vector<2x48xf32>
    %119 = tpu.matmul %110, %2, %cst_42 {dimension_numbers = #tpu.dot_dimension_numbers<[1], [0], [0], [1], [0, 0, 1, 1], [], []>} : vector<2x32xf32>, vector<32x48xf32>, vector<2x48xf32> -> vector<2x48xf32>
    %120 = vector.broadcast %10 : vector<1x48xf32> to vector<2x48xf32>
    %121 = arith.addf %119, %120 : vector<2x48xf32>
    %122 = vector.extract_strided_slice %121 {offsets = [0, 0], sizes = [2, 16], strides = [1, 1]} : vector<2x48xf32> to vector<2x16xf32>
    %123 = vector.shape_cast %122 : vector<2x16xf32> to vector<2x1x16xf32>
    %124 = vector.broadcast %123 : vector<2x1x16xf32> to vector<2x16x16xf32>
    %125 = arith.addf %23, %124 : vector<2x16x16xf32>
    %cst_43 = arith.constant 0.000000e+00 : f32
    %126 = vector.broadcast %cst_43 : f32 to vector<2x16x16xf32>
    %127 = arith.maximumf %125, %126 : vector<2x16x16xf32>
    %128 = vector.shape_cast %11 : vector<1x16xf32> to vector<1x1x16xf32>
    %129 = vector.broadcast %128 : vector<1x1x16xf32> to vector<2x16x16xf32>
    %130 = arith.mulf %127, %129 : vector<2x16x16xf32>
    %cst_44 = arith.constant dense<0.000000e+00> : vector<2x16xf32>
    %131 = vector.multi_reduction <add>, %130, %cst_44 [2] : vector<2x16x16xf32> to vector<2x16xf32>
    %132 = vector.broadcast %12 : vector<1x1xf32> to vector<2x16xf32>
    %133 = arith.addf %131, %132 : vector<2x16xf32>
    %cst_45 = arith.constant dense<0xFF800000> : vector<2xf32>
    %134 = vector.multi_reduction <maximumf>, %133, %cst_45 [1] : vector<2x16xf32> to vector<2xf32>
    %135 = vector.shape_cast %134 : vector<2xf32> to vector<2x1xf32>
    %136 = vector.broadcast %135 : vector<2x1xf32> to vector<2x16xf32>
    %137 = arith.subf %133, %136 : vector<2x16xf32>
    %138 = math.exp %137 : vector<2x16xf32>
    %cst_46 = arith.constant dense<0.000000e+00> : vector<2xf32>
    %139 = vector.multi_reduction <add>, %138, %cst_46 [1] : vector<2x16xf32> to vector<2xf32>
    %140 = vector.shape_cast %139 : vector<2xf32> to vector<2x1xf32>
    %141 = tpu.reciprocal %140 {approx = true} : vector<2x1xf32> -> vector<2x1xf32>
    %142 = vector.broadcast %141 : vector<2x1xf32> to vector<2x16xf32>
    %143 = arith.mulf %138, %142 : vector<2x16xf32>
    %144 = vector.extract_strided_slice %143 {offsets = [0, 0], sizes = [1, 16], strides = [1, 1]} : vector<2x16xf32> to vector<1x16xf32>
    %cst_47 = arith.constant dense<0.000000e+00> : vector<1x32xf32>
    %145 = tpu.matmul %144, %24, %cst_47 {dimension_numbers = #tpu.dot_dimension_numbers<[1], [0], [0], [1], [0, 0, 1, 1], [], []>} : vector<1x16xf32>, vector<16x32xf32>, vector<1x32xf32> -> vector<1x32xf32>
    %146 = vector.extract_strided_slice %143 {offsets = [1, 0], sizes = [1, 16], strides = [1, 1]} : vector<2x16xf32> to vector<1x16xf32>
    %cst_48 = arith.constant dense<0.000000e+00> : vector<1x32xf32>
    %147 = tpu.matmul %146, %25, %cst_48 {dimension_numbers = #tpu.dot_dimension_numbers<[1], [0], [0], [1], [0, 0, 1, 1], [], []>} : vector<1x16xf32>, vector<16x32xf32>, vector<1x32xf32> -> vector<1x32xf32>
    %148 = tpu.concatenate %145, %147 in 0 : vector<1x32xf32>, vector<1x32xf32> -> vector<2x32xf32>
    %149 = vector.extract_strided_slice %121 {offsets = [0, 16], sizes = [2, 32], strides = [1, 1]} : vector<2x48xf32> to vector<2x32xf32>
    %150 = arith.negf %149 : vector<2x32xf32>
    %151 = math.exp %150 : vector<2x32xf32>
    %cst_49 = arith.constant 1.000000e+00 : f32
    %152 = vector.broadcast %cst_49 : f32 to vector<2x32xf32>
    %153 = arith.addf %152, %151 : vector<2x32xf32>
    %154 = arith.divf %152, %153 : vector<2x32xf32>
    %155 = arith.mulf %154, %148 : vector<2x32xf32>
    %156 = vector.extract_strided_slice %43 {offsets = [2, 0], sizes = [2, 128], strides = [1, 1]} : vector<14x128xf32> to vector<2x128xf32>
    %cst_50 = arith.constant dense<0.000000e+00> : vector<2x128xf32>
    %157 = tpu.matmul %155, %5, %cst_50 {dimension_numbers = #tpu.dot_dimension_numbers<[1], [0], [0], [1], [0, 0, 1, 1], [], []>} : vector<2x32xf32>, vector<32x128xf32>, vector<2x128xf32> -> vector<2x128xf32>
    %158 = arith.addf %156, %157 : vector<2x128xf32>
    %cst_51 = arith.constant dense<0.000000e+00> : vector<2x128xf32>
    %159 = tpu.matmul %110, %6, %cst_51 {dimension_numbers = #tpu.dot_dimension_numbers<[1], [0], [0], [1], [0, 0, 1, 1], [], []>} : vector<2x32xf32>, vector<32x128xf32>, vector<2x128xf32> -> vector<2x128xf32>
    %160 = arith.addf %158, %159 : vector<2x128xf32>
    %161 = vector.extract_strided_slice %160 {offsets = [0, 0], sizes = [2, 96], strides = [1, 1]} : vector<2x128xf32> to vector<2x96xf32>
    %162 = arith.negf %161 : vector<2x96xf32>
    %163 = math.exp %162 : vector<2x96xf32>
    %cst_52 = arith.constant 1.000000e+00 : f32
    %164 = vector.broadcast %cst_52 : f32 to vector<2x96xf32>
    %165 = arith.addf %164, %163 : vector<2x96xf32>
    %166 = arith.divf %164, %165 : vector<2x96xf32>
    %167 = vector.extract_strided_slice %166 {offsets = [0, 0], sizes = [2, 32], strides = [1, 1]} : vector<2x96xf32> to vector<2x32xf32>
    %168 = vector.extract_strided_slice %166 {offsets = [0, 32], sizes = [2, 32], strides = [1, 1]} : vector<2x96xf32> to vector<2x32xf32>
    %169 = vector.extract_strided_slice %166 {offsets = [0, 64], sizes = [2, 32], strides = [1, 1]} : vector<2x96xf32> to vector<2x32xf32>
    %170 = vector.extract_strided_slice %160 {offsets = [0, 96], sizes = [2, 32], strides = [1, 1]} : vector<2x128xf32> to vector<2x32xf32>
    %171 = math.tanh %170 : vector<2x32xf32>
    %172 = arith.mulf %168, %117 : vector<2x32xf32>
    %173 = arith.mulf %167, %171 : vector<2x32xf32>
    %174 = arith.addf %172, %173 : vector<2x32xf32>
    %175 = math.tanh %174 : vector<2x32xf32>
    %176 = arith.mulf %169, %175 : vector<2x32xf32>
    %177 = vector.broadcast %118 : vector<2x1xf32> to vector<2x32xf32>
    %178 = arith.mulf %177, %176 : vector<2x32xf32>
    %cst_53 = arith.constant 1.000000e+00 : f32
    %179 = vector.broadcast %cst_53 : f32 to vector<2x1xf32>
    %180 = arith.subf %179, %118 : vector<2x1xf32>
    %181 = vector.broadcast %180 : vector<2x1xf32> to vector<2x32xf32>
    %182 = arith.mulf %181, %110 : vector<2x32xf32>
    %183 = arith.addf %178, %182 : vector<2x32xf32>
    %184 = vector.broadcast %118 : vector<2x1xf32> to vector<2x32xf32>
    %185 = arith.mulf %184, %174 : vector<2x32xf32>
    %cst_54 = arith.constant 1.000000e+00 : f32
    %186 = vector.broadcast %cst_54 : f32 to vector<2x1xf32>
    %187 = arith.subf %186, %118 : vector<2x1xf32>
    %188 = vector.broadcast %187 : vector<2x1xf32> to vector<2x32xf32>
    %189 = arith.mulf %188, %117 : vector<2x32xf32>
    %190 = arith.addf %185, %189 : vector<2x32xf32>
    %191 = vector.extract_strided_slice %44 {offsets = [4, 0], sizes = [2, 1], strides = [1, 1]} : vector<14x1xf32> to vector<2x1xf32>
    %cst_55 = arith.constant dense<0.000000e+00> : vector<2x48xf32>
    %192 = tpu.matmul %183, %2, %cst_55 {dimension_numbers = #tpu.dot_dimension_numbers<[1], [0], [0], [1], [0, 0, 1, 1], [], []>} : vector<2x32xf32>, vector<32x48xf32>, vector<2x48xf32> -> vector<2x48xf32>
    %193 = vector.broadcast %10 : vector<1x48xf32> to vector<2x48xf32>
    %194 = arith.addf %192, %193 : vector<2x48xf32>
    %195 = vector.extract_strided_slice %194 {offsets = [0, 0], sizes = [2, 16], strides = [1, 1]} : vector<2x48xf32> to vector<2x16xf32>
    %196 = vector.shape_cast %195 : vector<2x16xf32> to vector<2x1x16xf32>
    %197 = vector.broadcast %196 : vector<2x1x16xf32> to vector<2x16x16xf32>
    %198 = arith.addf %23, %197 : vector<2x16x16xf32>
    %cst_56 = arith.constant 0.000000e+00 : f32
    %199 = vector.broadcast %cst_56 : f32 to vector<2x16x16xf32>
    %200 = arith.maximumf %198, %199 : vector<2x16x16xf32>
    %201 = vector.shape_cast %11 : vector<1x16xf32> to vector<1x1x16xf32>
    %202 = vector.broadcast %201 : vector<1x1x16xf32> to vector<2x16x16xf32>
    %203 = arith.mulf %200, %202 : vector<2x16x16xf32>
    %cst_57 = arith.constant dense<0.000000e+00> : vector<2x16xf32>
    %204 = vector.multi_reduction <add>, %203, %cst_57 [2] : vector<2x16x16xf32> to vector<2x16xf32>
    %205 = vector.broadcast %12 : vector<1x1xf32> to vector<2x16xf32>
    %206 = arith.addf %204, %205 : vector<2x16xf32>
    %cst_58 = arith.constant dense<0xFF800000> : vector<2xf32>
    %207 = vector.multi_reduction <maximumf>, %206, %cst_58 [1] : vector<2x16xf32> to vector<2xf32>
    %208 = vector.shape_cast %207 : vector<2xf32> to vector<2x1xf32>
    %209 = vector.broadcast %208 : vector<2x1xf32> to vector<2x16xf32>
    %210 = arith.subf %206, %209 : vector<2x16xf32>
    %211 = math.exp %210 : vector<2x16xf32>
    %cst_59 = arith.constant dense<0.000000e+00> : vector<2xf32>
    %212 = vector.multi_reduction <add>, %211, %cst_59 [1] : vector<2x16xf32> to vector<2xf32>
    %213 = vector.shape_cast %212 : vector<2xf32> to vector<2x1xf32>
    %214 = tpu.reciprocal %213 {approx = true} : vector<2x1xf32> -> vector<2x1xf32>
    %215 = vector.broadcast %214 : vector<2x1xf32> to vector<2x16xf32>
    %216 = arith.mulf %211, %215 : vector<2x16xf32>
    %217 = vector.extract_strided_slice %216 {offsets = [0, 0], sizes = [1, 16], strides = [1, 1]} : vector<2x16xf32> to vector<1x16xf32>
    %cst_60 = arith.constant dense<0.000000e+00> : vector<1x32xf32>
    %218 = tpu.matmul %217, %24, %cst_60 {dimension_numbers = #tpu.dot_dimension_numbers<[1], [0], [0], [1], [0, 0, 1, 1], [], []>} : vector<1x16xf32>, vector<16x32xf32>, vector<1x32xf32> -> vector<1x32xf32>
    %219 = vector.extract_strided_slice %216 {offsets = [1, 0], sizes = [1, 16], strides = [1, 1]} : vector<2x16xf32> to vector<1x16xf32>
    %cst_61 = arith.constant dense<0.000000e+00> : vector<1x32xf32>
    %220 = tpu.matmul %219, %25, %cst_61 {dimension_numbers = #tpu.dot_dimension_numbers<[1], [0], [0], [1], [0, 0, 1, 1], [], []>} : vector<1x16xf32>, vector<16x32xf32>, vector<1x32xf32> -> vector<1x32xf32>
    %221 = tpu.concatenate %218, %220 in 0 : vector<1x32xf32>, vector<1x32xf32> -> vector<2x32xf32>
    %222 = vector.extract_strided_slice %194 {offsets = [0, 16], sizes = [2, 32], strides = [1, 1]} : vector<2x48xf32> to vector<2x32xf32>
    %223 = arith.negf %222 : vector<2x32xf32>
    %224 = math.exp %223 : vector<2x32xf32>
    %cst_62 = arith.constant 1.000000e+00 : f32
    %225 = vector.broadcast %cst_62 : f32 to vector<2x32xf32>
    %226 = arith.addf %225, %224 : vector<2x32xf32>
    %227 = arith.divf %225, %226 : vector<2x32xf32>
    %228 = arith.mulf %227, %221 : vector<2x32xf32>
    %229 = vector.extract_strided_slice %43 {offsets = [4, 0], sizes = [2, 128], strides = [1, 1]} : vector<14x128xf32> to vector<2x128xf32>
    %cst_63 = arith.constant dense<0.000000e+00> : vector<2x128xf32>
    %230 = tpu.matmul %228, %5, %cst_63 {dimension_numbers = #tpu.dot_dimension_numbers<[1], [0], [0], [1], [0, 0, 1, 1], [], []>} : vector<2x32xf32>, vector<32x128xf32>, vector<2x128xf32> -> vector<2x128xf32>
    %231 = arith.addf %229, %230 : vector<2x128xf32>
    %cst_64 = arith.constant dense<0.000000e+00> : vector<2x128xf32>
    %232 = tpu.matmul %183, %6, %cst_64 {dimension_numbers = #tpu.dot_dimension_numbers<[1], [0], [0], [1], [0, 0, 1, 1], [], []>} : vector<2x32xf32>, vector<32x128xf32>, vector<2x128xf32> -> vector<2x128xf32>
    %233 = arith.addf %231, %232 : vector<2x128xf32>
    %234 = vector.extract_strided_slice %233 {offsets = [0, 0], sizes = [2, 96], strides = [1, 1]} : vector<2x128xf32> to vector<2x96xf32>
    %235 = arith.negf %234 : vector<2x96xf32>
    %236 = math.exp %235 : vector<2x96xf32>
    %cst_65 = arith.constant 1.000000e+00 : f32
    %237 = vector.broadcast %cst_65 : f32 to vector<2x96xf32>
    %238 = arith.addf %237, %236 : vector<2x96xf32>
    %239 = arith.divf %237, %238 : vector<2x96xf32>
    %240 = vector.extract_strided_slice %239 {offsets = [0, 0], sizes = [2, 32], strides = [1, 1]} : vector<2x96xf32> to vector<2x32xf32>
    %241 = vector.extract_strided_slice %239 {offsets = [0, 32], sizes = [2, 32], strides = [1, 1]} : vector<2x96xf32> to vector<2x32xf32>
    %242 = vector.extract_strided_slice %239 {offsets = [0, 64], sizes = [2, 32], strides = [1, 1]} : vector<2x96xf32> to vector<2x32xf32>
    %243 = vector.extract_strided_slice %233 {offsets = [0, 96], sizes = [2, 32], strides = [1, 1]} : vector<2x128xf32> to vector<2x32xf32>
    %244 = math.tanh %243 : vector<2x32xf32>
    %245 = arith.mulf %241, %190 : vector<2x32xf32>
    %246 = arith.mulf %240, %244 : vector<2x32xf32>
    %247 = arith.addf %245, %246 : vector<2x32xf32>
    %248 = math.tanh %247 : vector<2x32xf32>
    %249 = arith.mulf %242, %248 : vector<2x32xf32>
    %250 = vector.broadcast %191 : vector<2x1xf32> to vector<2x32xf32>
    %251 = arith.mulf %250, %249 : vector<2x32xf32>
    %cst_66 = arith.constant 1.000000e+00 : f32
    %252 = vector.broadcast %cst_66 : f32 to vector<2x1xf32>
    %253 = arith.subf %252, %191 : vector<2x1xf32>
    %254 = vector.broadcast %253 : vector<2x1xf32> to vector<2x32xf32>
    %255 = arith.mulf %254, %183 : vector<2x32xf32>
    %256 = arith.addf %251, %255 : vector<2x32xf32>
    %257 = vector.broadcast %191 : vector<2x1xf32> to vector<2x32xf32>
    %258 = arith.mulf %257, %247 : vector<2x32xf32>
    %cst_67 = arith.constant 1.000000e+00 : f32
    %259 = vector.broadcast %cst_67 : f32 to vector<2x1xf32>
    %260 = arith.subf %259, %191 : vector<2x1xf32>
    %261 = vector.broadcast %260 : vector<2x1xf32> to vector<2x32xf32>
    %262 = arith.mulf %261, %190 : vector<2x32xf32>
    %263 = arith.addf %258, %262 : vector<2x32xf32>
    %264 = vector.extract_strided_slice %44 {offsets = [6, 0], sizes = [2, 1], strides = [1, 1]} : vector<14x1xf32> to vector<2x1xf32>
    %cst_68 = arith.constant dense<0.000000e+00> : vector<2x48xf32>
    %265 = tpu.matmul %256, %2, %cst_68 {dimension_numbers = #tpu.dot_dimension_numbers<[1], [0], [0], [1], [0, 0, 1, 1], [], []>} : vector<2x32xf32>, vector<32x48xf32>, vector<2x48xf32> -> vector<2x48xf32>
    %266 = vector.broadcast %10 : vector<1x48xf32> to vector<2x48xf32>
    %267 = arith.addf %265, %266 : vector<2x48xf32>
    %268 = vector.extract_strided_slice %267 {offsets = [0, 0], sizes = [2, 16], strides = [1, 1]} : vector<2x48xf32> to vector<2x16xf32>
    %269 = vector.shape_cast %268 : vector<2x16xf32> to vector<2x1x16xf32>
    %270 = vector.broadcast %269 : vector<2x1x16xf32> to vector<2x16x16xf32>
    %271 = arith.addf %23, %270 : vector<2x16x16xf32>
    %cst_69 = arith.constant 0.000000e+00 : f32
    %272 = vector.broadcast %cst_69 : f32 to vector<2x16x16xf32>
    %273 = arith.maximumf %271, %272 : vector<2x16x16xf32>
    %274 = vector.shape_cast %11 : vector<1x16xf32> to vector<1x1x16xf32>
    %275 = vector.broadcast %274 : vector<1x1x16xf32> to vector<2x16x16xf32>
    %276 = arith.mulf %273, %275 : vector<2x16x16xf32>
    %cst_70 = arith.constant dense<0.000000e+00> : vector<2x16xf32>
    %277 = vector.multi_reduction <add>, %276, %cst_70 [2] : vector<2x16x16xf32> to vector<2x16xf32>
    %278 = vector.broadcast %12 : vector<1x1xf32> to vector<2x16xf32>
    %279 = arith.addf %277, %278 : vector<2x16xf32>
    %cst_71 = arith.constant dense<0xFF800000> : vector<2xf32>
    %280 = vector.multi_reduction <maximumf>, %279, %cst_71 [1] : vector<2x16xf32> to vector<2xf32>
    %281 = vector.shape_cast %280 : vector<2xf32> to vector<2x1xf32>
    %282 = vector.broadcast %281 : vector<2x1xf32> to vector<2x16xf32>
    %283 = arith.subf %279, %282 : vector<2x16xf32>
    %284 = math.exp %283 : vector<2x16xf32>
    %cst_72 = arith.constant dense<0.000000e+00> : vector<2xf32>
    %285 = vector.multi_reduction <add>, %284, %cst_72 [1] : vector<2x16xf32> to vector<2xf32>
    %286 = vector.shape_cast %285 : vector<2xf32> to vector<2x1xf32>
    %287 = tpu.reciprocal %286 {approx = true} : vector<2x1xf32> -> vector<2x1xf32>
    %288 = vector.broadcast %287 : vector<2x1xf32> to vector<2x16xf32>
    %289 = arith.mulf %284, %288 : vector<2x16xf32>
    %290 = vector.extract_strided_slice %289 {offsets = [0, 0], sizes = [1, 16], strides = [1, 1]} : vector<2x16xf32> to vector<1x16xf32>
    %cst_73 = arith.constant dense<0.000000e+00> : vector<1x32xf32>
    %291 = tpu.matmul %290, %24, %cst_73 {dimension_numbers = #tpu.dot_dimension_numbers<[1], [0], [0], [1], [0, 0, 1, 1], [], []>} : vector<1x16xf32>, vector<16x32xf32>, vector<1x32xf32> -> vector<1x32xf32>
    %292 = vector.extract_strided_slice %289 {offsets = [1, 0], sizes = [1, 16], strides = [1, 1]} : vector<2x16xf32> to vector<1x16xf32>
    %cst_74 = arith.constant dense<0.000000e+00> : vector<1x32xf32>
    %293 = tpu.matmul %292, %25, %cst_74 {dimension_numbers = #tpu.dot_dimension_numbers<[1], [0], [0], [1], [0, 0, 1, 1], [], []>} : vector<1x16xf32>, vector<16x32xf32>, vector<1x32xf32> -> vector<1x32xf32>
    %294 = tpu.concatenate %291, %293 in 0 : vector<1x32xf32>, vector<1x32xf32> -> vector<2x32xf32>
    %295 = vector.extract_strided_slice %267 {offsets = [0, 16], sizes = [2, 32], strides = [1, 1]} : vector<2x48xf32> to vector<2x32xf32>
    %296 = arith.negf %295 : vector<2x32xf32>
    %297 = math.exp %296 : vector<2x32xf32>
    %cst_75 = arith.constant 1.000000e+00 : f32
    %298 = vector.broadcast %cst_75 : f32 to vector<2x32xf32>
    %299 = arith.addf %298, %297 : vector<2x32xf32>
    %300 = arith.divf %298, %299 : vector<2x32xf32>
    %301 = arith.mulf %300, %294 : vector<2x32xf32>
    %302 = vector.extract_strided_slice %43 {offsets = [6, 0], sizes = [2, 128], strides = [1, 1]} : vector<14x128xf32> to vector<2x128xf32>
    %cst_76 = arith.constant dense<0.000000e+00> : vector<2x128xf32>
    %303 = tpu.matmul %301, %5, %cst_76 {dimension_numbers = #tpu.dot_dimension_numbers<[1], [0], [0], [1], [0, 0, 1, 1], [], []>} : vector<2x32xf32>, vector<32x128xf32>, vector<2x128xf32> -> vector<2x128xf32>
    %304 = arith.addf %302, %303 : vector<2x128xf32>
    %cst_77 = arith.constant dense<0.000000e+00> : vector<2x128xf32>
    %305 = tpu.matmul %256, %6, %cst_77 {dimension_numbers = #tpu.dot_dimension_numbers<[1], [0], [0], [1], [0, 0, 1, 1], [], []>} : vector<2x32xf32>, vector<32x128xf32>, vector<2x128xf32> -> vector<2x128xf32>
    %306 = arith.addf %304, %305 : vector<2x128xf32>
    %307 = vector.extract_strided_slice %306 {offsets = [0, 0], sizes = [2, 96], strides = [1, 1]} : vector<2x128xf32> to vector<2x96xf32>
    %308 = arith.negf %307 : vector<2x96xf32>
    %309 = math.exp %308 : vector<2x96xf32>
    %cst_78 = arith.constant 1.000000e+00 : f32
    %310 = vector.broadcast %cst_78 : f32 to vector<2x96xf32>
    %311 = arith.addf %310, %309 : vector<2x96xf32>
    %312 = arith.divf %310, %311 : vector<2x96xf32>
    %313 = vector.extract_strided_slice %312 {offsets = [0, 0], sizes = [2, 32], strides = [1, 1]} : vector<2x96xf32> to vector<2x32xf32>
    %314 = vector.extract_strided_slice %312 {offsets = [0, 32], sizes = [2, 32], strides = [1, 1]} : vector<2x96xf32> to vector<2x32xf32>
    %315 = vector.extract_strided_slice %312 {offsets = [0, 64], sizes = [2, 32], strides = [1, 1]} : vector<2x96xf32> to vector<2x32xf32>
    %316 = vector.extract_strided_slice %306 {offsets = [0, 96], sizes = [2, 32], strides = [1, 1]} : vector<2x128xf32> to vector<2x32xf32>
    %317 = math.tanh %316 : vector<2x32xf32>
    %318 = arith.mulf %314, %263 : vector<2x32xf32>
    %319 = arith.mulf %313, %317 : vector<2x32xf32>
    %320 = arith.addf %318, %319 : vector<2x32xf32>
    %321 = math.tanh %320 : vector<2x32xf32>
    %322 = arith.mulf %315, %321 : vector<2x32xf32>
    %323 = vector.broadcast %264 : vector<2x1xf32> to vector<2x32xf32>
    %324 = arith.mulf %323, %322 : vector<2x32xf32>
    %cst_79 = arith.constant 1.000000e+00 : f32
    %325 = vector.broadcast %cst_79 : f32 to vector<2x1xf32>
    %326 = arith.subf %325, %264 : vector<2x1xf32>
    %327 = vector.broadcast %326 : vector<2x1xf32> to vector<2x32xf32>
    %328 = arith.mulf %327, %256 : vector<2x32xf32>
    %329 = arith.addf %324, %328 : vector<2x32xf32>
    %330 = vector.broadcast %264 : vector<2x1xf32> to vector<2x32xf32>
    %331 = arith.mulf %330, %320 : vector<2x32xf32>
    %cst_80 = arith.constant 1.000000e+00 : f32
    %332 = vector.broadcast %cst_80 : f32 to vector<2x1xf32>
    %333 = arith.subf %332, %264 : vector<2x1xf32>
    %334 = vector.broadcast %333 : vector<2x1xf32> to vector<2x32xf32>
    %335 = arith.mulf %334, %263 : vector<2x32xf32>
    %336 = arith.addf %331, %335 : vector<2x32xf32>
    %337 = vector.extract_strided_slice %44 {offsets = [8, 0], sizes = [2, 1], strides = [1, 1]} : vector<14x1xf32> to vector<2x1xf32>
    %cst_81 = arith.constant dense<0.000000e+00> : vector<2x48xf32>
    %338 = tpu.matmul %329, %2, %cst_81 {dimension_numbers = #tpu.dot_dimension_numbers<[1], [0], [0], [1], [0, 0, 1, 1], [], []>} : vector<2x32xf32>, vector<32x48xf32>, vector<2x48xf32> -> vector<2x48xf32>
    %339 = vector.broadcast %10 : vector<1x48xf32> to vector<2x48xf32>
    %340 = arith.addf %338, %339 : vector<2x48xf32>
    %341 = vector.extract_strided_slice %340 {offsets = [0, 0], sizes = [2, 16], strides = [1, 1]} : vector<2x48xf32> to vector<2x16xf32>
    %342 = vector.shape_cast %341 : vector<2x16xf32> to vector<2x1x16xf32>
    %343 = vector.broadcast %342 : vector<2x1x16xf32> to vector<2x16x16xf32>
    %344 = arith.addf %23, %343 : vector<2x16x16xf32>
    %cst_82 = arith.constant 0.000000e+00 : f32
    %345 = vector.broadcast %cst_82 : f32 to vector<2x16x16xf32>
    %346 = arith.maximumf %344, %345 : vector<2x16x16xf32>
    %347 = vector.shape_cast %11 : vector<1x16xf32> to vector<1x1x16xf32>
    %348 = vector.broadcast %347 : vector<1x1x16xf32> to vector<2x16x16xf32>
    %349 = arith.mulf %346, %348 : vector<2x16x16xf32>
    %cst_83 = arith.constant dense<0.000000e+00> : vector<2x16xf32>
    %350 = vector.multi_reduction <add>, %349, %cst_83 [2] : vector<2x16x16xf32> to vector<2x16xf32>
    %351 = vector.broadcast %12 : vector<1x1xf32> to vector<2x16xf32>
    %352 = arith.addf %350, %351 : vector<2x16xf32>
    %cst_84 = arith.constant dense<0xFF800000> : vector<2xf32>
    %353 = vector.multi_reduction <maximumf>, %352, %cst_84 [1] : vector<2x16xf32> to vector<2xf32>
    %354 = vector.shape_cast %353 : vector<2xf32> to vector<2x1xf32>
    %355 = vector.broadcast %354 : vector<2x1xf32> to vector<2x16xf32>
    %356 = arith.subf %352, %355 : vector<2x16xf32>
    %357 = math.exp %356 : vector<2x16xf32>
    %cst_85 = arith.constant dense<0.000000e+00> : vector<2xf32>
    %358 = vector.multi_reduction <add>, %357, %cst_85 [1] : vector<2x16xf32> to vector<2xf32>
    %359 = vector.shape_cast %358 : vector<2xf32> to vector<2x1xf32>
    %360 = tpu.reciprocal %359 {approx = true} : vector<2x1xf32> -> vector<2x1xf32>
    %361 = vector.broadcast %360 : vector<2x1xf32> to vector<2x16xf32>
    %362 = arith.mulf %357, %361 : vector<2x16xf32>
    %363 = vector.extract_strided_slice %362 {offsets = [0, 0], sizes = [1, 16], strides = [1, 1]} : vector<2x16xf32> to vector<1x16xf32>
    %cst_86 = arith.constant dense<0.000000e+00> : vector<1x32xf32>
    %364 = tpu.matmul %363, %24, %cst_86 {dimension_numbers = #tpu.dot_dimension_numbers<[1], [0], [0], [1], [0, 0, 1, 1], [], []>} : vector<1x16xf32>, vector<16x32xf32>, vector<1x32xf32> -> vector<1x32xf32>
    %365 = vector.extract_strided_slice %362 {offsets = [1, 0], sizes = [1, 16], strides = [1, 1]} : vector<2x16xf32> to vector<1x16xf32>
    %cst_87 = arith.constant dense<0.000000e+00> : vector<1x32xf32>
    %366 = tpu.matmul %365, %25, %cst_87 {dimension_numbers = #tpu.dot_dimension_numbers<[1], [0], [0], [1], [0, 0, 1, 1], [], []>} : vector<1x16xf32>, vector<16x32xf32>, vector<1x32xf32> -> vector<1x32xf32>
    %367 = tpu.concatenate %364, %366 in 0 : vector<1x32xf32>, vector<1x32xf32> -> vector<2x32xf32>
    %368 = vector.extract_strided_slice %340 {offsets = [0, 16], sizes = [2, 32], strides = [1, 1]} : vector<2x48xf32> to vector<2x32xf32>
    %369 = arith.negf %368 : vector<2x32xf32>
    %370 = math.exp %369 : vector<2x32xf32>
    %cst_88 = arith.constant 1.000000e+00 : f32
    %371 = vector.broadcast %cst_88 : f32 to vector<2x32xf32>
    %372 = arith.addf %371, %370 : vector<2x32xf32>
    %373 = arith.divf %371, %372 : vector<2x32xf32>
    %374 = arith.mulf %373, %367 : vector<2x32xf32>
    %375 = vector.extract_strided_slice %43 {offsets = [8, 0], sizes = [2, 128], strides = [1, 1]} : vector<14x128xf32> to vector<2x128xf32>
    %cst_89 = arith.constant dense<0.000000e+00> : vector<2x128xf32>
    %376 = tpu.matmul %374, %5, %cst_89 {dimension_numbers = #tpu.dot_dimension_numbers<[1], [0], [0], [1], [0, 0, 1, 1], [], []>} : vector<2x32xf32>, vector<32x128xf32>, vector<2x128xf32> -> vector<2x128xf32>
    %377 = arith.addf %375, %376 : vector<2x128xf32>
    %cst_90 = arith.constant dense<0.000000e+00> : vector<2x128xf32>
    %378 = tpu.matmul %329, %6, %cst_90 {dimension_numbers = #tpu.dot_dimension_numbers<[1], [0], [0], [1], [0, 0, 1, 1], [], []>} : vector<2x32xf32>, vector<32x128xf32>, vector<2x128xf32> -> vector<2x128xf32>
    %379 = arith.addf %377, %378 : vector<2x128xf32>
    %380 = vector.extract_strided_slice %379 {offsets = [0, 0], sizes = [2, 96], strides = [1, 1]} : vector<2x128xf32> to vector<2x96xf32>
    %381 = arith.negf %380 : vector<2x96xf32>
    %382 = math.exp %381 : vector<2x96xf32>
    %cst_91 = arith.constant 1.000000e+00 : f32
    %383 = vector.broadcast %cst_91 : f32 to vector<2x96xf32>
    %384 = arith.addf %383, %382 : vector<2x96xf32>
    %385 = arith.divf %383, %384 : vector<2x96xf32>
    %386 = vector.extract_strided_slice %385 {offsets = [0, 0], sizes = [2, 32], strides = [1, 1]} : vector<2x96xf32> to vector<2x32xf32>
    %387 = vector.extract_strided_slice %385 {offsets = [0, 32], sizes = [2, 32], strides = [1, 1]} : vector<2x96xf32> to vector<2x32xf32>
    %388 = vector.extract_strided_slice %385 {offsets = [0, 64], sizes = [2, 32], strides = [1, 1]} : vector<2x96xf32> to vector<2x32xf32>
    %389 = vector.extract_strided_slice %379 {offsets = [0, 96], sizes = [2, 32], strides = [1, 1]} : vector<2x128xf32> to vector<2x32xf32>
    %390 = math.tanh %389 : vector<2x32xf32>
    %391 = arith.mulf %387, %336 : vector<2x32xf32>
    %392 = arith.mulf %386, %390 : vector<2x32xf32>
    %393 = arith.addf %391, %392 : vector<2x32xf32>
    %394 = math.tanh %393 : vector<2x32xf32>
    %395 = arith.mulf %388, %394 : vector<2x32xf32>
    %396 = vector.broadcast %337 : vector<2x1xf32> to vector<2x32xf32>
    %397 = arith.mulf %396, %395 : vector<2x32xf32>
    %cst_92 = arith.constant 1.000000e+00 : f32
    %398 = vector.broadcast %cst_92 : f32 to vector<2x1xf32>
    %399 = arith.subf %398, %337 : vector<2x1xf32>
    %400 = vector.broadcast %399 : vector<2x1xf32> to vector<2x32xf32>
    %401 = arith.mulf %400, %329 : vector<2x32xf32>
    %402 = arith.addf %397, %401 : vector<2x32xf32>
    %403 = vector.broadcast %337 : vector<2x1xf32> to vector<2x32xf32>
    %404 = arith.mulf %403, %393 : vector<2x32xf32>
    %cst_93 = arith.constant 1.000000e+00 : f32
    %405 = vector.broadcast %cst_93 : f32 to vector<2x1xf32>
    %406 = arith.subf %405, %337 : vector<2x1xf32>
    %407 = vector.broadcast %406 : vector<2x1xf32> to vector<2x32xf32>
    %408 = arith.mulf %407, %336 : vector<2x32xf32>
    %409 = arith.addf %404, %408 : vector<2x32xf32>
    %410 = vector.extract_strided_slice %44 {offsets = [10, 0], sizes = [2, 1], strides = [1, 1]} : vector<14x1xf32> to vector<2x1xf32>
    %cst_94 = arith.constant dense<0.000000e+00> : vector<2x48xf32>
    %411 = tpu.matmul %402, %2, %cst_94 {dimension_numbers = #tpu.dot_dimension_numbers<[1], [0], [0], [1], [0, 0, 1, 1], [], []>} : vector<2x32xf32>, vector<32x48xf32>, vector<2x48xf32> -> vector<2x48xf32>
    %412 = vector.broadcast %10 : vector<1x48xf32> to vector<2x48xf32>
    %413 = arith.addf %411, %412 : vector<2x48xf32>
    %414 = vector.extract_strided_slice %413 {offsets = [0, 0], sizes = [2, 16], strides = [1, 1]} : vector<2x48xf32> to vector<2x16xf32>
    %415 = vector.shape_cast %414 : vector<2x16xf32> to vector<2x1x16xf32>
    %416 = vector.broadcast %415 : vector<2x1x16xf32> to vector<2x16x16xf32>
    %417 = arith.addf %23, %416 : vector<2x16x16xf32>
    %cst_95 = arith.constant 0.000000e+00 : f32
    %418 = vector.broadcast %cst_95 : f32 to vector<2x16x16xf32>
    %419 = arith.maximumf %417, %418 : vector<2x16x16xf32>
    %420 = vector.shape_cast %11 : vector<1x16xf32> to vector<1x1x16xf32>
    %421 = vector.broadcast %420 : vector<1x1x16xf32> to vector<2x16x16xf32>
    %422 = arith.mulf %419, %421 : vector<2x16x16xf32>
    %cst_96 = arith.constant dense<0.000000e+00> : vector<2x16xf32>
    %423 = vector.multi_reduction <add>, %422, %cst_96 [2] : vector<2x16x16xf32> to vector<2x16xf32>
    %424 = vector.broadcast %12 : vector<1x1xf32> to vector<2x16xf32>
    %425 = arith.addf %423, %424 : vector<2x16xf32>
    %cst_97 = arith.constant dense<0xFF800000> : vector<2xf32>
    %426 = vector.multi_reduction <maximumf>, %425, %cst_97 [1] : vector<2x16xf32> to vector<2xf32>
    %427 = vector.shape_cast %426 : vector<2xf32> to vector<2x1xf32>
    %428 = vector.broadcast %427 : vector<2x1xf32> to vector<2x16xf32>
    %429 = arith.subf %425, %428 : vector<2x16xf32>
    %430 = math.exp %429 : vector<2x16xf32>
    %cst_98 = arith.constant dense<0.000000e+00> : vector<2xf32>
    %431 = vector.multi_reduction <add>, %430, %cst_98 [1] : vector<2x16xf32> to vector<2xf32>
    %432 = vector.shape_cast %431 : vector<2xf32> to vector<2x1xf32>
    %433 = tpu.reciprocal %432 {approx = true} : vector<2x1xf32> -> vector<2x1xf32>
    %434 = vector.broadcast %433 : vector<2x1xf32> to vector<2x16xf32>
    %435 = arith.mulf %430, %434 : vector<2x16xf32>
    %436 = vector.extract_strided_slice %435 {offsets = [0, 0], sizes = [1, 16], strides = [1, 1]} : vector<2x16xf32> to vector<1x16xf32>
    %cst_99 = arith.constant dense<0.000000e+00> : vector<1x32xf32>
    %437 = tpu.matmul %436, %24, %cst_99 {dimension_numbers = #tpu.dot_dimension_numbers<[1], [0], [0], [1], [0, 0, 1, 1], [], []>} : vector<1x16xf32>, vector<16x32xf32>, vector<1x32xf32> -> vector<1x32xf32>
    %438 = vector.extract_strided_slice %435 {offsets = [1, 0], sizes = [1, 16], strides = [1, 1]} : vector<2x16xf32> to vector<1x16xf32>
    %cst_100 = arith.constant dense<0.000000e+00> : vector<1x32xf32>
    %439 = tpu.matmul %438, %25, %cst_100 {dimension_numbers = #tpu.dot_dimension_numbers<[1], [0], [0], [1], [0, 0, 1, 1], [], []>} : vector<1x16xf32>, vector<16x32xf32>, vector<1x32xf32> -> vector<1x32xf32>
    %440 = tpu.concatenate %437, %439 in 0 : vector<1x32xf32>, vector<1x32xf32> -> vector<2x32xf32>
    %441 = vector.extract_strided_slice %413 {offsets = [0, 16], sizes = [2, 32], strides = [1, 1]} : vector<2x48xf32> to vector<2x32xf32>
    %442 = arith.negf %441 : vector<2x32xf32>
    %443 = math.exp %442 : vector<2x32xf32>
    %cst_101 = arith.constant 1.000000e+00 : f32
    %444 = vector.broadcast %cst_101 : f32 to vector<2x32xf32>
    %445 = arith.addf %444, %443 : vector<2x32xf32>
    %446 = arith.divf %444, %445 : vector<2x32xf32>
    %447 = arith.mulf %446, %440 : vector<2x32xf32>
    %448 = vector.extract_strided_slice %43 {offsets = [10, 0], sizes = [2, 128], strides = [1, 1]} : vector<14x128xf32> to vector<2x128xf32>
    %cst_102 = arith.constant dense<0.000000e+00> : vector<2x128xf32>
    %449 = tpu.matmul %447, %5, %cst_102 {dimension_numbers = #tpu.dot_dimension_numbers<[1], [0], [0], [1], [0, 0, 1, 1], [], []>} : vector<2x32xf32>, vector<32x128xf32>, vector<2x128xf32> -> vector<2x128xf32>
    %450 = arith.addf %448, %449 : vector<2x128xf32>
    %cst_103 = arith.constant dense<0.000000e+00> : vector<2x128xf32>
    %451 = tpu.matmul %402, %6, %cst_103 {dimension_numbers = #tpu.dot_dimension_numbers<[1], [0], [0], [1], [0, 0, 1, 1], [], []>} : vector<2x32xf32>, vector<32x128xf32>, vector<2x128xf32> -> vector<2x128xf32>
    %452 = arith.addf %450, %451 : vector<2x128xf32>
    %453 = vector.extract_strided_slice %452 {offsets = [0, 0], sizes = [2, 96], strides = [1, 1]} : vector<2x128xf32> to vector<2x96xf32>
    %454 = arith.negf %453 : vector<2x96xf32>
    %455 = math.exp %454 : vector<2x96xf32>
    %cst_104 = arith.constant 1.000000e+00 : f32
    %456 = vector.broadcast %cst_104 : f32 to vector<2x96xf32>
    %457 = arith.addf %456, %455 : vector<2x96xf32>
    %458 = arith.divf %456, %457 : vector<2x96xf32>
    %459 = vector.extract_strided_slice %458 {offsets = [0, 0], sizes = [2, 32], strides = [1, 1]} : vector<2x96xf32> to vector<2x32xf32>
    %460 = vector.extract_strided_slice %458 {offsets = [0, 32], sizes = [2, 32], strides = [1, 1]} : vector<2x96xf32> to vector<2x32xf32>
    %461 = vector.extract_strided_slice %458 {offsets = [0, 64], sizes = [2, 32], strides = [1, 1]} : vector<2x96xf32> to vector<2x32xf32>
    %462 = vector.extract_strided_slice %452 {offsets = [0, 96], sizes = [2, 32], strides = [1, 1]} : vector<2x128xf32> to vector<2x32xf32>
    %463 = math.tanh %462 : vector<2x32xf32>
    %464 = arith.mulf %460, %409 : vector<2x32xf32>
    %465 = arith.mulf %459, %463 : vector<2x32xf32>
    %466 = arith.addf %464, %465 : vector<2x32xf32>
    %467 = math.tanh %466 : vector<2x32xf32>
    %468 = arith.mulf %461, %467 : vector<2x32xf32>
    %469 = vector.broadcast %410 : vector<2x1xf32> to vector<2x32xf32>
    %470 = arith.mulf %469, %468 : vector<2x32xf32>
    %cst_105 = arith.constant 1.000000e+00 : f32
    %471 = vector.broadcast %cst_105 : f32 to vector<2x1xf32>
    %472 = arith.subf %471, %410 : vector<2x1xf32>
    %473 = vector.broadcast %472 : vector<2x1xf32> to vector<2x32xf32>
    %474 = arith.mulf %473, %402 : vector<2x32xf32>
    %475 = arith.addf %470, %474 : vector<2x32xf32>
    %476 = vector.broadcast %410 : vector<2x1xf32> to vector<2x32xf32>
    %477 = arith.mulf %476, %466 : vector<2x32xf32>
    %cst_106 = arith.constant 1.000000e+00 : f32
    %478 = vector.broadcast %cst_106 : f32 to vector<2x1xf32>
    %479 = arith.subf %478, %410 : vector<2x1xf32>
    %480 = vector.broadcast %479 : vector<2x1xf32> to vector<2x32xf32>
    %481 = arith.mulf %480, %409 : vector<2x32xf32>
    %482 = arith.addf %477, %481 : vector<2x32xf32>
    %cst_107 = arith.constant dense<0.000000e+00> : vector<2x48xf32>
    %483 = tpu.matmul %475, %2, %cst_107 {dimension_numbers = #tpu.dot_dimension_numbers<[1], [0], [0], [1], [0, 0, 1, 1], [], []>} : vector<2x32xf32>, vector<32x48xf32>, vector<2x48xf32> -> vector<2x48xf32>
    %484 = vector.broadcast %10 : vector<1x48xf32> to vector<2x48xf32>
    %485 = arith.addf %483, %484 : vector<2x48xf32>
    %486 = vector.extract_strided_slice %485 {offsets = [0, 0], sizes = [2, 16], strides = [1, 1]} : vector<2x48xf32> to vector<2x16xf32>
    %487 = vector.shape_cast %486 : vector<2x16xf32> to vector<2x1x16xf32>
    %488 = vector.broadcast %487 : vector<2x1x16xf32> to vector<2x16x16xf32>
    %489 = arith.addf %23, %488 : vector<2x16x16xf32>
    %cst_108 = arith.constant 0.000000e+00 : f32
    %490 = vector.broadcast %cst_108 : f32 to vector<2x16x16xf32>
    %491 = arith.maximumf %489, %490 : vector<2x16x16xf32>
    %492 = vector.shape_cast %11 : vector<1x16xf32> to vector<1x1x16xf32>
    %493 = vector.broadcast %492 : vector<1x1x16xf32> to vector<2x16x16xf32>
    %494 = arith.mulf %491, %493 : vector<2x16x16xf32>
    %cst_109 = arith.constant dense<0.000000e+00> : vector<2x16xf32>
    %495 = vector.multi_reduction <add>, %494, %cst_109 [2] : vector<2x16x16xf32> to vector<2x16xf32>
    %496 = vector.broadcast %12 : vector<1x1xf32> to vector<2x16xf32>
    %497 = arith.addf %495, %496 : vector<2x16xf32>
    %cst_110 = arith.constant dense<0xFF800000> : vector<2xf32>
    %498 = vector.multi_reduction <maximumf>, %497, %cst_110 [1] : vector<2x16xf32> to vector<2xf32>
    %499 = vector.shape_cast %498 : vector<2xf32> to vector<2x1xf32>
    %500 = vector.broadcast %499 : vector<2x1xf32> to vector<2x16xf32>
    %501 = arith.subf %497, %500 : vector<2x16xf32>
    %502 = math.exp %501 : vector<2x16xf32>
    %cst_111 = arith.constant dense<0.000000e+00> : vector<2xf32>
    %503 = vector.multi_reduction <add>, %502, %cst_111 [1] : vector<2x16xf32> to vector<2xf32>
    %504 = vector.shape_cast %503 : vector<2xf32> to vector<2x1xf32>
    %505 = tpu.reciprocal %504 {approx = true} : vector<2x1xf32> -> vector<2x1xf32>
    %506 = vector.broadcast %505 : vector<2x1xf32> to vector<2x16xf32>
    %507 = arith.mulf %502, %506 : vector<2x16xf32>
    %508 = vector.extract_strided_slice %507 {offsets = [0, 0], sizes = [1, 16], strides = [1, 1]} : vector<2x16xf32> to vector<1x16xf32>
    %cst_112 = arith.constant dense<0.000000e+00> : vector<1x32xf32>
    %509 = tpu.matmul %508, %24, %cst_112 {dimension_numbers = #tpu.dot_dimension_numbers<[1], [0], [0], [1], [0, 0, 1, 1], [], []>} : vector<1x16xf32>, vector<16x32xf32>, vector<1x32xf32> -> vector<1x32xf32>
    %510 = vector.extract_strided_slice %507 {offsets = [1, 0], sizes = [1, 16], strides = [1, 1]} : vector<2x16xf32> to vector<1x16xf32>
    %cst_113 = arith.constant dense<0.000000e+00> : vector<1x32xf32>
    %511 = tpu.matmul %510, %25, %cst_113 {dimension_numbers = #tpu.dot_dimension_numbers<[1], [0], [0], [1], [0, 0, 1, 1], [], []>} : vector<1x16xf32>, vector<16x32xf32>, vector<1x32xf32> -> vector<1x32xf32>
    %512 = tpu.concatenate %509, %511 in 0 : vector<1x32xf32>, vector<1x32xf32> -> vector<2x32xf32>
    %513 = vector.extract_strided_slice %485 {offsets = [0, 16], sizes = [2, 32], strides = [1, 1]} : vector<2x48xf32> to vector<2x32xf32>
    %514 = arith.negf %513 : vector<2x32xf32>
    %515 = math.exp %514 : vector<2x32xf32>
    %cst_114 = arith.constant 1.000000e+00 : f32
    %516 = vector.broadcast %cst_114 : f32 to vector<2x32xf32>
    %517 = arith.addf %516, %515 : vector<2x32xf32>
    %518 = arith.divf %516, %517 : vector<2x32xf32>
    %519 = arith.mulf %518, %512 : vector<2x32xf32>
    %520 = vector.extract_strided_slice %43 {offsets = [12, 0], sizes = [2, 128], strides = [1, 1]} : vector<14x128xf32> to vector<2x128xf32>
    %cst_115 = arith.constant dense<0.000000e+00> : vector<2x128xf32>
    %521 = tpu.matmul %519, %5, %cst_115 {dimension_numbers = #tpu.dot_dimension_numbers<[1], [0], [0], [1], [0, 0, 1, 1], [], []>} : vector<2x32xf32>, vector<32x128xf32>, vector<2x128xf32> -> vector<2x128xf32>
    %522 = arith.addf %520, %521 : vector<2x128xf32>
    %cst_116 = arith.constant dense<0.000000e+00> : vector<2x128xf32>
    %523 = tpu.matmul %475, %6, %cst_116 {dimension_numbers = #tpu.dot_dimension_numbers<[1], [0], [0], [1], [0, 0, 1, 1], [], []>} : vector<2x32xf32>, vector<32x128xf32>, vector<2x128xf32> -> vector<2x128xf32>
    %524 = arith.addf %522, %523 : vector<2x128xf32>
    %525 = vector.extract_strided_slice %524 {offsets = [0, 0], sizes = [2, 96], strides = [1, 1]} : vector<2x128xf32> to vector<2x96xf32>
    %526 = arith.negf %525 : vector<2x96xf32>
    %527 = math.exp %526 : vector<2x96xf32>
    %cst_117 = arith.constant 1.000000e+00 : f32
    %528 = vector.broadcast %cst_117 : f32 to vector<2x96xf32>
    %529 = arith.addf %528, %527 : vector<2x96xf32>
    %530 = arith.divf %528, %529 : vector<2x96xf32>
    %531 = vector.extract_strided_slice %530 {offsets = [0, 0], sizes = [2, 32], strides = [1, 1]} : vector<2x96xf32> to vector<2x32xf32>
    %532 = vector.extract_strided_slice %530 {offsets = [0, 32], sizes = [2, 32], strides = [1, 1]} : vector<2x96xf32> to vector<2x32xf32>
    %533 = vector.extract_strided_slice %530 {offsets = [0, 64], sizes = [2, 32], strides = [1, 1]} : vector<2x96xf32> to vector<2x32xf32>
    %534 = vector.extract_strided_slice %524 {offsets = [0, 96], sizes = [2, 32], strides = [1, 1]} : vector<2x128xf32> to vector<2x32xf32>
    %535 = math.tanh %534 : vector<2x32xf32>
    %536 = arith.mulf %532, %482 : vector<2x32xf32>
    %537 = arith.mulf %531, %535 : vector<2x32xf32>
    %538 = arith.addf %536, %537 : vector<2x32xf32>
    %539 = math.tanh %538 : vector<2x32xf32>
    %540 = arith.mulf %533, %539 : vector<2x32xf32>
    %541 = tpu.concatenate %103, %176, %249, %322, %395, %468, %540 in 0 : vector<2x32xf32>, vector<2x32xf32>, vector<2x32xf32>, vector<2x32xf32>, vector<2x32xf32>, vector<2x32xf32>, vector<2x32xf32> -> vector<14x32xf32>
    %542 = tpu.concatenate %70, %143, %216, %289, %362, %435, %507 in 0 : vector<2x16xf32>, vector<2x16xf32>, vector<2x16xf32>, vector<2x16xf32>, vector<2x16xf32>, vector<2x16xf32>, vector<2x16xf32> -> vector<14x16xf32>
    %cst_118 = arith.constant dense<0.000000e+00> : vector<14x64xf32>
    %543 = tpu.matmul %541, %7, %cst_118 {dimension_numbers = #tpu.dot_dimension_numbers<[1], [0], [0], [1], [0, 0, 1, 1], [], []>} : vector<14x32xf32>, vector<32x64xf32>, vector<14x64xf32> -> vector<14x64xf32>
    %544 = vector.broadcast %15 : vector<1x64xf32> to vector<14x64xf32>
    %545 = arith.addf %543, %544 : vector<14x64xf32>
    %cst_119 = arith.constant 0.000000e+00 : f32
    %546 = vector.broadcast %cst_119 : f32 to vector<14x48xf32>
    %547 = tpu.concatenate %545, %542, %546 in 1 : vector<14x64xf32>, vector<14x16xf32>, vector<14x48xf32> -> vector<14x128xf32>
    %548 = vector.broadcast %44 : vector<14x1xf32> to vector<14x128xf32>
    %549 = arith.mulf %548, %547 : vector<14x128xf32>
    %c0_120 = arith.constant 0 : index
    %c0_121 = arith.constant 0 : index
    %550 = vector.load %arg4[%c0_120, %c0_121] : memref<14x128xf32, #tpu.memory_space<vmem>>, vector<14x128xf32>
    tpu.vector_store %arg4[%c0_120, %c0_121], %549 {strides = array<i32>} : memref<14x128xf32, #tpu.memory_space<vmem>>, vector<14x128xf32>,
    return
  }
}

</mosaic_0001>

<llo_original>
// kernel: tpu_custom_call.1
$region0: #{tpu_custom_call.1}
  #allocation0 [shape = 'u32[]', space=smem, size = 0x4, offset = 0x4, fixed_abs, tag = 'smem constant byte address 0x4 - core index']
  #allocation1 [shape = 'u32[144,128]{1,0:T(1,128)}', space=vmem, size = 0x12000, scoped, tag = 'internal scratch']
  %s0 = inlined_call_operand.hbm [shape: f32[32,64], index: 0, kind: input, shape index: {}]
  %s1 = inlined_call_operand.vmem [shape: f32[14,16], index: 1, kind: input, shape index: {}]
  %s2 = inlined_call_operand.vmem [shape: f32[14,1], index: 2, kind: input, shape index: {}]
  %s3 = inlined_call_operand.hbm [shape: f32[280,128], index: 3, kind: input, shape index: {}]
  %s4 = inlined_call_operand.hbm [shape: f32[14,128], index: 4, kind: output, shape index: {}]
  %s5 = sld [smem:[#allocation0]]
  $region34: #{tpu_custom_call.1} parent=0
    _
  %s7 = ssub.s32 1, %s5
  %s8 = scalar_select 0, %s7, %s5
  $region1: #{tpu_custom_call.1} parent=0
    #allocation2 [shape = 'u8[16384]{0}', space=vmem, size = 0x4000, scoped, tag = 'input window, operand 0, single buffered']
    #allocation3 [shape = 's32[1]{0}', space=sflag, size = 0x4, scoped, tag = 'scoped memory for tpu_custom_call.1']
    #allocation4 [shape = 's32[1]{0}', space=sflag, size = 0x4, scoped, tag = 'scoped memory for tpu_custom_call.1']
    #allocation5 [shape = 'u8[143360]{0}', space=vmem, size = 0x23000, scoped, tag = 'input window, operand 3, single buffered']
    #allocation6 [shape = 's32[1]{0}', space=sflag, size = 0x4, scoped, tag = 'scoped memory for tpu_custom_call.1']
    #allocation7 [shape = 'u8[8192]{0}', space=vmem, size = 0x2000, scoped, tag = 'output window, operand 0, single buffered']
    %9 = vsyncpa [#allocation3], 0
    %10 = vsyncpa [#allocation6], 0
    %11 = vsyncpa [#allocation4], 0
    // Predicated region
    $region2: #{tpu_custom_call.1} parent=1 // pred_check
      _
    $region3: #{tpu_custom_call.1} parent=1 // pred_check_branch
      %13 = sbr.rel (0) target = $region5
    $region4: #{tpu_custom_call.1} parent=1 // pred_region
      %s15 = ssub.s32 512, 512
      %16 = vsyncadd [#allocation3], %s15
      %s17 = sshll.u32 [#allocation2], 4
      %s18 = int_to_ptr.vmem [resolvable:$true] %s17
      %23 = dma.hbm_to_vmem [thread:$0]  %s0, 512, %s18, [#allocation3], 128, 128, 8
    $region5: #{tpu_custom_call.1} parent=1 // pred_fallthru
      _
    // Predicated region
    $region6: #{tpu_custom_call.1} parent=1 // pred_check
      _
    $region7: #{tpu_custom_call.1} parent=1 // pred_check_branch
      %25 = sbr.rel (0) target = $region9
    $region8: #{tpu_custom_call.1} parent=1 // pred_region
      _
    $region9: #{tpu_custom_call.1} parent=1 // pred_fallthru
      _
    // Predicated region
    $region10: #{tpu_custom_call.1} parent=1 // pred_check
      _
    $region11: #{tpu_custom_call.1} parent=1 // pred_check_branch
      %27 = sbr.rel (0) target = $region13
    $region12: #{tpu_custom_call.1} parent=1 // pred_region
      _
    $region13: #{tpu_custom_call.1} parent=1 // pred_fallthru
      _
    // Predicated region
    $region14: #{tpu_custom_call.1} parent=1 // pred_check
      _
    $region15: #{tpu_custom_call.1} parent=1 // pred_check_branch
      %29 = sbr.rel (0) target = $region17
    $region16: #{tpu_custom_call.1} parent=1 // pred_region
      %s31 = ssub.s32 4480, 4480
      %32 = vsyncadd [#allocation6], %s31
      %s33 = sshll.u32 [#allocation5], 4
      %s34 = int_to_ptr.vmem [resolvable:$true] %s33
      %39 = dma.hbm_to_vmem [thread:$0]  %s3, 4480, %s34, [#allocation6], 128, 128, 8
    $region17: #{tpu_custom_call.1} parent=1 // pred_fallthru
      _
    // Predicated region
    $region18: #{tpu_custom_call.1} parent=1 // pred_check
      _
    $region19: #{tpu_custom_call.1} parent=1 // pred_check_branch
      %41 = sbr.rel (0) target = $region21
    $region20: #{tpu_custom_call.1} parent=1 // pred_region
      %42 = dma.done [#allocation3], 512
    $region21: #{tpu_custom_call.1} parent=1 // pred_fallthru
      _
    // Predicated region
    $region22: #{tpu_custom_call.1} parent=1 // pred_check
      _
    $region23: #{tpu_custom_call.1} parent=1 // pred_check_branch
      %44 = sbr.rel (0) target = $region25
    $region24: #{tpu_custom_call.1} parent=1 // pred_region
      %45 = dma.done [#allocation6], 4480
    $region25: #{tpu_custom_call.1} parent=1 // pred_fallthru
      _
    %v46 = vld [vmem:[#allocation5] sm:$0xff]
    %v47 = vld [vmem:[#allocation5 + $0x8] sm:$0xff]
    %v48 = vld [vmem:[#allocation5 + $0x10] sm:$0xff]
    %v49 = vld [vmem:[#allocation5 + $0x18] sm:$0xff]
    %v50 = vld [vmem:[#allocation5 + $0x20] sm:$0xff]
    %v51 = vld [vmem:[#allocation5 + $0x28] sm:$0xff]
    %v52 = vld [vmem:[#allocation5 + $0x30] sm:$0xff]
    %v53 = vld [vmem:[#allocation5 + $0x38] sm:$0xff]
    %v54 = vld [vmem:[#allocation5 + $0x40] sm:$0xff]
    %v55 = vld [vmem:[#allocation5 + $0x48] sm:$0xff]
    %v56 = vld [vmem:[#allocation5 + $0x50] sm:$0xff]
    %v57 = vld [vmem:[#allocation5 + $0x58] sm:$0xff]
    %v58 = vld [vmem:[#allocation5 + $0x60] sm:$0xff]
    %v59 = vld [vmem:[#allocation5 + $0x68] sm:$0xff]
    %v60 = vld [vmem:[#allocation5 + $0x70] sm:$0xff]
    %v61 = vld [vmem:[#allocation5 + $0x78] sm:$0xff]
    %v62 = vld [vmem:[#allocation5 + $0x80] sm:$0xff]
    %v63 = vld [vmem:[#allocation5 + $0x88] sm:$0xff]
    %v64 = vld [vmem:[#allocation5 + $0x90] sm:$0xff]
    %v65 = vld [vmem:[#allocation5 + $0x98] sm:$0xff]
    %v66 = vld [vmem:[#allocation5 + $0xa0] sm:$0xff]
    %v67 = vld [vmem:[#allocation5 + $0xa8] sm:$0xff]
    %v68 = vld [vmem:[#allocation5 + $0xb0] sm:$0xff]
    %v69 = vld [vmem:[#allocation5 + $0xb8] sm:$0xff]
    %v70 = vld [vmem:[#allocation5 + $0xc0] sm:$0xff]
    %v71 = vld [vmem:[#allocation5 + $0xc8] sm:$0xff]
    %v72 = vld [vmem:[#allocation5 + $0xd0] sm:$0xff]
    %v73 = vld [vmem:[#allocation5 + $0xd8] sm:$0xff]
    %v74 = vld [vmem:[#allocation5 + $0xe0] sm:$0xff]
    %v75 = vld [vmem:[#allocation5 + $0xe8] sm:$0xff]
    %v76 = vld [vmem:[#allocation5 + $0xf0] sm:$0xff]
    %v77 = vld [vmem:[#allocation5 + $0xf8] sm:$0xff]
    %v78 = vld [vmem:[#allocation5 + $0x100] sm:$0xff]
    %v79 = vld [vmem:[#allocation5 + $0x108] sm:$0xff]
    %v80 = vld [vmem:[#allocation5 + $0x110] sm:$0x1]
    %v81 = vld [vmem:[#allocation5 + $0x111] sm:$0x1]
    %v82 = vld [vmem:[#allocation5 + $0x112] sm:$0x1]
    %v83 = vld [vmem:[#allocation5 + $0x113] sm:$0x1]
    %v84 = vld [vmem:[#allocation5 + $0x114] sm:$0x1]
    %v85 = vld [vmem:[#allocation5 + $0x115] sm:$0x1]
    %v86 = vld [vmem:[#allocation5 + $0x116] sm:$0x1]
    %v87 = vld [vmem:[#allocation2] sm:$0xff]
    %v88 = vld [vmem:[#allocation2 + $0x8] sm:$0xff]
    %v89 = vld [vmem:[#allocation2 + $0x10] sm:$0xff]
    %v90 = vld [vmem:[#allocation2 + $0x18] sm:$0xff]
    %v91 = vlaneseq
    %v92 = vshrl.u32 %v91, 7
    %v93 = vsub.s32 0, %v92
    %v94 = vrot.slane %v80, %v93
    %vm95 = vcmask 523264
    %v97 = vsel %vm95, %v87, 0
    %v100 = vsel %vm95, %v88, 0
    %v103 = vsel %vm95, %v89, 0
    %v106 = vsel %vm95, %v90, 0
    %108 = vmatprep.subr.mxu0 0.0
    %109 = vmatpush1.msra.mxu0 0.0
    %110 = vmatprep.subr.mxu0 0.0
    %111 = vmatpush1.msra.mxu0 0.0
    %112 = vmatprep.subr.mxu0 0.0
    %113 = vmatpush1.msra.mxu0 0.0
    %114 = vmatprep.subr.mxu0 0.0
    %115 = vmatpush1.msra.mxu0 0.0
    %116 = vmatprep.subr.mxu0 0.0
    %117 = vmatpush1.msra.mxu0 0.0
    %118 = vmatprep.subr.mxu0 0.0
    %119 = vmatpush1.msra.mxu0 0.0
    %120 = vmatprep.subr.mxu0 0.0
    %121 = vmatpush1.msra.mxu0 0.0
    %122 = vmatprep.subr.mxu0 0.0
    %123 = vmatpush1.msra.mxu0 0.0
    %124 = vmatprep.subr.mxu0 0.0
    %125 = vmatpush1.msra.mxu0 %v53
    %126 = vmatprep.subr.mxu0 0.0
    %127 = vmatpush1.msra.mxu0 %v52
    %128 = vmatprep.subr.mxu0 0.0
    %129 = vmatpush1.msra.mxu0 %v51
    %130 = vmatprep.subr.mxu0 0.0
    %131 = vmatpush1.msra.mxu0 %v50
    %132 = vmatprep.subr.mxu0 0.0
    %133 = vmatpush1.msra.mxu0 %v49
    %134 = vmatprep.subr.mxu0 0.0
    %135 = vmatpush1.msra.mxu0 %v48
    %136 = vmatprep.subr.mxu0 0.0
    %137 = vmatpush1.msra.mxu0 %v47
    %138 = vmatprep.subr.mxu0 0.0
    %139 = vmatpush1.msra.mxu0 %v46
    %140 = vmatprep.subr.mxu0 0.0
    %141 = vmatpush2.msra.mxu0 0.0
    %142 = vmatprep.subr.mxu0 0.0
    %143 = vmatpush2.msra.mxu0 0.0
    %144 = vmatprep.subr.mxu0 0.0
    %145 = vmatpush2.msra.mxu0 0.0
    %146 = vmatprep.subr.mxu0 0.0
    %147 = vmatpush2.msra.mxu0 0.0
    %148 = vmatprep.subr.mxu0 0.0
    %149 = vmatpush2.msra.mxu0 0.0
    %150 = vmatprep.subr.mxu0 0.0
    %151 = vmatpush2.msra.mxu0 0.0
    %152 = vmatprep.subr.mxu0 0.0
    %153 = vmatpush2.msra.mxu0 0.0
    %154 = vmatprep.subr.mxu0 0.0
    %155 = vmatpush2.msra.mxu0 0.0
    %156 = vmatprep.subr.mxu0 0.0
    %157 = vmatpush2.msra.mxu0 0.0
    %158 = vmatprep.subr.mxu0 0.0
    %159 = vmatpush2.msra.mxu0 0.0
    %160 = vmatprep.subr.mxu0 0.0
    %161 = vmatpush2.msra.mxu0 0.0
    %162 = vmatprep.subr.mxu0 0.0
    %163 = vmatpush2.msra.mxu0 0.0
    %164 = vmatprep.subr.mxu0 0.0
    %165 = vmatpush2.msra.mxu0 0.0
    %166 = vmatprep.subr.mxu0 0.0
    %167 = vmatpush2.msra.mxu0 0.0
    %168 = vmatprep.subr.mxu0 0.0
    %169 = vmatpush2.msra.mxu0 0.0
    %170 = vmatprep.subr.mxu0 0.0
    %171 = vmatpush2.msra.mxu0 0.0
    %172 = vmatprep.mubr.f32.mxu0 0.0
    %173 = vmatmul.mubr.f32.gmra.mxu0 %v97
    %v174 = vpop.f32.mrf.mxu0
    %v175 = vadd.f32 %v94, %v174
    %v176 = vpop.f32.mrf.mxu0
    %177 = vmatprep.mubr.f32.mxu0 0.0
    %178 = vmatmul.mubr.f32.gmra.mxu0 %v100
    %v179 = vpop.f32.mrf.mxu0
    %v180 = vadd.f32 %v94, %v179
    %v181 = vpop.f32.mrf.mxu0
    %182 = vmatprep.mubr.f32.mxu0 0.0
    %183 = vmatmul.mubr.f32.gmra.mxu0 %v103
    %v184 = vpop.f32.mrf.mxu0
    %v185 = vadd.f32 %v94, %v184
    %v186 = vpop.f32.mrf.mxu0
    %187 = vmatprep.mubr.f32.mxu0 0.0
    %188 = vmatmul.mubr.f32.gmra.mxu0 %v106
    %v189 = vpop.f32.mrf.mxu0
    %v190 = vadd.f32 %v94, %v189
    %v191 = vpop.f32.mrf.mxu0
    %192 = vdwg.mxu0
    %v193 = vlaneseq
    %v194 = vshrl.u32 %v193, 7
    %v195 = vsub.s32 0, %v194
    %v196 = vrot.slane %v81, %v195
    %vm197 = vcmask 261120
    %v199 = vsel %vm197, %v175, 0
    %v202 = vsel %vm197, %v180, 0
    %v205 = vsel %vm197, %v185, 0
    %v208 = vsel %vm197, %v190, 0
    %210 = vmatprep.subr.mxu0 0.0
    %211 = vmatpush1.msra.mxu0 0.0
    %212 = vmatprep.subr.mxu0 0.0
    %213 = vmatpush1.msra.mxu0 0.0
    %214 = vmatprep.subr.mxu0 0.0
    %215 = vmatpush1.msra.mxu0 0.0
    %216 = vmatprep.subr.mxu0 0.0
    %217 = vmatpush1.msra.mxu0 0.0
    %218 = vmatprep.subr.mxu0 0.0
    %219 = vmatpush1.msra.mxu0 0.0
    %220 = vmatprep.subr.mxu0 0.0
    %221 = vmatpush1.msra.mxu0 0.0
    %222 = vmatprep.subr.mxu0 0.0
    %223 = vmatpush1.msra.mxu0 0.0
    %224 = vmatprep.subr.mxu0 0.0
    %225 = vmatpush1.msra.mxu0 0.0
    %226 = vmatprep.subr.mxu0 0.0
    %227 = vmatpush1.msra.mxu0 0.0
    %228 = vmatprep.subr.mxu0 0.0
    %229 = vmatpush1.msra.mxu0 0.0
    %230 = vmatprep.subr.mxu0 0.0
    %231 = vmatpush1.msra.mxu0 0.0
    %232 = vmatprep.subr.mxu0 0.0
    %233 = vmatpush1.msra.mxu0 0.0
    %234 = vmatprep.subr.mxu0 0.0
    %235 = vmatpush1.msra.mxu0 %v57
    %236 = vmatprep.subr.mxu0 0.0
    %237 = vmatpush1.msra.mxu0 %v56
    %238 = vmatprep.subr.mxu0 0.0
    %239 = vmatpush1.msra.mxu0 %v55
    %240 = vmatprep.subr.mxu0 0.0
    %241 = vmatpush1.msra.mxu0 %v54
    %242 = vmatprep.subr.mxu0 0.0
    %243 = vmatpush2.msra.mxu0 0.0
    %244 = vmatprep.subr.mxu0 0.0
    %245 = vmatpush2.msra.mxu0 0.0
    %246 = vmatprep.subr.mxu0 0.0
    %247 = vmatpush2.msra.mxu0 0.0
    %248 = vmatprep.subr.mxu0 0.0
    %249 = vmatpush2.msra.mxu0 0.0
    %250 = vmatprep.subr.mxu0 0.0
    %251 = vmatpush2.msra.mxu0 0.0
    %252 = vmatprep.subr.mxu0 0.0
    %253 = vmatpush2.msra.mxu0 0.0
    %254 = vmatprep.subr.mxu0 0.0
    %255 = vmatpush2.msra.mxu0 0.0
    %256 = vmatprep.subr.mxu0 0.0
    %257 = vmatpush2.msra.mxu0 0.0
    %258 = vmatprep.subr.mxu0 0.0
    %259 = vmatpush2.msra.mxu0 0.0
    %260 = vmatprep.subr.mxu0 0.0
    %261 = vmatpush2.msra.mxu0 0.0
    %262 = vmatprep.subr.mxu0 0.0
    %263 = vmatpush2.msra.mxu0 0.0
    %264 = vmatprep.subr.mxu0 0.0
    %265 = vmatpush2.msra.mxu0 0.0
    %266 = vmatprep.subr.mxu0 0.0
    %267 = vmatpush2.msra.mxu0 0.0
    %268 = vmatprep.subr.mxu0 0.0
    %269 = vmatpush2.msra.mxu0 0.0
    %270 = vmatprep.subr.mxu0 0.0
    %271 = vmatpush2.msra.mxu0 0.0
    %272 = vmatprep.subr.mxu0 0.0
    %273 = vmatpush2.msra.mxu0 0.0
    %274 = vmatprep.mubr.f32.mxu0 0.0
    %275 = vmatmul.mubr.f32.gmra.mxu0 %v199
    %v276 = vpop.f32.mrf.mxu0
    %v277 = vadd.f32 %v196, %v276
    %v278 = vpop.f32.mrf.mxu0
    %279 = vmatprep.mubr.f32.mxu0 0.0
    %280 = vmatmul.mubr.f32.gmra.mxu0 %v202
    %v281 = vpop.f32.mrf.mxu0
    %v282 = vadd.f32 %v196, %v281
    %v283 = vpop.f32.mrf.mxu0
    %284 = vmatprep.mubr.f32.mxu0 0.0
    %285 = vmatmul.mubr.f32.gmra.mxu0 %v205
    %v286 = vpop.f32.mrf.mxu0
    %v287 = vadd.f32 %v196, %v286
    %v288 = vpop.f32.mrf.mxu0
    %289 = vmatprep.mubr.f32.mxu0 0.0
    %290 = vmatmul.mubr.f32.gmra.mxu0 %v208
    %v291 = vpop.f32.mrf.mxu0
    %v292 = vadd.f32 %v196, %v291
    %v293 = vpop.f32.mrf.mxu0
    %294 = vdwg.mxu0
    %v295 = vsel %vm197, %v175, 0.0
    %v296 = vsel %vm197, %v180, 0.0
    %v297 = vadd.f32 %v295, %v296
    %v298 = vrot.slane %v297, 4
    %v299 = vadd.f32 %v297, %v298
    %v300 = vrot.slane %v299, 2
    %v301 = vadd.f32 %v299, %v300
    %v302 = vrot.slane %v301, 1
    %v303 = vadd.f32 %v301, %v302
    %v304 = vrcp.pop 16.0
    %v305 = vmul.f32 %v303, %v304
    %v306 = vsel %vm197, %v185, 0.0
    %v307 = vsel %vm197, %v190, 0.0
    %v308 = vadd.f32 %v306, %v307
    %v309 = vrot.slane %v308, 4
    %v310 = vadd.f32 %v308, %v309
    %v311 = vrot.slane %v310, 2
    %v312 = vadd.f32 %v310, %v311
    %v313 = vrot.slane %v312, 1
    %v314 = vadd.f32 %v312, %v313
    %v315 = vmul.f32 %v314, %v304
    %vm316 = vcmask 1040384
    %v317 = vsel %vm316, %v305, %v315
    %v318 = vlaneseq
    %v319 = vshrl.u32 %v318, 7
    %v320 = vsub.s32 0, %v319
    %v321 = vrot.slane %v84, %v320
    %v323 = vsel %vm197, %v317, 0
    %325 = vmatprep.subr.mxu0 0.0
    %326 = vmatpush1.msra.mxu0 0.0
    %327 = vmatprep.subr.mxu0 0.0
    %328 = vmatpush1.msra.mxu0 0.0
    %329 = vmatprep.subr.mxu0 0.0
    %330 = vmatpush1.msra.mxu0 0.0
    %331 = vmatprep.subr.mxu0 0.0
    %332 = vmatpush1.msra.mxu0 0.0
    %333 = vmatprep.subr.mxu0 0.0
    %334 = vmatpush1.msra.mxu0 0.0
    %335 = vmatprep.subr.mxu0 0.0
    %336 = vmatpush1.msra.mxu0 0.0
    %337 = vmatprep.subr.mxu0 0.0
    %338 = vmatpush1.msra.mxu0 0.0
    %339 = vmatprep.subr.mxu0 0.0
    %340 = vmatpush1.msra.mxu0 0.0
    %341 = vmatprep.subr.mxu0 0.0
    %342 = vmatpush1.msra.mxu0 0.0
    %343 = vmatprep.subr.mxu0 0.0
    %344 = vmatpush1.msra.mxu0 0.0
    %345 = vmatprep.subr.mxu0 0.0
    %346 = vmatpush1.msra.mxu0 0.0
    %347 = vmatprep.subr.mxu0 0.0
    %348 = vmatpush1.msra.mxu0 0.0
    %349 = vmatprep.subr.mxu0 0.0
    %350 = vmatpush1.msra.mxu0 %v65
    %351 = vmatprep.subr.mxu0 0.0
    %352 = vmatpush1.msra.mxu0 %v64
    %353 = vmatprep.subr.mxu0 0.0
    %354 = vmatpush1.msra.mxu0 %v63
    %355 = vmatprep.subr.mxu0 0.0
    %356 = vmatpush1.msra.mxu0 %v62
    %357 = vmatprep.subr.mxu0 0.0
    %358 = vmatpush2.msra.mxu0 0.0
    %359 = vmatprep.subr.mxu0 0.0
    %360 = vmatpush2.msra.mxu0 0.0
    %361 = vmatprep.subr.mxu0 0.0
    %362 = vmatpush2.msra.mxu0 0.0
    %363 = vmatprep.subr.mxu0 0.0
    %364 = vmatpush2.msra.mxu0 0.0
    %365 = vmatprep.subr.mxu0 0.0
    %366 = vmatpush2.msra.mxu0 0.0
    %367 = vmatprep.subr.mxu0 0.0
    %368 = vmatpush2.msra.mxu0 0.0
    %369 = vmatprep.subr.mxu0 0.0
    %370 = vmatpush2.msra.mxu0 0.0
    %371 = vmatprep.subr.mxu0 0.0
    %372 = vmatpush2.msra.mxu0 0.0
    %373 = vmatprep.subr.mxu0 0.0
    %374 = vmatpush2.msra.mxu0 0.0
    %375 = vmatprep.subr.mxu0 0.0
    %376 = vmatpush2.msra.mxu0 0.0
    %377 = vmatprep.subr.mxu0 0.0
    %378 = vmatpush2.msra.mxu0 0.0
    %379 = vmatprep.subr.mxu0 0.0
    %380 = vmatpush2.msra.mxu0 0.0
    %381 = vmatprep.subr.mxu0 0.0
    %382 = vmatpush2.msra.mxu0 0.0
    %383 = vmatprep.subr.mxu0 0.0
    %384 = vmatpush2.msra.mxu0 0.0
    %385 = vmatprep.subr.mxu0 0.0
    %386 = vmatpush2.msra.mxu0 0.0
    %387 = vmatprep.subr.mxu0 0.0
    %388 = vmatpush2.msra.mxu0 0.0
    %389 = vmatprep.mubr.f32.mxu0 0.0
    %390 = vmatmul.mubr.f32.gmra.mxu0 %v323
    %v391 = vpop.f32.mrf.mxu0
    %v392 = vadd.f32 %v321, %v391
    %v393 = vpop.f32.mrf.mxu0
    %394 = vdwg.mxu0
    %v395 = vld [vmem:[%s1] sm:$0xff]
    %v396 = vld [vmem:[%s1 + $0x8] sm:$0x3f]
    %v397 = vlaneseq
    %v398 = vshrl.u32 %v397, 7
    %v399 = vsub.s32 0, %v398
    %v400 = vrot.slane %v85, %v399
    %vm401 = vcmask 130048
    %v403 = vsel %vm401, %v395, 0
    %v406 = vsel %vm401, %v396, 0
    %408 = vmatprep.subr.mxu0 0.0
    %409 = vmatpush1.msra.mxu0 0.0
    %410 = vmatprep.subr.mxu0 0.0
    %411 = vmatpush1.msra.mxu0 0.0
    %412 = vmatprep.subr.mxu0 0.0
    %413 = vmatpush1.msra.mxu0 0.0
    %414 = vmatprep.subr.mxu0 0.0
    %415 = vmatpush1.msra.mxu0 0.0
    %416 = vmatprep.subr.mxu0 0.0
    %417 = vmatpush1.msra.mxu0 0.0
    %418 = vmatprep.subr.mxu0 0.0
    %419 = vmatpush1.msra.mxu0 0.0
    %420 = vmatprep.subr.mxu0 0.0
    %421 = vmatpush1.msra.mxu0 0.0
    %422 = vmatprep.subr.mxu0 0.0
    %423 = vmatpush1.msra.mxu0 0.0
    %424 = vmatprep.subr.mxu0 0.0
    %425 = vmatpush1.msra.mxu0 0.0
    %426 = vmatprep.subr.mxu0 0.0
    %427 = vmatpush1.msra.mxu0 0.0
    %428 = vmatprep.subr.mxu0 0.0
    %429 = vmatpush1.msra.mxu0 0.0
    %430 = vmatprep.subr.mxu0 0.0
    %431 = vmatpush1.msra.mxu0 0.0
    %432 = vmatprep.subr.mxu0 0.0
    %433 = vmatpush1.msra.mxu0 0.0
    %434 = vmatprep.subr.mxu0 0.0
    %435 = vmatpush1.msra.mxu0 0.0
    %436 = vmatprep.subr.mxu0 0.0
    %437 = vmatpush1.msra.mxu0 %v67
    %438 = vmatprep.subr.mxu0 0.0
    %439 = vmatpush1.msra.mxu0 %v66
    %440 = vmatprep.subr.mxu0 0.0
    %441 = vmatpush2.msra.mxu0 0.0
    %442 = vmatprep.subr.mxu0 0.0
    %443 = vmatpush2.msra.mxu0 0.0
    %444 = vmatprep.subr.mxu0 0.0
    %445 = vmatpush2.msra.mxu0 0.0
    %446 = vmatprep.subr.mxu0 0.0
    %447 = vmatpush2.msra.mxu0 0.0
    %448 = vmatprep.subr.mxu0 0.0
    %449 = vmatpush2.msra.mxu0 0.0
    %450 = vmatprep.subr.mxu0 0.0
    %451 = vmatpush2.msra.mxu0 0.0
    %452 = vmatprep.subr.mxu0 0.0
    %453 = vmatpush2.msra.mxu0 0.0
    %454 = vmatprep.subr.mxu0 0.0
    %455 = vmatpush2.msra.mxu0 0.0
    %456 = vmatprep.subr.mxu0 0.0
    %457 = vmatpush2.msra.mxu0 0.0
    %458 = vmatprep.subr.mxu0 0.0
    %459 = vmatpush2.msra.mxu0 0.0
    %460 = vmatprep.subr.mxu0 0.0
    %461 = vmatpush2.msra.mxu0 0.0
    %462 = vmatprep.subr.mxu0 0.0
    %463 = vmatpush2.msra.mxu0 0.0
    %464 = vmatprep.subr.mxu0 0.0
    %465 = vmatpush2.msra.mxu0 0.0
    %466 = vmatprep.subr.mxu0 0.0
    %467 = vmatpush2.msra.mxu0 0.0
    %468 = vmatprep.subr.mxu0 0.0
    %469 = vmatpush2.msra.mxu0 0.0
    %470 = vmatprep.subr.mxu0 0.0
    %471 = vmatpush2.msra.mxu0 0.0
    %472 = vmatprep.mubr.f32.mxu0 0.0
    %473 = vmatmul.mubr.f32.gmra.mxu0 %v403
    %v474 = vpop.f32.mrf.mxu0
    %v475 = vadd.f32 %v400, %v474
    %v476 = vpop.f32.mrf.mxu0
    %477 = vmatprep.mubr.f32.mxu0 0.0
    %478 = vmatmul.mubr.f32.gmra.mxu0 %v406
    %v479 = vpop.f32.mrf.mxu0
    %v480 = vadd.f32 %v400, %v479
    %v481 = vpop.f32.mrf.mxu0
    %482 = vdwg.mxu0
    %v483 = vld [vmem:[%s2] sm:$0xff]
    %v484 = vld [vmem:[%s2 + $0x8] sm:$0x3f]
    %v485 = vlaneseq
    %v486 = vshrl.u32 %v485, 7
    %v487 = vsub.s32 0, %v486
    %v488 = vrot.slane %v82, %v487
    %v490 = vsel %vm197, %v392, 0
    %492 = vmatprep.subr.mxu0 0.0
    %493 = vmatpush1.msra.mxu0 0.0
    %494 = vmatprep.subr.mxu0 0.0
    %495 = vmatpush1.msra.mxu0 0.0
    %496 = vmatprep.subr.mxu0 0.0
    %497 = vmatpush1.msra.mxu0 0.0
    %498 = vmatprep.subr.mxu0 0.0
    %499 = vmatpush1.msra.mxu0 0.0
    %500 = vmatprep.subr.mxu0 0.0
    %501 = vmatpush1.msra.mxu0 0.0
    %502 = vmatprep.subr.mxu0 0.0
    %503 = vmatpush1.msra.mxu0 0.0
    %504 = vmatprep.subr.mxu0 0.0
    %505 = vmatpush1.msra.mxu0 0.0
    %506 = vmatprep.subr.mxu0 0.0
    %507 = vmatpush1.msra.mxu0 0.0
    %508 = vmatprep.subr.mxu0 0.0
    %509 = vmatpush1.msra.mxu0 0.0
    %510 = vmatprep.subr.mxu0 0.0
    %511 = vmatpush1.msra.mxu0 0.0
    %512 = vmatprep.subr.mxu0 0.0
    %513 = vmatpush1.msra.mxu0 0.0
    %514 = vmatprep.subr.mxu0 0.0
    %515 = vmatpush1.msra.mxu0 0.0
    %516 = vmatprep.subr.mxu0 0.0
    %517 = vmatpush1.msra.mxu0 %v61
    %518 = vmatprep.subr.mxu0 0.0
    %519 = vmatpush1.msra.mxu0 %v60
    %520 = vmatprep.subr.mxu0 0.0
    %521 = vmatpush1.msra.mxu0 %v59
    %522 = vmatprep.subr.mxu0 0.0
    %523 = vmatpush1.msra.mxu0 %v58
    %524 = vmatprep.subr.mxu0 0.0
    %525 = vmatpush2.msra.mxu0 0.0
    %526 = vmatprep.subr.mxu0 0.0
    %527 = vmatpush2.msra.mxu0 0.0
    %528 = vmatprep.subr.mxu0 0.0
    %529 = vmatpush2.msra.mxu0 0.0
    %530 = vmatprep.subr.mxu0 0.0
    %531 = vmatpush2.msra.mxu0 0.0
    %532 = vmatprep.subr.mxu0 0.0
    %533 = vmatpush2.msra.mxu0 0.0
    %534 = vmatprep.subr.mxu0 0.0
    %535 = vmatpush2.msra.mxu0 0.0
    %536 = vmatprep.subr.mxu0 0.0
    %537 = vmatpush2.msra.mxu0 0.0
    %538 = vmatprep.subr.mxu0 0.0
    %539 = vmatpush2.msra.mxu0 0.0
    %540 = vmatprep.subr.mxu0 0.0
    %541 = vmatpush2.msra.mxu0 0.0
    %542 = vmatprep.subr.mxu0 0.0
    %543 = vmatpush2.msra.mxu0 0.0
    %544 = vmatprep.subr.mxu0 0.0
    %545 = vmatpush2.msra.mxu0 0.0
    %546 = vmatprep.subr.mxu0 0.0
    %547 = vmatpush2.msra.mxu0 0.0
    %548 = vmatprep.subr.mxu0 0.0
    %549 = vmatpush2.msra.mxu0 0.0
    %550 = vmatprep.subr.mxu0 0.0
    %551 = vmatpush2.msra.mxu0 0.0
    %552 = vmatprep.subr.mxu0 0.0
    %553 = vmatpush2.msra.mxu0 0.0
    %554 = vmatprep.subr.mxu0 0.0
    %555 = vmatpush2.msra.mxu0 0.0
    %556 = vmatprep.mubr.f32.mxu0 0.0
    %557 = vmatmul.mubr.f32.gmra.mxu0 %v490
    %v558 = vpop.f32.mrf.mxu0
    %v559 = vadd.f32 %v488, %v558
    %v560 = vpop.f32.mrf.mxu0
    %561 = vdwg.mxu0
    %v564 = vunpack.c.l.s4 1966171168
    %v565 = vunpack.c.0.s8 %v564
    %v566 = vlaneseq
    %v567 = vshrl.u32 %v566, 7
    %v568 = vsub.s32 %v565, %v567
    %v569 = vrot.slane %v559, %v568
    %v570 = vcombine.high %v569, %v569
    %v572 = vunpack.c.l.s4 1966171168
    %v573 = vunpack.c.0.s8 %v572
    %v574 = vlaneseq
    %v575 = vshrl.u32 %v574, 7
    %v576 = vsub.s32 %v573, %v575
    %v577 = vrot.slane %v569, %v576
    %v579 = vunpack.c.l.s4 1966171168
    %v580 = vunpack.c.0.s8 %v579
    %v581 = vlaneseq
    %v582 = vshrl.u32 %v581, 7
    %v583 = vsub.s32 %v580, %v582
    %v584 = vrot.slane %v570, %v583
    %v585 = vlaneseq
    %v586 = vshrl.u32 %v585, 7
    %v587 = vsub.s32 0, %v586
    %v588 = vrot.slane %v577, %v587
    %v589 = vlaneseq
    %v590 = vshrl.u32 %v589, 7
    %v591 = vsub.s32 0, %v590
    %v592 = vrot.slane %v584, %v591
    %v595 = vadd.f32 %v277, %v588
    %v596 = vadd.f32 %v282, %v588
    %v597 = vadd.f32 %v287, %v592
    %v598 = vadd.f32 %v292, %v592
    %v599 = vmax.f32 %v595, 0.0
    %v600 = vmax.f32 %v596, 0.0
    %v601 = vmax.f32 %v597, 0.0
    %v602 = vmax.f32 %v598, 0.0
    %v603 = vlaneseq
    %v604 = vshrl.u32 %v603, 7
    %v605 = vsub.s32 0, %v604
    %v606 = vrot.slane %v83, %v605
    %v607 = vmul.f32 %v599, %v606
    %v608 = vmul.f32 %v600, %v606
    %v609 = vmul.f32 %v601, %v606
    %v610 = vmul.f32 %v602, %v606
    %v611 = vsel %vm401, %v607, 0.0
    %612 = vadd.xlane.f32.xlu0 %v611
    %v613 = vpop.xlane.xlu0 %612
    %v614 = vsel %vm401, %v608, 0.0
    %615 = vadd.xlane.f32.xlu0 %v614
    %v616 = vpop.xlane.xlu0 %615
    %v617 = vsel %vm401, %v609, 0.0
    %618 = vadd.xlane.f32.xlu0 %v617
    %v619 = vpop.xlane.xlu0 %618
    %v620 = vsel %vm401, %v610, 0.0
    %621 = vadd.xlane.f32.xlu0 %v620
    %v622 = vpop.xlane.xlu0 %621
    %624 = vrot.lane.b32.xlu0 %v83, 112
    %v625 = vpop.permute.xlu0 %624
    %s626 = vtos %v625
    %v627 = vstv %s626
    %v629 = vadd.f32 %v613, %v627
    %v630 = vadd.f32 %v616, %v627
    %v631 = vadd.f32 %v619, %v627
    %v632 = vadd.f32 %v622, %v627
    %v637 = vlaneseq
    %v638 = vand.u32 %v637, 127
    %v639 = vlaneseq
    %v640 = vshrl.u32 %v639, 7
    %v641 = vsub.s32 %v638, %v640
    %v642 = vrot.slane %v629, %v641
    %v643 = vadd.s32 %v638, 4294967288
    %v644 = vlaneseq
    %v645 = vshrl.u32 %v644, 7
    %v646 = vsub.s32 %v643, %v645
    %v647 = vrot.slane %v630, %v646
    %vm648 = vcmask 130112
    %v649 = vsel %vm648, %v647, %v642
    %v650 = vlaneseq
    %v651 = vshrl.u32 %v650, 7
    %v652 = vsub.s32 %v638, %v651
    %v653 = vrot.slane %v631, %v652
    %v654 = vlaneseq
    %v655 = vshrl.u32 %v654, 7
    %v656 = vsub.s32 %v643, %v655
    %v657 = vrot.slane %v632, %v656
    %v658 = vsel %vm648, %v657, %v653
    %vm659 = vcmask 1041409
    %v660 = vsel %vm659, %v658, %v649
    %vm662 = vcmask 123904
    %v663 = vsel %vm662, %v660, -inf
    %664 = vmax.xlane.f32.xlu0 %v663
    %v665 = vpop.xlane.xlu0 %664
    %v667 = vlaneseq
    %v668 = vshrl.u32 %v667, 7
    %v669 = vsub.s32 0, %v668
    %v670 = vrot.slane %v665, %v669
    %v671 = vlaneseq
    %v672 = vshrl.u32 %v671, 7
    %v673 = vsub.s32 1, %v672
    %v674 = vrot.slane %v665, %v673
    %v677 = vsub.f32 %v629, %v670
    %v678 = vsub.f32 %v630, %v670
    %v679 = vsub.f32 %v631, %v674
    %v680 = vsub.f32 %v632, %v674
    %v681 = vmul.f32 %v677, 1.442695
    %v682 = vpow.pop %v681
    %v683 = vmul.f32 %v678, 1.442695
    %v684 = vpow.pop %v683
    %v685 = vmul.f32 %v679, 1.442695
    %v686 = vpow.pop %v685
    %v687 = vmul.f32 %v680, 1.442695
    %v688 = vpow.pop %v687
    %693 = vset.pattern.permute.xlu0 0
    %694 = vperm.xlu0 %693, %v682
    %v695 = vpop.permute.xlu0 %694
    %696 = vset.pattern.permute.xlu0 0
    %697 = vperm.xlu0 %696, %v684
    %v698 = vpop.permute.xlu0 %697
    %699 = vset.pattern.permute.xlu0 0
    %700 = vperm.xlu0 %699, %v686
    %v701 = vpop.permute.xlu0 %700
    %702 = vset.pattern.permute.xlu0 0
    %703 = vperm.xlu0 %702, %v688
    %v704 = vpop.permute.xlu0 %703
    %v705 = vlaneseq
    %v706 = vshrl.u32 %v705, 7
    %v707 = vsub.s32 %v638, %v706
    %v708 = vrot.slane %v695, %v707
    %v709 = vlaneseq
    %v710 = vshrl.u32 %v709, 7
    %v711 = vsub.s32 %v643, %v710
    %v712 = vrot.slane %v698, %v711
    %v713 = vsel %vm648, %v712, %v708
    %v714 = vlaneseq
    %v715 = vshrl.u32 %v714, 7
    %v716 = vsub.s32 %v638, %v715
    %v717 = vrot.slane %v701, %v716
    %v718 = vlaneseq
    %v719 = vshrl.u32 %v718, 7
    %v720 = vsub.s32 %v643, %v719
    %v721 = vrot.slane %v704, %v720
    %v722 = vsel %vm648, %v721, %v717
    %v723 = vsel %vm659, %v722, %v713
    %v725 = vsel %vm662, %v723, 0.0
    %726 = vadd.xlane.f32.xlu0 %v725
    %v727 = vpop.xlane.xlu0 %726
    %v728 = vrcp.pop %v727
    %v730 = vlaneseq
    %v731 = vshrl.u32 %v730, 7
    %v732 = vsub.s32 0, %v731
    %v733 = vrot.slane %v728, %v732
    %v734 = vlaneseq
    %v735 = vshrl.u32 %v734, 7
    %v736 = vsub.s32 1, %v735
    %v737 = vrot.slane %v728, %v736
    %v740 = vmul.f32 %v682, %v733
    %v741 = vmul.f32 %v684, %v733
    %v742 = vmul.f32 %v686, %v737
    %v743 = vmul.f32 %v688, %v737
    %746 = vset.pattern.permute.xlu0 0
    %747 = vperm.xlu0 %746, %v740
    %v748 = vpop.permute.xlu0 %747
    %749 = vset.pattern.permute.xlu0 0
    %750 = vperm.xlu0 %749, %v741
    %v751 = vpop.permute.xlu0 %750
    %v752 = vlaneseq
    %v753 = vshrl.u32 %v752, 7
    %v754 = vsub.s32 %v638, %v753
    %v755 = vrot.slane %v748, %v754
    %v756 = vlaneseq
    %v757 = vshrl.u32 %v756, 7
    %v758 = vsub.s32 %v643, %v757
    %v759 = vrot.slane %v751, %v758
    %v760 = vsel %vm648, %v759, %v755
    %v761 = vsel %vm401, %v760, 0
    %763 = vmatprep.subr.mxu0 0.0
    %764 = vmatpush1.msra.mxu0 0.0
    %765 = vmatprep.subr.mxu0 0.0
    %766 = vmatpush1.msra.mxu0 0.0
    %767 = vmatprep.subr.mxu0 0.0
    %768 = vmatpush1.msra.mxu0 0.0
    %769 = vmatprep.subr.mxu0 0.0
    %770 = vmatpush1.msra.mxu0 0.0
    %771 = vmatprep.subr.mxu0 0.0
    %772 = vmatpush1.msra.mxu0 0.0
    %773 = vmatprep.subr.mxu0 0.0
    %774 = vmatpush1.msra.mxu0 0.0
    %775 = vmatprep.subr.mxu0 0.0
    %776 = vmatpush1.msra.mxu0 0.0
    %777 = vmatprep.subr.mxu0 0.0
    %778 = vmatpush1.msra.mxu0 0.0
    %779 = vmatprep.subr.mxu0 0.0
    %780 = vmatpush1.msra.mxu0 0.0
    %781 = vmatprep.subr.mxu0 0.0
    %782 = vmatpush1.msra.mxu0 0.0
    %783 = vmatprep.subr.mxu0 0.0
    %784 = vmatpush1.msra.mxu0 0.0
    %785 = vmatprep.subr.mxu0 0.0
    %786 = vmatpush1.msra.mxu0 0.0
    %787 = vmatprep.subr.mxu0 0.0
    %788 = vmatpush1.msra.mxu0 0.0
    %789 = vmatprep.subr.mxu0 0.0
    %790 = vmatpush1.msra.mxu0 0.0
    %791 = vmatprep.subr.mxu0 0.0
    %792 = vmatpush1.msra.mxu0 %v180
    %793 = vmatprep.subr.mxu0 0.0
    %794 = vmatpush1.msra.mxu0 %v175
    %795 = vmatprep.subr.mxu0 0.0
    %796 = vmatpush2.msra.mxu0 0.0
    %797 = vmatprep.subr.mxu0 0.0
    %798 = vmatpush2.msra.mxu0 0.0
    %799 = vmatprep.subr.mxu0 0.0
    %800 = vmatpush2.msra.mxu0 0.0
    %801 = vmatprep.subr.mxu0 0.0
    %802 = vmatpush2.msra.mxu0 0.0
    %803 = vmatprep.subr.mxu0 0.0
    %804 = vmatpush2.msra.mxu0 0.0
    %805 = vmatprep.subr.mxu0 0.0
    %806 = vmatpush2.msra.mxu0 0.0
    %807 = vmatprep.subr.mxu0 0.0
    %808 = vmatpush2.msra.mxu0 0.0
    %809 = vmatprep.subr.mxu0 0.0
    %810 = vmatpush2.msra.mxu0 0.0
    %811 = vmatprep.subr.mxu0 0.0
    %812 = vmatpush2.msra.mxu0 0.0
    %813 = vmatprep.subr.mxu0 0.0
    %814 = vmatpush2.msra.mxu0 0.0
    %815 = vmatprep.subr.mxu0 0.0
    %816 = vmatpush2.msra.mxu0 0.0
    %817 = vmatprep.subr.mxu0 0.0
    %818 = vmatpush2.msra.mxu0 0.0
    %819 = vmatprep.subr.mxu0 0.0
    %820 = vmatpush2.msra.mxu0 0.0
    %821 = vmatprep.subr.mxu0 0.0
    %822 = vmatpush2.msra.mxu0 0.0
    %823 = vmatprep.subr.mxu0 0.0
    %824 = vmatpush2.msra.mxu0 0.0
    %825 = vmatprep.subr.mxu0 0.0
    %826 = vmatpush2.msra.mxu0 0.0
    %827 = vmatprep.mubr.f32.mxu0 0.0
    %828 = vmatmul.mubr.f32.gmra.mxu0 %v761
    %v829 = vpop.f32.mrf.mxu0
    %v830 = vadd.f32 0.0, %v829
    %v831 = vpop.f32.mrf.mxu0
    %832 = vdwg.mxu0
    %835 = vset.pattern.permute.xlu0 0
    %836 = vperm.xlu0 %835, %v742
    %v837 = vpop.permute.xlu0 %836
    %838 = vset.pattern.permute.xlu0 0
    %839 = vperm.xlu0 %838, %v743
    %v840 = vpop.permute.xlu0 %839
    %v841 = vlaneseq
    %v842 = vshrl.u32 %v841, 7
    %v843 = vsub.s32 %v638, %v842
    %v844 = vrot.slane %v837, %v843
    %v845 = vlaneseq
    %v846 = vshrl.u32 %v845, 7
    %v847 = vsub.s32 %v643, %v846
    %v848 = vrot.slane %v840, %v847
    %v849 = vsel %vm648, %v848, %v844
    %v850 = vsel %vm401, %v849, 0
    %852 = vmatprep.subr.mxu0 0.0
    %853 = vmatpush1.msra.mxu0 0.0
    %854 = vmatprep.subr.mxu0 0.0
    %855 = vmatpush1.msra.mxu0 0.0
    %856 = vmatprep.subr.mxu0 0.0
    %857 = vmatpush1.msra.mxu0 0.0
    %858 = vmatprep.subr.mxu0 0.0
    %859 = vmatpush1.msra.mxu0 0.0
    %860 = vmatprep.subr.mxu0 0.0
    %861 = vmatpush1.msra.mxu0 0.0
    %862 = vmatprep.subr.mxu0 0.0
    %863 = vmatpush1.msra.mxu0 0.0
    %864 = vmatprep.subr.mxu0 0.0
    %865 = vmatpush1.msra.mxu0 0.0
    %866 = vmatprep.subr.mxu0 0.0
    %867 = vmatpush1.msra.mxu0 0.0
    %868 = vmatprep.subr.mxu0 0.0
    %869 = vmatpush1.msra.mxu0 0.0
    %870 = vmatprep.subr.mxu0 0.0
    %871 = vmatpush1.msra.mxu0 0.0
    %872 = vmatprep.subr.mxu0 0.0
    %873 = vmatpush1.msra.mxu0 0.0
    %874 = vmatprep.subr.mxu0 0.0
    %875 = vmatpush1.msra.mxu0 0.0
    %876 = vmatprep.subr.mxu0 0.0
    %877 = vmatpush1.msra.mxu0 0.0
    %878 = vmatprep.subr.mxu0 0.0
    %879 = vmatpush1.msra.mxu0 0.0
    %880 = vmatprep.subr.mxu0 0.0
    %881 = vmatpush1.msra.mxu0 %v190
    %882 = vmatprep.subr.mxu0 0.0
    %883 = vmatpush1.msra.mxu0 %v185
    %884 = vmatprep.subr.mxu0 0.0
    %885 = vmatpush2.msra.mxu0 0.0
    %886 = vmatprep.subr.mxu0 0.0
    %887 = vmatpush2.msra.mxu0 0.0
    %888 = vmatprep.subr.mxu0 0.0
    %889 = vmatpush2.msra.mxu0 0.0
    %890 = vmatprep.subr.mxu0 0.0
    %891 = vmatpush2.msra.mxu0 0.0
    %892 = vmatprep.subr.mxu0 0.0
    %893 = vmatpush2.msra.mxu0 0.0
    %894 = vmatprep.subr.mxu0 0.0
    %895 = vmatpush2.msra.mxu0 0.0
    %896 = vmatprep.subr.mxu0 0.0
    %897 = vmatpush2.msra.mxu0 0.0
    %898 = vmatprep.subr.mxu0 0.0
    %899 = vmatpush2.msra.mxu0 0.0
    %900 = vmatprep.subr.mxu0 0.0
    %901 = vmatpush2.msra.mxu0 0.0
    %902 = vmatprep.subr.mxu0 0.0
    %903 = vmatpush2.msra.mxu0 0.0
    %904 = vmatprep.subr.mxu0 0.0
    %905 = vmatpush2.msra.mxu0 0.0
    %906 = vmatprep.subr.mxu0 0.0
    %907 = vmatpush2.msra.mxu0 0.0
    %908 = vmatprep.subr.mxu0 0.0
    %909 = vmatpush2.msra.mxu0 0.0
    %910 = vmatprep.subr.mxu0 0.0
    %911 = vmatpush2.msra.mxu0 0.0
    %912 = vmatprep.subr.mxu0 0.0
    %913 = vmatpush2.msra.mxu0 0.0
    %914 = vmatprep.subr.mxu0 0.0
    %915 = vmatpush2.msra.mxu0 0.0
    %916 = vmatprep.mubr.f32.mxu0 0.0
    %917 = vmatmul.mubr.f32.gmra.mxu0 %v850
    %v918 = vpop.f32.mrf.mxu0
    %v919 = vadd.f32 0.0, %v918
    %v920 = vpop.f32.mrf.mxu0
    %921 = vdwg.mxu0
    %v923 = vrot.slane %v919, 7
    %v925 = vsel %vm316, %v830, %v923
    %v926 = vxor.u32 %v559, 2147483648
    %v927 = vmul.f32 %v926, 1.442695
    %v928 = vpow.pop %v927
    %v929 = vadd.f32 %v928, 1.0
    %v930 = vrcp.pop %v929
    %v931 = vmul.f32 1.0, %v930
    %933 = vrot.lane.b32.xlu0 %v925, 16
    %v934 = vpop.permute.xlu0 %933
    %v936 = vmul.f32 %v931, %v934
    %938 = vrot.lane.b32.xlu0 %v936, 112
    %v939 = vpop.permute.xlu0 %938
    %v940 = vsel %vm197, %v939, 0
    %942 = vmatprep.subr.mxu0 0.0
    %943 = vmatpush1.msra.mxu0 0.0
    %944 = vmatprep.subr.mxu0 0.0
    %945 = vmatpush1.msra.mxu0 0.0
    %946 = vmatprep.subr.mxu0 0.0
    %947 = vmatpush1.msra.mxu0 0.0
    %948 = vmatprep.subr.mxu0 0.0
    %949 = vmatpush1.msra.mxu0 0.0
    %950 = vmatprep.subr.mxu0 0.0
    %951 = vmatpush1.msra.mxu0 0.0
    %952 = vmatprep.subr.mxu0 0.0
    %953 = vmatpush1.msra.mxu0 0.0
    %954 = vmatprep.subr.mxu0 0.0
    %955 = vmatpush1.msra.mxu0 0.0
    %956 = vmatprep.subr.mxu0 0.0
    %957 = vmatpush1.msra.mxu0 0.0
    %958 = vmatprep.subr.mxu0 0.0
    %959 = vmatpush1.msra.mxu0 0.0
    %960 = vmatprep.subr.mxu0 0.0
    %961 = vmatpush1.msra.mxu0 0.0
    %962 = vmatprep.subr.mxu0 0.0
    %963 = vmatpush1.msra.mxu0 0.0
    %964 = vmatprep.subr.mxu0 0.0
    %965 = vmatpush1.msra.mxu0 0.0
    %966 = vmatprep.subr.mxu0 0.0
    %967 = vmatpush1.msra.mxu0 %v71
    %968 = vmatprep.subr.mxu0 0.0
    %969 = vmatpush1.msra.mxu0 %v70
    %970 = vmatprep.subr.mxu0 0.0
    %971 = vmatpush1.msra.mxu0 %v69
    %972 = vmatprep.subr.mxu0 0.0
    %973 = vmatpush1.msra.mxu0 %v68
    %974 = vmatprep.subr.mxu0 0.0
    %975 = vmatpush2.msra.mxu0 0.0
    %976 = vmatprep.subr.mxu0 0.0
    %977 = vmatpush2.msra.mxu0 0.0
    %978 = vmatprep.subr.mxu0 0.0
    %979 = vmatpush2.msra.mxu0 0.0
    %980 = vmatprep.subr.mxu0 0.0
    %981 = vmatpush2.msra.mxu0 0.0
    %982 = vmatprep.subr.mxu0 0.0
    %983 = vmatpush2.msra.mxu0 0.0
    %984 = vmatprep.subr.mxu0 0.0
    %985 = vmatpush2.msra.mxu0 0.0
    %986 = vmatprep.subr.mxu0 0.0
    %987 = vmatpush2.msra.mxu0 0.0
    %988 = vmatprep.subr.mxu0 0.0
    %989 = vmatpush2.msra.mxu0 0.0
    %990 = vmatprep.subr.mxu0 0.0
    %991 = vmatpush2.msra.mxu0 0.0
    %992 = vmatprep.subr.mxu0 0.0
    %993 = vmatpush2.msra.mxu0 0.0
    %994 = vmatprep.subr.mxu0 0.0
    %995 = vmatpush2.msra.mxu0 0.0
    %996 = vmatprep.subr.mxu0 0.0
    %997 = vmatpush2.msra.mxu0 0.0
    %998 = vmatprep.subr.mxu0 0.0
    %999 = vmatpush2.msra.mxu0 0.0
    %1000 = vmatprep.subr.mxu0 0.0
    %1001 = vmatpush2.msra.mxu0 0.0
    %1002 = vmatprep.subr.mxu0 0.0
    %1003 = vmatpush2.msra.mxu0 0.0
    %1004 = vmatprep.subr.mxu0 0.0
    %1005 = vmatpush2.msra.mxu0 0.0
    %1006 = vmatprep.mubr.f32.mxu0 0.0
    %1007 = vmatmul.mubr.f32.gmra.mxu0 %v940
    %v1008 = vpop.f32.mrf.mxu0
    %v1009 = vadd.f32 0.0, %v1008
    %v1010 = vpop.f32.mrf.mxu0
    %1011 = vdwg.mxu0
    %v1012 = vadd.f32 %v475, %v1009
    %1013 = vmatprep.subr.mxu0 0.0
    %1014 = vmatpush1.msra.mxu0 0.0
    %1015 = vmatprep.subr.mxu0 0.0
    %1016 = vmatpush1.msra.mxu0 0.0
    %1017 = vmatprep.subr.mxu0 0.0
    %1018 = vmatpush1.msra.mxu0 0.0
    %1019 = vmatprep.subr.mxu0 0.0
    %1020 = vmatpush1.msra.mxu0 0.0
    %1021 = vmatprep.subr.mxu0 0.0
    %1022 = vmatpush1.msra.mxu0 0.0
    %1023 = vmatprep.subr.mxu0 0.0
    %1024 = vmatpush1.msra.mxu0 0.0
    %1025 = vmatprep.subr.mxu0 0.0
    %1026 = vmatpush1.msra.mxu0 0.0
    %1027 = vmatprep.subr.mxu0 0.0
    %1028 = vmatpush1.msra.mxu0 0.0
    %1029 = vmatprep.subr.mxu0 0.0
    %1030 = vmatpush1.msra.mxu0 0.0
    %1031 = vmatprep.subr.mxu0 0.0
    %1032 = vmatpush1.msra.mxu0 0.0
    %1033 = vmatprep.subr.mxu0 0.0
    %1034 = vmatpush1.msra.mxu0 0.0
    %1035 = vmatprep.subr.mxu0 0.0
    %1036 = vmatpush1.msra.mxu0 0.0
    %1037 = vmatprep.subr.mxu0 0.0
    %1038 = vmatpush1.msra.mxu0 %v75
    %1039 = vmatprep.subr.mxu0 0.0
    %1040 = vmatpush1.msra.mxu0 %v74
    %1041 = vmatprep.subr.mxu0 0.0
    %1042 = vmatpush1.msra.mxu0 %v73
    %1043 = vmatprep.subr.mxu0 0.0
    %1044 = vmatpush1.msra.mxu0 %v72
    %1045 = vmatprep.subr.mxu0 0.0
    %1046 = vmatpush2.msra.mxu0 0.0
    %1047 = vmatprep.subr.mxu0 0.0
    %1048 = vmatpush2.msra.mxu0 0.0
    %1049 = vmatprep.subr.mxu0 0.0
    %1050 = vmatpush2.msra.mxu0 0.0
    %1051 = vmatprep.subr.mxu0 0.0
    %1052 = vmatpush2.msra.mxu0 0.0
    %1053 = vmatprep.subr.mxu0 0.0
    %1054 = vmatpush2.msra.mxu0 0.0
    %1055 = vmatprep.subr.mxu0 0.0
    %1056 = vmatpush2.msra.mxu0 0.0
    %1057 = vmatprep.subr.mxu0 0.0
    %1058 = vmatpush2.msra.mxu0 0.0
    %1059 = vmatprep.subr.mxu0 0.0
    %1060 = vmatpush2.msra.mxu0 0.0
    %1061 = vmatprep.subr.mxu0 0.0
    %1062 = vmatpush2.msra.mxu0 0.0
    %1063 = vmatprep.subr.mxu0 0.0
    %1064 = vmatpush2.msra.mxu0 0.0
    %1065 = vmatprep.subr.mxu0 0.0
    %1066 = vmatpush2.msra.mxu0 0.0
    %1067 = vmatprep.subr.mxu0 0.0
    %1068 = vmatpush2.msra.mxu0 0.0
    %1069 = vmatprep.subr.mxu0 0.0
    %1070 = vmatpush2.msra.mxu0 0.0
    %1071 = vmatprep.subr.mxu0 0.0
    %1072 = vmatpush2.msra.mxu0 0.0
    %1073 = vmatprep.subr.mxu0 0.0
    %1074 = vmatpush2.msra.mxu0 0.0
    %1075 = vmatprep.subr.mxu0 0.0
    %1076 = vmatpush2.msra.mxu0 0.0
    %1077 = vmatprep.mubr.f32.mxu0 0.0
    %1078 = vmatmul.mubr.f32.gmra.mxu0 %v490
    %v1079 = vpop.f32.mrf.mxu0
    %v1080 = vadd.f32 0.0, %v1079
    %v1081 = vpop.f32.mrf.mxu0
    %1082 = vdwg.mxu0
    %v1083 = vadd.f32 %v1012, %v1080
    %v1084 = vxor.u32 %v1083, 2147483648
    %v1085 = vmul.f32 %v1084, 1.442695
    %v1086 = vpow.pop %v1085
    %v1087 = vadd.f32 %v1086, 1.0
    %v1088 = vrcp.pop %v1087
    %v1089 = vmul.f32 1.0, %v1088
    %v1090 = vtanh.pop %v1083
    %v1091 = vmul.f32 %v1089, %v392
    %1093 = vrot.lane.b32.xlu0 %v1090, 32
    %v1094 = vpop.permute.xlu0 %1093
    %v1096 = vmul.f32 %v1089, %v1094
    %1098 = vrot.lane.b32.xlu0 %v1096, 32
    %v1099 = vpop.permute.xlu0 %1098
    %v1101 = vadd.f32 %v1091, %v1099
    %v1102 = vtanh.pop %v1101
    %1104 = vrot.lane.b32.xlu0 %v1102, 32
    %v1105 = vpop.permute.xlu0 %1104
    %v1107 = vmul.f32 %v1089, %v1105
    %1109 = vset.pattern.permute.xlu0 0
    %1110 = vperm.xlu0 %1109, %v483
    %v1111 = vpop.permute.xlu0 %1110
    %v1113 = vmul.f32 %v1111, %v1107
    %v1114 = vsub.f32 1.0, %v483
    %1116 = vset.pattern.permute.xlu0 0
    %1117 = vperm.xlu0 %1116, %v1114
    %v1118 = vpop.permute.xlu0 %1117
    %v1120 = vmul.f32 %v1118, %v392
    %1122 = vrot.lane.b32.xlu0 %v1120, 64
    %v1123 = vpop.permute.xlu0 %1122
    %v1125 = vadd.f32 %v1113, %v1123
    %v1126 = vmul.f32 %v1111, %v1101
    %v1127 = vadd.f32 %v1126, %v1120
    %1129 = vrot.lane.b32.xlu0 %v1125, 64
    %v1130 = vpop.permute.xlu0 %1129
    %v1131 = vsel %vm197, %v1130, 0
    %1133 = vmatprep.subr.mxu0 0.0
    %1134 = vmatpush1.msra.mxu0 0.0
    %1135 = vmatprep.subr.mxu0 0.0
    %1136 = vmatpush1.msra.mxu0 0.0
    %1137 = vmatprep.subr.mxu0 0.0
    %1138 = vmatpush1.msra.mxu0 0.0
    %1139 = vmatprep.subr.mxu0 0.0
    %1140 = vmatpush1.msra.mxu0 0.0
    %1141 = vmatprep.subr.mxu0 0.0
    %1142 = vmatpush1.msra.mxu0 0.0
    %1143 = vmatprep.subr.mxu0 0.0
    %1144 = vmatpush1.msra.mxu0 0.0
    %1145 = vmatprep.subr.mxu0 0.0
    %1146 = vmatpush1.msra.mxu0 0.0
    %1147 = vmatprep.subr.mxu0 0.0
    %1148 = vmatpush1.msra.mxu0 0.0
    %1149 = vmatprep.subr.mxu0 0.0
    %1150 = vmatpush1.msra.mxu0 0.0
    %1151 = vmatprep.subr.mxu0 0.0
    %1152 = vmatpush1.msra.mxu0 0.0
    %1153 = vmatprep.subr.mxu0 0.0
    %1154 = vmatpush1.msra.mxu0 0.0
    %1155 = vmatprep.subr.mxu0 0.0
    %1156 = vmatpush1.msra.mxu0 0.0
    %1157 = vmatprep.subr.mxu0 0.0
    %1158 = vmatpush1.msra.mxu0 %v61
    %1159 = vmatprep.subr.mxu0 0.0
    %1160 = vmatpush1.msra.mxu0 %v60
    %1161 = vmatprep.subr.mxu0 0.0
    %1162 = vmatpush1.msra.mxu0 %v59
    %1163 = vmatprep.subr.mxu0 0.0
    %1164 = vmatpush1.msra.mxu0 %v58
    %1165 = vmatprep.subr.mxu0 0.0
    %1166 = vmatpush2.msra.mxu0 0.0
    %1167 = vmatprep.subr.mxu0 0.0
    %1168 = vmatpush2.msra.mxu0 0.0
    %1169 = vmatprep.subr.mxu0 0.0
    %1170 = vmatpush2.msra.mxu0 0.0
    %1171 = vmatprep.subr.mxu0 0.0
    %1172 = vmatpush2.msra.mxu0 0.0
    %1173 = vmatprep.subr.mxu0 0.0
    %1174 = vmatpush2.msra.mxu0 0.0
    %1175 = vmatprep.subr.mxu0 0.0
    %1176 = vmatpush2.msra.mxu0 0.0
    %1177 = vmatprep.subr.mxu0 0.0
    %1178 = vmatpush2.msra.mxu0 0.0
    %1179 = vmatprep.subr.mxu0 0.0
    %1180 = vmatpush2.msra.mxu0 0.0
    %1181 = vmatprep.subr.mxu0 0.0
    %1182 = vmatpush2.msra.mxu0 0.0
    %1183 = vmatprep.subr.mxu0 0.0
    %1184 = vmatpush2.msra.mxu0 0.0
    %1185 = vmatprep.subr.mxu0 0.0
    %1186 = vmatpush2.msra.mxu0 0.0
    %1187 = vmatprep.subr.mxu0 0.0
    %1188 = vmatpush2.msra.mxu0 0.0
    %1189 = vmatprep.subr.mxu0 0.0
    %1190 = vmatpush2.msra.mxu0 0.0
    %1191 = vmatprep.subr.mxu0 0.0
    %1192 = vmatpush2.msra.mxu0 0.0
    %1193 = vmatprep.subr.mxu0 0.0
    %1194 = vmatpush2.msra.mxu0 0.0
    %1195 = vmatprep.subr.mxu0 0.0
    %1196 = vmatpush2.msra.mxu0 0.0
    %1197 = vmatprep.mubr.f32.mxu0 0.0
    %1198 = vmatmul.mubr.f32.gmra.mxu0 %v1131
    %v1199 = vpop.f32.mrf.mxu0
    %v1200 = vadd.f32 %v488, %v1199
    %v1201 = vpop.f32.mrf.mxu0
    %1202 = vdwg.mxu0
    %v1205 = vunpack.c.l.s4 1966171168
    %v1206 = vunpack.c.0.s8 %v1205
    %v1207 = vlaneseq
    %v1208 = vshrl.u32 %v1207, 7
    %v1209 = vsub.s32 %v1206, %v1208
    %v1210 = vrot.slane %v1200, %v1209
    %v1211 = vcombine.high %v1210, %v1210
    %v1213 = vunpack.c.l.s4 1966171168
    %v1214 = vunpack.c.0.s8 %v1213
    %v1215 = vlaneseq
    %v1216 = vshrl.u32 %v1215, 7
    %v1217 = vsub.s32 %v1214, %v1216
    %v1218 = vrot.slane %v1210, %v1217
    %v1220 = vunpack.c.l.s4 1966171168
    %v1221 = vunpack.c.0.s8 %v1220
    %v1222 = vlaneseq
    %v1223 = vshrl.u32 %v1222, 7
    %v1224 = vsub.s32 %v1221, %v1223
    %v1225 = vrot.slane %v1211, %v1224
    %v1226 = vlaneseq
    %v1227 = vshrl.u32 %v1226, 7
    %v1228 = vsub.s32 0, %v1227
    %v1229 = vrot.slane %v1218, %v1228
    %v1230 = vlaneseq
    %v1231 = vshrl.u32 %v1230, 7
    %v1232 = vsub.s32 0, %v1231
    %v1233 = vrot.slane %v1225, %v1232
    %v1236 = vadd.f32 %v277, %v1229
    %v1237 = vadd.f32 %v282, %v1229
    %v1238 = vadd.f32 %v287, %v1233
    %v1239 = vadd.f32 %v292, %v1233
    %v1240 = vmax.f32 %v1236, 0.0
    %v1241 = vmax.f32 %v1237, 0.0
    %v1242 = vmax.f32 %v1238, 0.0
    %v1243 = vmax.f32 %v1239, 0.0
    %v1244 = vmul.f32 %v1240, %v606
    %v1245 = vmul.f32 %v1241, %v606
    %v1246 = vmul.f32 %v1242, %v606
    %v1247 = vmul.f32 %v1243, %v606
    %v1248 = vsel %vm401, %v1244, 0.0
    %1249 = vadd.xlane.f32.xlu0 %v1248
    %v1250 = vpop.xlane.xlu0 %1249
    %v1251 = vsel %vm401, %v1245, 0.0
    %1252 = vadd.xlane.f32.xlu0 %v1251
    %v1253 = vpop.xlane.xlu0 %1252
    %v1254 = vsel %vm401, %v1246, 0.0
    %1255 = vadd.xlane.f32.xlu0 %v1254
    %v1256 = vpop.xlane.xlu0 %1255
    %v1257 = vsel %vm401, %v1247, 0.0
    %1258 = vadd.xlane.f32.xlu0 %v1257
    %v1259 = vpop.xlane.xlu0 %1258
    %v1260 = vadd.f32 %v1250, %v627
    %v1261 = vadd.f32 %v1253, %v627
    %v1262 = vadd.f32 %v1256, %v627
    %v1263 = vadd.f32 %v1259, %v627
    %v1268 = vlaneseq
    %v1269 = vshrl.u32 %v1268, 7
    %v1270 = vsub.s32 %v638, %v1269
    %v1271 = vrot.slane %v1260, %v1270
    %v1272 = vlaneseq
    %v1273 = vshrl.u32 %v1272, 7
    %v1274 = vsub.s32 %v643, %v1273
    %v1275 = vrot.slane %v1261, %v1274
    %v1276 = vsel %vm648, %v1275, %v1271
    %v1277 = vlaneseq
    %v1278 = vshrl.u32 %v1277, 7
    %v1279 = vsub.s32 %v638, %v1278
    %v1280 = vrot.slane %v1262, %v1279
    %v1281 = vlaneseq
    %v1282 = vshrl.u32 %v1281, 7
    %v1283 = vsub.s32 %v643, %v1282
    %v1284 = vrot.slane %v1263, %v1283
    %v1285 = vsel %vm648, %v1284, %v1280
    %v1286 = vsel %vm659, %v1285, %v1276
    %v1288 = vsel %vm662, %v1286, -inf
    %1289 = vmax.xlane.f32.xlu0 %v1288
    %v1290 = vpop.xlane.xlu0 %1289
    %v1292 = vlaneseq
    %v1293 = vshrl.u32 %v1292, 7
    %v1294 = vsub.s32 0, %v1293
    %v1295 = vrot.slane %v1290, %v1294
    %v1296 = vlaneseq
    %v1297 = vshrl.u32 %v1296, 7
    %v1298 = vsub.s32 1, %v1297
    %v1299 = vrot.slane %v1290, %v1298
    %v1302 = vsub.f32 %v1260, %v1295
    %v1303 = vsub.f32 %v1261, %v1295
    %v1304 = vsub.f32 %v1262, %v1299
    %v1305 = vsub.f32 %v1263, %v1299
    %v1306 = vmul.f32 %v1302, 1.442695
    %v1307 = vpow.pop %v1306
    %v1308 = vmul.f32 %v1303, 1.442695
    %v1309 = vpow.pop %v1308
    %v1310 = vmul.f32 %v1304, 1.442695
    %v1311 = vpow.pop %v1310
    %v1312 = vmul.f32 %v1305, 1.442695
    %v1313 = vpow.pop %v1312
    %1318 = vset.pattern.permute.xlu0 0
    %1319 = vperm.xlu0 %1318, %v1307
    %v1320 = vpop.permute.xlu0 %1319
    %1321 = vset.pattern.permute.xlu0 0
    %1322 = vperm.xlu0 %1321, %v1309
    %v1323 = vpop.permute.xlu0 %1322
    %1324 = vset.pattern.permute.xlu0 0
    %1325 = vperm.xlu0 %1324, %v1311
    %v1326 = vpop.permute.xlu0 %1325
    %1327 = vset.pattern.permute.xlu0 0
    %1328 = vperm.xlu0 %1327, %v1313
    %v1329 = vpop.permute.xlu0 %1328
    %v1330 = vlaneseq
    %v1331 = vshrl.u32 %v1330, 7
    %v1332 = vsub.s32 %v638, %v1331
    %v1333 = vrot.slane %v1320, %v1332
    %v1334 = vlaneseq
    %v1335 = vshrl.u32 %v1334, 7
    %v1336 = vsub.s32 %v643, %v1335
    %v1337 = vrot.slane %v1323, %v1336
    %v1338 = vsel %vm648, %v1337, %v1333
    %v1339 = vlaneseq
    %v1340 = vshrl.u32 %v1339, 7
    %v1341 = vsub.s32 %v638, %v1340
    %v1342 = vrot.slane %v1326, %v1341
    %v1343 = vlaneseq
    %v1344 = vshrl.u32 %v1343, 7
    %v1345 = vsub.s32 %v643, %v1344
    %v1346 = vrot.slane %v1329, %v1345
    %v1347 = vsel %vm648, %v1346, %v1342
    %v1348 = vsel %vm659, %v1347, %v1338
    %v1350 = vsel %vm662, %v1348, 0.0
    %1351 = vadd.xlane.f32.xlu0 %v1350
    %v1352 = vpop.xlane.xlu0 %1351
    %v1353 = vrcp.pop %v1352
    %v1355 = vlaneseq
    %v1356 = vshrl.u32 %v1355, 7
    %v1357 = vsub.s32 0, %v1356
    %v1358 = vrot.slane %v1353, %v1357
    %v1359 = vlaneseq
    %v1360 = vshrl.u32 %v1359, 7
    %v1361 = vsub.s32 1, %v1360
    %v1362 = vrot.slane %v1353, %v1361
    %v1365 = vmul.f32 %v1307, %v1358
    %v1366 = vmul.f32 %v1309, %v1358
    %v1367 = vmul.f32 %v1311, %v1362
    %v1368 = vmul.f32 %v1313, %v1362
    %1371 = vset.pattern.permute.xlu0 0
    %1372 = vperm.xlu0 %1371, %v1365
    %v1373 = vpop.permute.xlu0 %1372
    %1374 = vset.pattern.permute.xlu0 0
    %1375 = vperm.xlu0 %1374, %v1366
    %v1376 = vpop.permute.xlu0 %1375
    %v1377 = vlaneseq
    %v1378 = vshrl.u32 %v1377, 7
    %v1379 = vsub.s32 %v638, %v1378
    %v1380 = vrot.slane %v1373, %v1379
    %v1381 = vlaneseq
    %v1382 = vshrl.u32 %v1381, 7
    %v1383 = vsub.s32 %v643, %v1382
    %v1384 = vrot.slane %v1376, %v1383
    %v1385 = vsel %vm648, %v1384, %v1380
    %v1386 = vsel %vm401, %v1385, 0
    %1388 = vmatprep.subr.mxu0 0.0
    %1389 = vmatpush1.msra.mxu0 0.0
    %1390 = vmatprep.subr.mxu0 0.0
    %1391 = vmatpush1.msra.mxu0 0.0
    %1392 = vmatprep.subr.mxu0 0.0
    %1393 = vmatpush1.msra.mxu0 0.0
    %1394 = vmatprep.subr.mxu0 0.0
    %1395 = vmatpush1.msra.mxu0 0.0
    %1396 = vmatprep.subr.mxu0 0.0
    %1397 = vmatpush1.msra.mxu0 0.0
    %1398 = vmatprep.subr.mxu0 0.0
    %1399 = vmatpush1.msra.mxu0 0.0
    %1400 = vmatprep.subr.mxu0 0.0
    %1401 = vmatpush1.msra.mxu0 0.0
    %1402 = vmatprep.subr.mxu0 0.0
    %1403 = vmatpush1.msra.mxu0 0.0
    %1404 = vmatprep.subr.mxu0 0.0
    %1405 = vmatpush1.msra.mxu0 0.0
    %1406 = vmatprep.subr.mxu0 0.0
    %1407 = vmatpush1.msra.mxu0 0.0
    %1408 = vmatprep.subr.mxu0 0.0
    %1409 = vmatpush1.msra.mxu0 0.0
    %1410 = vmatprep.subr.mxu0 0.0
    %1411 = vmatpush1.msra.mxu0 0.0
    %1412 = vmatprep.subr.mxu0 0.0
    %1413 = vmatpush1.msra.mxu0 0.0
    %1414 = vmatprep.subr.mxu0 0.0
    %1415 = vmatpush1.msra.mxu0 0.0
    %1416 = vmatprep.subr.mxu0 0.0
    %1417 = vmatpush1.msra.mxu0 %v180
    %1418 = vmatprep.subr.mxu0 0.0
    %1419 = vmatpush1.msra.mxu0 %v175
    %1420 = vmatprep.subr.mxu0 0.0
    %1421 = vmatpush2.msra.mxu0 0.0
    %1422 = vmatprep.subr.mxu0 0.0
    %1423 = vmatpush2.msra.mxu0 0.0
    %1424 = vmatprep.subr.mxu0 0.0
    %1425 = vmatpush2.msra.mxu0 0.0
    %1426 = vmatprep.subr.mxu0 0.0
    %1427 = vmatpush2.msra.mxu0 0.0
    %1428 = vmatprep.subr.mxu0 0.0
    %1429 = vmatpush2.msra.mxu0 0.0
    %1430 = vmatprep.subr.mxu0 0.0
    %1431 = vmatpush2.msra.mxu0 0.0
    %1432 = vmatprep.subr.mxu0 0.0
    %1433 = vmatpush2.msra.mxu0 0.0
    %1434 = vmatprep.subr.mxu0 0.0
    %1435 = vmatpush2.msra.mxu0 0.0
    %1436 = vmatprep.subr.mxu0 0.0
    %1437 = vmatpush2.msra.mxu0 0.0
    %1438 = vmatprep.subr.mxu0 0.0
    %1439 = vmatpush2.msra.mxu0 0.0
    %1440 = vmatprep.subr.mxu0 0.0
    %1441 = vmatpush2.msra.mxu0 0.0
    %1442 = vmatprep.subr.mxu0 0.0
    %1443 = vmatpush2.msra.mxu0 0.0
    %1444 = vmatprep.subr.mxu0 0.0
    %1445 = vmatpush2.msra.mxu0 0.0
    %1446 = vmatprep.subr.mxu0 0.0
    %1447 = vmatpush2.msra.mxu0 0.0
    %1448 = vmatprep.subr.mxu0 0.0
    %1449 = vmatpush2.msra.mxu0 0.0
    %1450 = vmatprep.subr.mxu0 0.0
    %1451 = vmatpush2.msra.mxu0 0.0
    %1452 = vmatprep.mubr.f32.mxu0 0.0
    %1453 = vmatmul.mubr.f32.gmra.mxu0 %v1386
    %v1454 = vpop.f32.mrf.mxu0
    %v1455 = vadd.f32 0.0, %v1454
    %v1456 = vpop.f32.mrf.mxu0
    %1457 = vdwg.mxu0
    %1460 = vset.pattern.permute.xlu0 0
    %1461 = vperm.xlu0 %1460, %v1367
    %v1462 = vpop.permute.xlu0 %1461
    %1463 = vset.pattern.permute.xlu0 0
    %1464 = vperm.xlu0 %1463, %v1368
    %v1465 = vpop.permute.xlu0 %1464
    %v1466 = vlaneseq
    %v1467 = vshrl.u32 %v1466, 7
    %v1468 = vsub.s32 %v638, %v1467
    %v1469 = vrot.slane %v1462, %v1468
    %v1470 = vlaneseq
    %v1471 = vshrl.u32 %v1470, 7
    %v1472 = vsub.s32 %v643, %v1471
    %v1473 = vrot.slane %v1465, %v1472
    %v1474 = vsel %vm648, %v1473, %v1469
    %v1475 = vsel %vm401, %v1474, 0
    %1477 = vmatprep.subr.mxu0 0.0
    %1478 = vmatpush1.msra.mxu0 0.0
    %1479 = vmatprep.subr.mxu0 0.0
    %1480 = vmatpush1.msra.mxu0 0.0
    %1481 = vmatprep.subr.mxu0 0.0
    %1482 = vmatpush1.msra.mxu0 0.0
    %1483 = vmatprep.subr.mxu0 0.0
    %1484 = vmatpush1.msra.mxu0 0.0
    %1485 = vmatprep.subr.mxu0 0.0
    %1486 = vmatpush1.msra.mxu0 0.0
    %1487 = vmatprep.subr.mxu0 0.0
    %1488 = vmatpush1.msra.mxu0 0.0
    %1489 = vmatprep.subr.mxu0 0.0
    %1490 = vmatpush1.msra.mxu0 0.0
    %1491 = vmatprep.subr.mxu0 0.0
    %1492 = vmatpush1.msra.mxu0 0.0
    %1493 = vmatprep.subr.mxu0 0.0
    %1494 = vmatpush1.msra.mxu0 0.0
    %1495 = vmatprep.subr.mxu0 0.0
    %1496 = vmatpush1.msra.mxu0 0.0
    %1497 = vmatprep.subr.mxu0 0.0
    %1498 = vmatpush1.msra.mxu0 0.0
    %1499 = vmatprep.subr.mxu0 0.0
    %1500 = vmatpush1.msra.mxu0 0.0
    %1501 = vmatprep.subr.mxu0 0.0
    %1502 = vmatpush1.msra.mxu0 0.0
    %1503 = vmatprep.subr.mxu0 0.0
    %1504 = vmatpush1.msra.mxu0 0.0
    %1505 = vmatprep.subr.mxu0 0.0
    %1506 = vmatpush1.msra.mxu0 %v190
    %1507 = vmatprep.subr.mxu0 0.0
    %1508 = vmatpush1.msra.mxu0 %v185
    %1509 = vmatprep.subr.mxu0 0.0
    %1510 = vmatpush2.msra.mxu0 0.0
    %1511 = vmatprep.subr.mxu0 0.0
    %1512 = vmatpush2.msra.mxu0 0.0
    %1513 = vmatprep.subr.mxu0 0.0
    %1514 = vmatpush2.msra.mxu0 0.0
    %1515 = vmatprep.subr.mxu0 0.0
    %1516 = vmatpush2.msra.mxu0 0.0
    %1517 = vmatprep.subr.mxu0 0.0
    %1518 = vmatpush2.msra.mxu0 0.0
    %1519 = vmatprep.subr.mxu0 0.0
    %1520 = vmatpush2.msra.mxu0 0.0
    %1521 = vmatprep.subr.mxu0 0.0
    %1522 = vmatpush2.msra.mxu0 0.0
    %1523 = vmatprep.subr.mxu0 0.0
    %1524 = vmatpush2.msra.mxu0 0.0
    %1525 = vmatprep.subr.mxu0 0.0
    %1526 = vmatpush2.msra.mxu0 0.0
    %1527 = vmatprep.subr.mxu0 0.0
    %1528 = vmatpush2.msra.mxu0 0.0
    %1529 = vmatprep.subr.mxu0 0.0
    %1530 = vmatpush2.msra.mxu0 0.0
    %1531 = vmatprep.subr.mxu0 0.0
    %1532 = vmatpush2.msra.mxu0 0.0
    %1533 = vmatprep.subr.mxu0 0.0
    %1534 = vmatpush2.msra.mxu0 0.0
    %1535 = vmatprep.subr.mxu0 0.0
    %1536 = vmatpush2.msra.mxu0 0.0
    %1537 = vmatprep.subr.mxu0 0.0
    %1538 = vmatpush2.msra.mxu0 0.0
    %1539 = vmatprep.subr.mxu0 0.0
    %1540 = vmatpush2.msra.mxu0 0.0
    %1541 = vmatprep.mubr.f32.mxu0 0.0
    %1542 = vmatmul.mubr.f32.gmra.mxu0 %v1475
    %v1543 = vpop.f32.mrf.mxu0
    %v1544 = vadd.f32 0.0, %v1543
    %v1545 = vpop.f32.mrf.mxu0
    %1546 = vdwg.mxu0
    %v1548 = vrot.slane %v1544, 7
    %v1550 = vsel %vm316, %v1455, %v1548
    %v1551 = vxor.u32 %v1200, 2147483648
    %v1552 = vmul.f32 %v1551, 1.442695
    %v1553 = vpow.pop %v1552
    %v1554 = vadd.f32 %v1553, 1.0
    %v1555 = vrcp.pop %v1554
    %v1556 = vmul.f32 1.0, %v1555
    %1558 = vrot.lane.b32.xlu0 %v1550, 16
    %v1559 = vpop.permute.xlu0 %1558
    %v1561 = vmul.f32 %v1556, %v1559
    %1563 = vrot.lane.b32.xlu0 %v1561, 112
    %v1564 = vpop.permute.xlu0 %1563
    %v1565 = vsel %vm197, %v1564, 0
    %1567 = vmatprep.subr.mxu0 0.0
    %1568 = vmatpush1.msra.mxu0 0.0
    %1569 = vmatprep.subr.mxu0 0.0
    %1570 = vmatpush1.msra.mxu0 0.0
    %1571 = vmatprep.subr.mxu0 0.0
    %1572 = vmatpush1.msra.mxu0 0.0
    %1573 = vmatprep.subr.mxu0 0.0
    %1574 = vmatpush1.msra.mxu0 0.0
    %1575 = vmatprep.subr.mxu0 0.0
    %1576 = vmatpush1.msra.mxu0 0.0
    %1577 = vmatprep.subr.mxu0 0.0
    %1578 = vmatpush1.msra.mxu0 0.0
    %1579 = vmatprep.subr.mxu0 0.0
    %1580 = vmatpush1.msra.mxu0 0.0
    %1581 = vmatprep.subr.mxu0 0.0
    %1582 = vmatpush1.msra.mxu0 0.0
    %1583 = vmatprep.subr.mxu0 0.0
    %1584 = vmatpush1.msra.mxu0 0.0
    %1585 = vmatprep.subr.mxu0 0.0
    %1586 = vmatpush1.msra.mxu0 0.0
    %1587 = vmatprep.subr.mxu0 0.0
    %1588 = vmatpush1.msra.mxu0 0.0
    %1589 = vmatprep.subr.mxu0 0.0
    %1590 = vmatpush1.msra.mxu0 0.0
    %1591 = vmatprep.subr.mxu0 0.0
    %1592 = vmatpush1.msra.mxu0 %v71
    %1593 = vmatprep.subr.mxu0 0.0
    %1594 = vmatpush1.msra.mxu0 %v70
    %1595 = vmatprep.subr.mxu0 0.0
    %1596 = vmatpush1.msra.mxu0 %v69
    %1597 = vmatprep.subr.mxu0 0.0
    %1598 = vmatpush1.msra.mxu0 %v68
    %1599 = vmatprep.subr.mxu0 0.0
    %1600 = vmatpush2.msra.mxu0 0.0
    %1601 = vmatprep.subr.mxu0 0.0
    %1602 = vmatpush2.msra.mxu0 0.0
    %1603 = vmatprep.subr.mxu0 0.0
    %1604 = vmatpush2.msra.mxu0 0.0
    %1605 = vmatprep.subr.mxu0 0.0
    %1606 = vmatpush2.msra.mxu0 0.0
    %1607 = vmatprep.subr.mxu0 0.0
    %1608 = vmatpush2.msra.mxu0 0.0
    %1609 = vmatprep.subr.mxu0 0.0
    %1610 = vmatpush2.msra.mxu0 0.0
    %1611 = vmatprep.subr.mxu0 0.0
    %1612 = vmatpush2.msra.mxu0 0.0
    %1613 = vmatprep.subr.mxu0 0.0
    %1614 = vmatpush2.msra.mxu0 0.0
    %1615 = vmatprep.subr.mxu0 0.0
    %1616 = vmatpush2.msra.mxu0 0.0
    %1617 = vmatprep.subr.mxu0 0.0
    %1618 = vmatpush2.msra.mxu0 0.0
    %1619 = vmatprep.subr.mxu0 0.0
    %1620 = vmatpush2.msra.mxu0 0.0
    %1621 = vmatprep.subr.mxu0 0.0
    %1622 = vmatpush2.msra.mxu0 0.0
    %1623 = vmatprep.subr.mxu0 0.0
    %1624 = vmatpush2.msra.mxu0 0.0
    %1625 = vmatprep.subr.mxu0 0.0
    %1626 = vmatpush2.msra.mxu0 0.0
    %1627 = vmatprep.subr.mxu0 0.0
    %1628 = vmatpush2.msra.mxu0 0.0
    %1629 = vmatprep.subr.mxu0 0.0
    %1630 = vmatpush2.msra.mxu0 0.0
    %1631 = vmatprep.mubr.f32.mxu0 0.0
    %1632 = vmatmul.mubr.f32.gmra.mxu0 %v1565
    %v1633 = vpop.f32.mrf.mxu0
    %v1634 = vadd.f32 0.0, %v1633
    %v1635 = vpop.f32.mrf.mxu0
    %1636 = vdwg.mxu0
    %v1638 = vrot.slane %v1634, 6
    %v1640 = vadd.f32 %v475, %v1638
    %1641 = vmatprep.subr.mxu0 0.0
    %1642 = vmatpush1.msra.mxu0 0.0
    %1643 = vmatprep.subr.mxu0 0.0
    %1644 = vmatpush1.msra.mxu0 0.0
    %1645 = vmatprep.subr.mxu0 0.0
    %1646 = vmatpush1.msra.mxu0 0.0
    %1647 = vmatprep.subr.mxu0 0.0
    %1648 = vmatpush1.msra.mxu0 0.0
    %1649 = vmatprep.subr.mxu0 0.0
    %1650 = vmatpush1.msra.mxu0 0.0
    %1651 = vmatprep.subr.mxu0 0.0
    %1652 = vmatpush1.msra.mxu0 0.0
    %1653 = vmatprep.subr.mxu0 0.0
    %1654 = vmatpush1.msra.mxu0 0.0
    %1655 = vmatprep.subr.mxu0 0.0
    %1656 = vmatpush1.msra.mxu0 0.0
    %1657 = vmatprep.subr.mxu0 0.0
    %1658 = vmatpush1.msra.mxu0 0.0
    %1659 = vmatprep.subr.mxu0 0.0
    %1660 = vmatpush1.msra.mxu0 0.0
    %1661 = vmatprep.subr.mxu0 0.0
    %1662 = vmatpush1.msra.mxu0 0.0
    %1663 = vmatprep.subr.mxu0 0.0
    %1664 = vmatpush1.msra.mxu0 0.0
    %1665 = vmatprep.subr.mxu0 0.0
    %1666 = vmatpush1.msra.mxu0 %v75
    %1667 = vmatprep.subr.mxu0 0.0
    %1668 = vmatpush1.msra.mxu0 %v74
    %1669 = vmatprep.subr.mxu0 0.0
    %1670 = vmatpush1.msra.mxu0 %v73
    %1671 = vmatprep.subr.mxu0 0.0
    %1672 = vmatpush1.msra.mxu0 %v72
    %1673 = vmatprep.subr.mxu0 0.0
    %1674 = vmatpush2.msra.mxu0 0.0
    %1675 = vmatprep.subr.mxu0 0.0
    %1676 = vmatpush2.msra.mxu0 0.0
    %1677 = vmatprep.subr.mxu0 0.0
    %1678 = vmatpush2.msra.mxu0 0.0
    %1679 = vmatprep.subr.mxu0 0.0
    %1680 = vmatpush2.msra.mxu0 0.0
    %1681 = vmatprep.subr.mxu0 0.0
    %1682 = vmatpush2.msra.mxu0 0.0
    %1683 = vmatprep.subr.mxu0 0.0
    %1684 = vmatpush2.msra.mxu0 0.0
    %1685 = vmatprep.subr.mxu0 0.0
    %1686 = vmatpush2.msra.mxu0 0.0
    %1687 = vmatprep.subr.mxu0 0.0
    %1688 = vmatpush2.msra.mxu0 0.0
    %1689 = vmatprep.subr.mxu0 0.0
    %1690 = vmatpush2.msra.mxu0 0.0
    %1691 = vmatprep.subr.mxu0 0.0
    %1692 = vmatpush2.msra.mxu0 0.0
    %1693 = vmatprep.subr.mxu0 0.0
    %1694 = vmatpush2.msra.mxu0 0.0
    %1695 = vmatprep.subr.mxu0 0.0
    %1696 = vmatpush2.msra.mxu0 0.0
    %1697 = vmatprep.subr.mxu0 0.0
    %1698 = vmatpush2.msra.mxu0 0.0
    %1699 = vmatprep.subr.mxu0 0.0
    %1700 = vmatpush2.msra.mxu0 0.0
    %1701 = vmatprep.subr.mxu0 0.0
    %1702 = vmatpush2.msra.mxu0 0.0
    %1703 = vmatprep.subr.mxu0 0.0
    %1704 = vmatpush2.msra.mxu0 0.0
    %1705 = vmatprep.mubr.f32.mxu0 0.0
    %1706 = vmatmul.mubr.f32.gmra.mxu0 %v1131
    %v1707 = vpop.f32.mrf.mxu0
    %v1708 = vadd.f32 0.0, %v1707
    %v1709 = vpop.f32.mrf.mxu0
    %1710 = vdwg.mxu0
    %v1712 = vrot.slane %v1708, 6
    %v1714 = vadd.f32 %v1640, %v1712
    %v1715 = vxor.u32 %v1714, 2147483648
    %v1716 = vmul.f32 %v1715, 1.442695
    %v1717 = vpow.pop %v1716
    %v1718 = vadd.f32 %v1717, 1.0
    %v1719 = vrcp.pop %v1718
    %v1720 = vmul.f32 1.0, %v1719
    %v1721 = vtanh.pop %v1714
    %v1723 = vrot.slane %v1127, 6
    %v1725 = vmul.f32 %v1720, %v1723
    %1727 = vrot.lane.b32.xlu0 %v1721, 32
    %v1728 = vpop.permute.xlu0 %1727
    %v1730 = vmul.f32 %v1720, %v1728
    %1732 = vrot.lane.b32.xlu0 %v1730, 32
    %v1733 = vpop.permute.xlu0 %1732
    %v1735 = vadd.f32 %v1725, %v1733
    %v1736 = vtanh.pop %v1735
    %1738 = vrot.lane.b32.xlu0 %v1736, 32
    %v1739 = vpop.permute.xlu0 %1738
    %v1741 = vmul.f32 %v1720, %v1739
    %v1742 = vmul.f32 %v1111, %v1741
    %v1743 = vrot.slane %v1125, 6
    %1744 = vrot.lane.b32.xlu0 %v1743, 64
    %v1745 = vpop.permute.xlu0 %1744
    %v1747 = vmul.f32 %v1118, %v1745
    %1749 = vrot.lane.b32.xlu0 %v1747, 64
    %v1750 = vpop.permute.xlu0 %1749
    %v1752 = vadd.f32 %v1742, %v1750
    %v1753 = vmul.f32 %v1111, %v1735
    %1754 = vrot.lane.b32.xlu0 %v1723, 96
    %v1755 = vpop.permute.xlu0 %1754
    %v1757 = vmul.f32 %v1118, %v1755
    %1759 = vrot.lane.b32.xlu0 %v1757, 32
    %v1760 = vpop.permute.xlu0 %1759
    %v1762 = vadd.f32 %v1753, %v1760
    %v1764 = vrot.slane %v1752, 2
    %1765 = vrot.lane.b32.xlu0 %v1764, 64
    %v1766 = vpop.permute.xlu0 %1765
    %v1767 = vsel %vm197, %v1766, 0
    %1769 = vmatprep.subr.mxu0 0.0
    %1770 = vmatpush1.msra.mxu0 0.0
    %1771 = vmatprep.subr.mxu0 0.0
    %1772 = vmatpush1.msra.mxu0 0.0
    %1773 = vmatprep.subr.mxu0 0.0
    %1774 = vmatpush1.msra.mxu0 0.0
    %1775 = vmatprep.subr.mxu0 0.0
    %1776 = vmatpush1.msra.mxu0 0.0
    %1777 = vmatprep.subr.mxu0 0.0
    %1778 = vmatpush1.msra.mxu0 0.0
    %1779 = vmatprep.subr.mxu0 0.0
    %1780 = vmatpush1.msra.mxu0 0.0
    %1781 = vmatprep.subr.mxu0 0.0
    %1782 = vmatpush1.msra.mxu0 0.0
    %1783 = vmatprep.subr.mxu0 0.0
    %1784 = vmatpush1.msra.mxu0 0.0
    %1785 = vmatprep.subr.mxu0 0.0
    %1786 = vmatpush1.msra.mxu0 0.0
    %1787 = vmatprep.subr.mxu0 0.0
    %1788 = vmatpush1.msra.mxu0 0.0
    %1789 = vmatprep.subr.mxu0 0.0
    %1790 = vmatpush1.msra.mxu0 0.0
    %1791 = vmatprep.subr.mxu0 0.0
    %1792 = vmatpush1.msra.mxu0 0.0
    %1793 = vmatprep.subr.mxu0 0.0
    %1794 = vmatpush1.msra.mxu0 %v61
    %1795 = vmatprep.subr.mxu0 0.0
    %1796 = vmatpush1.msra.mxu0 %v60
    %1797 = vmatprep.subr.mxu0 0.0
    %1798 = vmatpush1.msra.mxu0 %v59
    %1799 = vmatprep.subr.mxu0 0.0
    %1800 = vmatpush1.msra.mxu0 %v58
    %1801 = vmatprep.subr.mxu0 0.0
    %1802 = vmatpush2.msra.mxu0 0.0
    %1803 = vmatprep.subr.mxu0 0.0
    %1804 = vmatpush2.msra.mxu0 0.0
    %1805 = vmatprep.subr.mxu0 0.0
    %1806 = vmatpush2.msra.mxu0 0.0
    %1807 = vmatprep.subr.mxu0 0.0
    %1808 = vmatpush2.msra.mxu0 0.0
    %1809 = vmatprep.subr.mxu0 0.0
    %1810 = vmatpush2.msra.mxu0 0.0
    %1811 = vmatprep.subr.mxu0 0.0
    %1812 = vmatpush2.msra.mxu0 0.0
    %1813 = vmatprep.subr.mxu0 0.0
    %1814 = vmatpush2.msra.mxu0 0.0
    %1815 = vmatprep.subr.mxu0 0.0
    %1816 = vmatpush2.msra.mxu0 0.0
    %1817 = vmatprep.subr.mxu0 0.0
    %1818 = vmatpush2.msra.mxu0 0.0
    %1819 = vmatprep.subr.mxu0 0.0
    %1820 = vmatpush2.msra.mxu0 0.0
    %1821 = vmatprep.subr.mxu0 0.0
    %1822 = vmatpush2.msra.mxu0 0.0
    %1823 = vmatprep.subr.mxu0 0.0
    %1824 = vmatpush2.msra.mxu0 0.0
    %1825 = vmatprep.subr.mxu0 0.0
    %1826 = vmatpush2.msra.mxu0 0.0
    %1827 = vmatprep.subr.mxu0 0.0
    %1828 = vmatpush2.msra.mxu0 0.0
    %1829 = vmatprep.subr.mxu0 0.0
    %1830 = vmatpush2.msra.mxu0 0.0
    %1831 = vmatprep.subr.mxu0 0.0
    %1832 = vmatpush2.msra.mxu0 0.0
    %1833 = vmatprep.mubr.f32.mxu0 0.0
    %1834 = vmatmul.mubr.f32.gmra.mxu0 %v1767
    %v1835 = vpop.f32.mrf.mxu0
    %v1836 = vadd.f32 %v488, %v1835
    %v1837 = vpop.f32.mrf.mxu0
    %1838 = vdwg.mxu0
    %v1841 = vunpack.c.l.s4 1966171168
    %v1842 = vunpack.c.0.s8 %v1841
    %v1843 = vlaneseq
    %v1844 = vshrl.u32 %v1843, 7
    %v1845 = vsub.s32 %v1842, %v1844
    %v1846 = vrot.slane %v1836, %v1845
    %v1847 = vcombine.high %v1846, %v1846
    %v1849 = vunpack.c.l.s4 1966171168
    %v1850 = vunpack.c.0.s8 %v1849
    %v1851 = vlaneseq
    %v1852 = vshrl.u32 %v1851, 7
    %v1853 = vsub.s32 %v1850, %v1852
    %v1854 = vrot.slane %v1846, %v1853
    %v1856 = vunpack.c.l.s4 1966171168
    %v1857 = vunpack.c.0.s8 %v1856
    %v1858 = vlaneseq
    %v1859 = vshrl.u32 %v1858, 7
    %v1860 = vsub.s32 %v1857, %v1859
    %v1861 = vrot.slane %v1847, %v1860
    %v1862 = vlaneseq
    %v1863 = vshrl.u32 %v1862, 7
    %v1864 = vsub.s32 0, %v1863
    %v1865 = vrot.slane %v1854, %v1864
    %v1866 = vlaneseq
    %v1867 = vshrl.u32 %v1866, 7
    %v1868 = vsub.s32 0, %v1867
    %v1869 = vrot.slane %v1861, %v1868
    %v1872 = vadd.f32 %v277, %v1865
    %v1873 = vadd.f32 %v282, %v1865
    %v1874 = vadd.f32 %v287, %v1869
    %v1875 = vadd.f32 %v292, %v1869
    %v1876 = vmax.f32 %v1872, 0.0
    %v1877 = vmax.f32 %v1873, 0.0
    %v1878 = vmax.f32 %v1874, 0.0
    %v1879 = vmax.f32 %v1875, 0.0
    %v1880 = vmul.f32 %v1876, %v606
    %v1881 = vmul.f32 %v1877, %v606
    %v1882 = vmul.f32 %v1878, %v606
    %v1883 = vmul.f32 %v1879, %v606
    %v1884 = vsel %vm401, %v1880, 0.0
    %1885 = vadd.xlane.f32.xlu0 %v1884
    %v1886 = vpop.xlane.xlu0 %1885
    %v1887 = vsel %vm401, %v1881, 0.0
    %1888 = vadd.xlane.f32.xlu0 %v1887
    %v1889 = vpop.xlane.xlu0 %1888
    %v1890 = vsel %vm401, %v1882, 0.0
    %1891 = vadd.xlane.f32.xlu0 %v1890
    %v1892 = vpop.xlane.xlu0 %1891
    %v1893 = vsel %vm401, %v1883, 0.0
    %1894 = vadd.xlane.f32.xlu0 %v1893
    %v1895 = vpop.xlane.xlu0 %1894
    %v1896 = vadd.f32 %v1886, %v627
    %v1897 = vadd.f32 %v1889, %v627
    %v1898 = vadd.f32 %v1892, %v627
    %v1899 = vadd.f32 %v1895, %v627
    %v1904 = vlaneseq
    %v1905 = vshrl.u32 %v1904, 7
    %v1906 = vsub.s32 %v638, %v1905
    %v1907 = vrot.slane %v1896, %v1906
    %v1908 = vlaneseq
    %v1909 = vshrl.u32 %v1908, 7
    %v1910 = vsub.s32 %v643, %v1909
    %v1911 = vrot.slane %v1897, %v1910
    %v1912 = vsel %vm648, %v1911, %v1907
    %v1913 = vlaneseq
    %v1914 = vshrl.u32 %v1913, 7
    %v1915 = vsub.s32 %v638, %v1914
    %v1916 = vrot.slane %v1898, %v1915
    %v1917 = vlaneseq
    %v1918 = vshrl.u32 %v1917, 7
    %v1919 = vsub.s32 %v643, %v1918
    %v1920 = vrot.slane %v1899, %v1919
    %v1921 = vsel %vm648, %v1920, %v1916
    %v1922 = vsel %vm659, %v1921, %v1912
    %v1924 = vsel %vm662, %v1922, -inf
    %1925 = vmax.xlane.f32.xlu0 %v1924
    %v1926 = vpop.xlane.xlu0 %1925
    %v1928 = vlaneseq
    %v1929 = vshrl.u32 %v1928, 7
    %v1930 = vsub.s32 0, %v1929
    %v1931 = vrot.slane %v1926, %v1930
    %v1932 = vlaneseq
    %v1933 = vshrl.u32 %v1932, 7
    %v1934 = vsub.s32 1, %v1933
    %v1935 = vrot.slane %v1926, %v1934
    %v1938 = vsub.f32 %v1896, %v1931
    %v1939 = vsub.f32 %v1897, %v1931
    %v1940 = vsub.f32 %v1898, %v1935
    %v1941 = vsub.f32 %v1899, %v1935
    %v1942 = vmul.f32 %v1938, 1.442695
    %v1943 = vpow.pop %v1942
    %v1944 = vmul.f32 %v1939, 1.442695
    %v1945 = vpow.pop %v1944
    %v1946 = vmul.f32 %v1940, 1.442695
    %v1947 = vpow.pop %v1946
    %v1948 = vmul.f32 %v1941, 1.442695
    %v1949 = vpow.pop %v1948
    %1954 = vset.pattern.permute.xlu0 0
    %1955 = vperm.xlu0 %1954, %v1943
    %v1956 = vpop.permute.xlu0 %1955
    %1957 = vset.pattern.permute.xlu0 0
    %1958 = vperm.xlu0 %1957, %v1945
    %v1959 = vpop.permute.xlu0 %1958
    %1960 = vset.pattern.permute.xlu0 0
    %1961 = vperm.xlu0 %1960, %v1947
    %v1962 = vpop.permute.xlu0 %1961
    %1963 = vset.pattern.permute.xlu0 0
    %1964 = vperm.xlu0 %1963, %v1949
    %v1965 = vpop.permute.xlu0 %1964
    %v1966 = vlaneseq
    %v1967 = vshrl.u32 %v1966, 7
    %v1968 = vsub.s32 %v638, %v1967
    %v1969 = vrot.slane %v1956, %v1968
    %v1970 = vlaneseq
    %v1971 = vshrl.u32 %v1970, 7
    %v1972 = vsub.s32 %v643, %v1971
    %v1973 = vrot.slane %v1959, %v1972
    %v1974 = vsel %vm648, %v1973, %v1969
    %v1975 = vlaneseq
    %v1976 = vshrl.u32 %v1975, 7
    %v1977 = vsub.s32 %v638, %v1976
    %v1978 = vrot.slane %v1962, %v1977
    %v1979 = vlaneseq
    %v1980 = vshrl.u32 %v1979, 7
    %v1981 = vsub.s32 %v643, %v1980
    %v1982 = vrot.slane %v1965, %v1981
    %v1983 = vsel %vm648, %v1982, %v1978
    %v1984 = vsel %vm659, %v1983, %v1974
    %v1986 = vsel %vm662, %v1984, 0.0
    %1987 = vadd.xlane.f32.xlu0 %v1986
    %v1988 = vpop.xlane.xlu0 %1987
    %v1989 = vrcp.pop %v1988
    %v1991 = vlaneseq
    %v1992 = vshrl.u32 %v1991, 7
    %v1993 = vsub.s32 0, %v1992
    %v1994 = vrot.slane %v1989, %v1993
    %v1995 = vlaneseq
    %v1996 = vshrl.u32 %v1995, 7
    %v1997 = vsub.s32 1, %v1996
    %v1998 = vrot.slane %v1989, %v1997
    %v2001 = vmul.f32 %v1943, %v1994
    %v2002 = vmul.f32 %v1945, %v1994
    %v2003 = vmul.f32 %v1947, %v1998
    %v2004 = vmul.f32 %v1949, %v1998
    %2007 = vset.pattern.permute.xlu0 0
    %2008 = vperm.xlu0 %2007, %v2001
    %v2009 = vpop.permute.xlu0 %2008
    %2010 = vset.pattern.permute.xlu0 0
    %2011 = vperm.xlu0 %2010, %v2002
    %v2012 = vpop.permute.xlu0 %2011
    %v2013 = vlaneseq
    %v2014 = vshrl.u32 %v2013, 7
    %v2015 = vsub.s32 %v638, %v2014
    %v2016 = vrot.slane %v2009, %v2015
    %v2017 = vlaneseq
    %v2018 = vshrl.u32 %v2017, 7
    %v2019 = vsub.s32 %v643, %v2018
    %v2020 = vrot.slane %v2012, %v2019
    %v2021 = vsel %vm648, %v2020, %v2016
    %v2022 = vsel %vm401, %v2021, 0
    %2024 = vmatprep.subr.mxu0 0.0
    %2025 = vmatpush1.msra.mxu0 0.0
    %2026 = vmatprep.subr.mxu0 0.0
    %2027 = vmatpush1.msra.mxu0 0.0
    %2028 = vmatprep.subr.mxu0 0.0
    %2029 = vmatpush1.msra.mxu0 0.0
    %2030 = vmatprep.subr.mxu0 0.0
    %2031 = vmatpush1.msra.mxu0 0.0
    %2032 = vmatprep.subr.mxu0 0.0
    %2033 = vmatpush1.msra.mxu0 0.0
    %2034 = vmatprep.subr.mxu0 0.0
    %2035 = vmatpush1.msra.mxu0 0.0
    %2036 = vmatprep.subr.mxu0 0.0
    %2037 = vmatpush1.msra.mxu0 0.0
    %2038 = vmatprep.subr.mxu0 0.0
    %2039 = vmatpush1.msra.mxu0 0.0
    %2040 = vmatprep.subr.mxu0 0.0
    %2041 = vmatpush1.msra.mxu0 0.0
    %2042 = vmatprep.subr.mxu0 0.0
    %2043 = vmatpush1.msra.mxu0 0.0
    %2044 = vmatprep.subr.mxu0 0.0
    %2045 = vmatpush1.msra.mxu0 0.0
    %2046 = vmatprep.subr.mxu0 0.0
    %2047 = vmatpush1.msra.mxu0 0.0
    %2048 = vmatprep.subr.mxu0 0.0
    %2049 = vmatpush1.msra.mxu0 0.0
    %2050 = vmatprep.subr.mxu0 0.0
    %2051 = vmatpush1.msra.mxu0 0.0
    %2052 = vmatprep.subr.mxu0 0.0
    %2053 = vmatpush1.msra.mxu0 %v180
    %2054 = vmatprep.subr.mxu0 0.0
    %2055 = vmatpush1.msra.mxu0 %v175
    %2056 = vmatprep.subr.mxu0 0.0
    %2057 = vmatpush2.msra.mxu0 0.0
    %2058 = vmatprep.subr.mxu0 0.0
    %2059 = vmatpush2.msra.mxu0 0.0
    %2060 = vmatprep.subr.mxu0 0.0
    %2061 = vmatpush2.msra.mxu0 0.0
    %2062 = vmatprep.subr.mxu0 0.0
    %2063 = vmatpush2.msra.mxu0 0.0
    %2064 = vmatprep.subr.mxu0 0.0
    %2065 = vmatpush2.msra.mxu0 0.0
    %2066 = vmatprep.subr.mxu0 0.0
    %2067 = vmatpush2.msra.mxu0 0.0
    %2068 = vmatprep.subr.mxu0 0.0
    %2069 = vmatpush2.msra.mxu0 0.0
    %2070 = vmatprep.subr.mxu0 0.0
    %2071 = vmatpush2.msra.mxu0 0.0
    %2072 = vmatprep.subr.mxu0 0.0
    %2073 = vmatpush2.msra.mxu0 0.0
    %2074 = vmatprep.subr.mxu0 0.0
    %2075 = vmatpush2.msra.mxu0 0.0
    %2076 = vmatprep.subr.mxu0 0.0
    %2077 = vmatpush2.msra.mxu0 0.0
    %2078 = vmatprep.subr.mxu0 0.0
    %2079 = vmatpush2.msra.mxu0 0.0
    %2080 = vmatprep.subr.mxu0 0.0
    %2081 = vmatpush2.msra.mxu0 0.0
    %2082 = vmatprep.subr.mxu0 0.0
    %2083 = vmatpush2.msra.mxu0 0.0
    %2084 = vmatprep.subr.mxu0 0.0
    %2085 = vmatpush2.msra.mxu0 0.0
    %2086 = vmatprep.subr.mxu0 0.0
    %2087 = vmatpush2.msra.mxu0 0.0
    %2088 = vmatprep.mubr.f32.mxu0 0.0
    %2089 = vmatmul.mubr.f32.gmra.mxu0 %v2022
    %v2090 = vpop.f32.mrf.mxu0
    %v2091 = vadd.f32 0.0, %v2090
    %v2092 = vpop.f32.mrf.mxu0
    %2093 = vdwg.mxu0
    %2096 = vset.pattern.permute.xlu0 0
    %2097 = vperm.xlu0 %2096, %v2003
    %v2098 = vpop.permute.xlu0 %2097
    %2099 = vset.pattern.permute.xlu0 0
    %2100 = vperm.xlu0 %2099, %v2004
    %v2101 = vpop.permute.xlu0 %2100
    %v2102 = vlaneseq
    %v2103 = vshrl.u32 %v2102, 7
    %v2104 = vsub.s32 %v638, %v2103
    %v2105 = vrot.slane %v2098, %v2104
    %v2106 = vlaneseq
    %v2107 = vshrl.u32 %v2106, 7
    %v2108 = vsub.s32 %v643, %v2107
    %v2109 = vrot.slane %v2101, %v2108
    %v2110 = vsel %vm648, %v2109, %v2105
    %v2111 = vsel %vm401, %v2110, 0
    %2113 = vmatprep.subr.mxu0 0.0
    %2114 = vmatpush1.msra.mxu0 0.0
    %2115 = vmatprep.subr.mxu0 0.0
    %2116 = vmatpush1.msra.mxu0 0.0
    %2117 = vmatprep.subr.mxu0 0.0
    %2118 = vmatpush1.msra.mxu0 0.0
    %2119 = vmatprep.subr.mxu0 0.0
    %2120 = vmatpush1.msra.mxu0 0.0
    %2121 = vmatprep.subr.mxu0 0.0
    %2122 = vmatpush1.msra.mxu0 0.0
    %2123 = vmatprep.subr.mxu0 0.0
    %2124 = vmatpush1.msra.mxu0 0.0
    %2125 = vmatprep.subr.mxu0 0.0
    %2126 = vmatpush1.msra.mxu0 0.0
    %2127 = vmatprep.subr.mxu0 0.0
    %2128 = vmatpush1.msra.mxu0 0.0
    %2129 = vmatprep.subr.mxu0 0.0
    %2130 = vmatpush1.msra.mxu0 0.0
    %2131 = vmatprep.subr.mxu0 0.0
    %2132 = vmatpush1.msra.mxu0 0.0
    %2133 = vmatprep.subr.mxu0 0.0
    %2134 = vmatpush1.msra.mxu0 0.0
    %2135 = vmatprep.subr.mxu0 0.0
    %2136 = vmatpush1.msra.mxu0 0.0
    %2137 = vmatprep.subr.mxu0 0.0
    %2138 = vmatpush1.msra.mxu0 0.0
    %2139 = vmatprep.subr.mxu0 0.0
    %2140 = vmatpush1.msra.mxu0 0.0
    %2141 = vmatprep.subr.mxu0 0.0
    %2142 = vmatpush1.msra.mxu0 %v190
    %2143 = vmatprep.subr.mxu0 0.0
    %2144 = vmatpush1.msra.mxu0 %v185
    %2145 = vmatprep.subr.mxu0 0.0
    %2146 = vmatpush2.msra.mxu0 0.0
    %2147 = vmatprep.subr.mxu0 0.0
    %2148 = vmatpush2.msra.mxu0 0.0
    %2149 = vmatprep.subr.mxu0 0.0
    %2150 = vmatpush2.msra.mxu0 0.0
    %2151 = vmatprep.subr.mxu0 0.0
    %2152 = vmatpush2.msra.mxu0 0.0
    %2153 = vmatprep.subr.mxu0 0.0
    %2154 = vmatpush2.msra.mxu0 0.0
    %2155 = vmatprep.subr.mxu0 0.0
    %2156 = vmatpush2.msra.mxu0 0.0
    %2157 = vmatprep.subr.mxu0 0.0
    %2158 = vmatpush2.msra.mxu0 0.0
    %2159 = vmatprep.subr.mxu0 0.0
    %2160 = vmatpush2.msra.mxu0 0.0
    %2161 = vmatprep.subr.mxu0 0.0
    %2162 = vmatpush2.msra.mxu0 0.0
    %2163 = vmatprep.subr.mxu0 0.0
    %2164 = vmatpush2.msra.mxu0 0.0
    %2165 = vmatprep.subr.mxu0 0.0
    %2166 = vmatpush2.msra.mxu0 0.0
    %2167 = vmatprep.subr.mxu0 0.0
    %2168 = vmatpush2.msra.mxu0 0.0
    %2169 = vmatprep.subr.mxu0 0.0
    %2170 = vmatpush2.msra.mxu0 0.0
    %2171 = vmatprep.subr.mxu0 0.0
    %2172 = vmatpush2.msra.mxu0 0.0
    %2173 = vmatprep.subr.mxu0 0.0
    %2174 = vmatpush2.msra.mxu0 0.0
    %2175 = vmatprep.subr.mxu0 0.0
    %2176 = vmatpush2.msra.mxu0 0.0
    %2177 = vmatprep.mubr.f32.mxu0 0.0
    %2178 = vmatmul.mubr.f32.gmra.mxu0 %v2111
    %v2179 = vpop.f32.mrf.mxu0
    %v2180 = vadd.f32 0.0, %v2179
    %v2181 = vpop.f32.mrf.mxu0
    %2182 = vdwg.mxu0
    %v2184 = vrot.slane %v2180, 7
    %v2186 = vsel %vm316, %v2091, %v2184
    %v2187 = vxor.u32 %v1836, 2147483648
    %v2188 = vmul.f32 %v2187, 1.442695
    %v2189 = vpow.pop %v2188
    %v2190 = vadd.f32 %v2189, 1.0
    %v2191 = vrcp.pop %v2190
    %v2192 = vmul.f32 1.0, %v2191
    %2194 = vrot.lane.b32.xlu0 %v2186, 16
    %v2195 = vpop.permute.xlu0 %2194
    %v2197 = vmul.f32 %v2192, %v2195
    %2199 = vrot.lane.b32.xlu0 %v2197, 112
    %v2200 = vpop.permute.xlu0 %2199
    %v2201 = vsel %vm197, %v2200, 0
    %2203 = vmatprep.subr.mxu0 0.0
    %2204 = vmatpush1.msra.mxu0 0.0
    %2205 = vmatprep.subr.mxu0 0.0
    %2206 = vmatpush1.msra.mxu0 0.0
    %2207 = vmatprep.subr.mxu0 0.0
    %2208 = vmatpush1.msra.mxu0 0.0
    %2209 = vmatprep.subr.mxu0 0.0
    %2210 = vmatpush1.msra.mxu0 0.0
    %2211 = vmatprep.subr.mxu0 0.0
    %2212 = vmatpush1.msra.mxu0 0.0
    %2213 = vmatprep.subr.mxu0 0.0
    %2214 = vmatpush1.msra.mxu0 0.0
    %2215 = vmatprep.subr.mxu0 0.0
    %2216 = vmatpush1.msra.mxu0 0.0
    %2217 = vmatprep.subr.mxu0 0.0
    %2218 = vmatpush1.msra.mxu0 0.0
    %2219 = vmatprep.subr.mxu0 0.0
    %2220 = vmatpush1.msra.mxu0 0.0
    %2221 = vmatprep.subr.mxu0 0.0
    %2222 = vmatpush1.msra.mxu0 0.0
    %2223 = vmatprep.subr.mxu0 0.0
    %2224 = vmatpush1.msra.mxu0 0.0
    %2225 = vmatprep.subr.mxu0 0.0
    %2226 = vmatpush1.msra.mxu0 0.0
    %2227 = vmatprep.subr.mxu0 0.0
    %2228 = vmatpush1.msra.mxu0 %v71
    %2229 = vmatprep.subr.mxu0 0.0
    %2230 = vmatpush1.msra.mxu0 %v70
    %2231 = vmatprep.subr.mxu0 0.0
    %2232 = vmatpush1.msra.mxu0 %v69
    %2233 = vmatprep.subr.mxu0 0.0
    %2234 = vmatpush1.msra.mxu0 %v68
    %2235 = vmatprep.subr.mxu0 0.0
    %2236 = vmatpush2.msra.mxu0 0.0
    %2237 = vmatprep.subr.mxu0 0.0
    %2238 = vmatpush2.msra.mxu0 0.0
    %2239 = vmatprep.subr.mxu0 0.0
    %2240 = vmatpush2.msra.mxu0 0.0
    %2241 = vmatprep.subr.mxu0 0.0
    %2242 = vmatpush2.msra.mxu0 0.0
    %2243 = vmatprep.subr.mxu0 0.0
    %2244 = vmatpush2.msra.mxu0 0.0
    %2245 = vmatprep.subr.mxu0 0.0
    %2246 = vmatpush2.msra.mxu0 0.0
    %2247 = vmatprep.subr.mxu0 0.0
    %2248 = vmatpush2.msra.mxu0 0.0
    %2249 = vmatprep.subr.mxu0 0.0
    %2250 = vmatpush2.msra.mxu0 0.0
    %2251 = vmatprep.subr.mxu0 0.0
    %2252 = vmatpush2.msra.mxu0 0.0
    %2253 = vmatprep.subr.mxu0 0.0
    %2254 = vmatpush2.msra.mxu0 0.0
    %2255 = vmatprep.subr.mxu0 0.0
    %2256 = vmatpush2.msra.mxu0 0.0
    %2257 = vmatprep.subr.mxu0 0.0
    %2258 = vmatpush2.msra.mxu0 0.0
    %2259 = vmatprep.subr.mxu0 0.0
    %2260 = vmatpush2.msra.mxu0 0.0
    %2261 = vmatprep.subr.mxu0 0.0
    %2262 = vmatpush2.msra.mxu0 0.0
    %2263 = vmatprep.subr.mxu0 0.0
    %2264 = vmatpush2.msra.mxu0 0.0
    %2265 = vmatprep.subr.mxu0 0.0
    %2266 = vmatpush2.msra.mxu0 0.0
    %2267 = vmatprep.mubr.f32.mxu0 0.0
    %2268 = vmatmul.mubr.f32.gmra.mxu0 %v2201
    %v2269 = vpop.f32.mrf.mxu0
    %v2270 = vadd.f32 0.0, %v2269
    %v2271 = vpop.f32.mrf.mxu0
    %2272 = vdwg.mxu0
    %v2274 = vrot.slane %v2270, 4
    %v2276 = vadd.f32 %v475, %v2274
    %2277 = vmatprep.subr.mxu0 0.0
    %2278 = vmatpush1.msra.mxu0 0.0
    %2279 = vmatprep.subr.mxu0 0.0
    %2280 = vmatpush1.msra.mxu0 0.0
    %2281 = vmatprep.subr.mxu0 0.0
    %2282 = vmatpush1.msra.mxu0 0.0
    %2283 = vmatprep.subr.mxu0 0.0
    %2284 = vmatpush1.msra.mxu0 0.0
    %2285 = vmatprep.subr.mxu0 0.0
    %2286 = vmatpush1.msra.mxu0 0.0
    %2287 = vmatprep.subr.mxu0 0.0
    %2288 = vmatpush1.msra.mxu0 0.0
    %2289 = vmatprep.subr.mxu0 0.0
    %2290 = vmatpush1.msra.mxu0 0.0
    %2291 = vmatprep.subr.mxu0 0.0
    %2292 = vmatpush1.msra.mxu0 0.0
    %2293 = vmatprep.subr.mxu0 0.0
    %2294 = vmatpush1.msra.mxu0 0.0
    %2295 = vmatprep.subr.mxu0 0.0
    %2296 = vmatpush1.msra.mxu0 0.0
    %2297 = vmatprep.subr.mxu0 0.0
    %2298 = vmatpush1.msra.mxu0 0.0
    %2299 = vmatprep.subr.mxu0 0.0
    %2300 = vmatpush1.msra.mxu0 0.0
    %2301 = vmatprep.subr.mxu0 0.0
    %2302 = vmatpush1.msra.mxu0 %v75
    %2303 = vmatprep.subr.mxu0 0.0
    %2304 = vmatpush1.msra.mxu0 %v74
    %2305 = vmatprep.subr.mxu0 0.0
    %2306 = vmatpush1.msra.mxu0 %v73
    %2307 = vmatprep.subr.mxu0 0.0
    %2308 = vmatpush1.msra.mxu0 %v72
    %2309 = vmatprep.subr.mxu0 0.0
    %2310 = vmatpush2.msra.mxu0 0.0
    %2311 = vmatprep.subr.mxu0 0.0
    %2312 = vmatpush2.msra.mxu0 0.0
    %2313 = vmatprep.subr.mxu0 0.0
    %2314 = vmatpush2.msra.mxu0 0.0
    %2315 = vmatprep.subr.mxu0 0.0
    %2316 = vmatpush2.msra.mxu0 0.0
    %2317 = vmatprep.subr.mxu0 0.0
    %2318 = vmatpush2.msra.mxu0 0.0
    %2319 = vmatprep.subr.mxu0 0.0
    %2320 = vmatpush2.msra.mxu0 0.0
    %2321 = vmatprep.subr.mxu0 0.0
    %2322 = vmatpush2.msra.mxu0 0.0
    %2323 = vmatprep.subr.mxu0 0.0
    %2324 = vmatpush2.msra.mxu0 0.0
    %2325 = vmatprep.subr.mxu0 0.0
    %2326 = vmatpush2.msra.mxu0 0.0
    %2327 = vmatprep.subr.mxu0 0.0
    %2328 = vmatpush2.msra.mxu0 0.0
    %2329 = vmatprep.subr.mxu0 0.0
    %2330 = vmatpush2.msra.mxu0 0.0
    %2331 = vmatprep.subr.mxu0 0.0
    %2332 = vmatpush2.msra.mxu0 0.0
    %2333 = vmatprep.subr.mxu0 0.0
    %2334 = vmatpush2.msra.mxu0 0.0
    %2335 = vmatprep.subr.mxu0 0.0
    %2336 = vmatpush2.msra.mxu0 0.0
    %2337 = vmatprep.subr.mxu0 0.0
    %2338 = vmatpush2.msra.mxu0 0.0
    %2339 = vmatprep.subr.mxu0 0.0
    %2340 = vmatpush2.msra.mxu0 0.0
    %2341 = vmatprep.mubr.f32.mxu0 0.0
    %2342 = vmatmul.mubr.f32.gmra.mxu0 %v1767
    %v2343 = vpop.f32.mrf.mxu0
    %v2344 = vadd.f32 0.0, %v2343
    %v2345 = vpop.f32.mrf.mxu0
    %2346 = vdwg.mxu0
    %v2348 = vrot.slane %v2344, 4
    %v2350 = vadd.f32 %v2276, %v2348
    %v2351 = vxor.u32 %v2350, 2147483648
    %v2352 = vmul.f32 %v2351, 1.442695
    %v2353 = vpow.pop %v2352
    %v2354 = vadd.f32 %v2353, 1.0
    %v2355 = vrcp.pop %v2354
    %v2356 = vmul.f32 1.0, %v2355
    %v2357 = vtanh.pop %v2350
    %v2359 = vrot.slane %v1762, 6
    %v2361 = vmul.f32 %v2356, %v2359
    %2363 = vrot.lane.b32.xlu0 %v2357, 32
    %v2364 = vpop.permute.xlu0 %2363
    %v2366 = vmul.f32 %v2356, %v2364
    %2368 = vrot.lane.b32.xlu0 %v2366, 32
    %v2369 = vpop.permute.xlu0 %2368
    %v2371 = vadd.f32 %v2361, %v2369
    %v2372 = vtanh.pop %v2371
    %2374 = vrot.lane.b32.xlu0 %v2372, 32
    %v2375 = vpop.permute.xlu0 %2374
    %v2377 = vmul.f32 %v2356, %v2375
    %v2378 = vmul.f32 %v1111, %v2377
    %v2379 = vrot.slane %v1752, 6
    %2380 = vrot.lane.b32.xlu0 %v2379, 64
    %v2381 = vpop.permute.xlu0 %2380
    %v2383 = vmul.f32 %v1118, %v2381
    %2385 = vrot.lane.b32.xlu0 %v2383, 64
    %v2386 = vpop.permute.xlu0 %2385
    %v2388 = vadd.f32 %v2378, %v2386
    %v2389 = vmul.f32 %v1111, %v2371
    %2390 = vrot.lane.b32.xlu0 %v2359, 96
    %v2391 = vpop.permute.xlu0 %2390
    %v2393 = vmul.f32 %v1118, %v2391
    %2395 = vrot.lane.b32.xlu0 %v2393, 32
    %v2396 = vpop.permute.xlu0 %2395
    %v2398 = vadd.f32 %v2389, %v2396
    %v2400 = vrot.slane %v2388, 4
    %2401 = vrot.lane.b32.xlu0 %v2400, 64
    %v2402 = vpop.permute.xlu0 %2401
    %v2403 = vsel %vm197, %v2402, 0
    %2405 = vmatprep.subr.mxu0 0.0
    %2406 = vmatpush1.msra.mxu0 0.0
    %2407 = vmatprep.subr.mxu0 0.0
    %2408 = vmatpush1.msra.mxu0 0.0
    %2409 = vmatprep.subr.mxu0 0.0
    %2410 = vmatpush1.msra.mxu0 0.0
    %2411 = vmatprep.subr.mxu0 0.0
    %2412 = vmatpush1.msra.mxu0 0.0
    %2413 = vmatprep.subr.mxu0 0.0
    %2414 = vmatpush1.msra.mxu0 0.0
    %2415 = vmatprep.subr.mxu0 0.0
    %2416 = vmatpush1.msra.mxu0 0.0
    %2417 = vmatprep.subr.mxu0 0.0
    %2418 = vmatpush1.msra.mxu0 0.0
    %2419 = vmatprep.subr.mxu0 0.0
    %2420 = vmatpush1.msra.mxu0 0.0
    %2421 = vmatprep.subr.mxu0 0.0
    %2422 = vmatpush1.msra.mxu0 0.0
    %2423 = vmatprep.subr.mxu0 0.0
    %2424 = vmatpush1.msra.mxu0 0.0
    %2425 = vmatprep.subr.mxu0 0.0
    %2426 = vmatpush1.msra.mxu0 0.0
    %2427 = vmatprep.subr.mxu0 0.0
    %2428 = vmatpush1.msra.mxu0 0.0
    %2429 = vmatprep.subr.mxu0 0.0
    %2430 = vmatpush1.msra.mxu0 %v61
    %2431 = vmatprep.subr.mxu0 0.0
    %2432 = vmatpush1.msra.mxu0 %v60
    %2433 = vmatprep.subr.mxu0 0.0
    %2434 = vmatpush1.msra.mxu0 %v59
    %2435 = vmatprep.subr.mxu0 0.0
    %2436 = vmatpush1.msra.mxu0 %v58
    %2437 = vmatprep.subr.mxu0 0.0
    %2438 = vmatpush2.msra.mxu0 0.0
    %2439 = vmatprep.subr.mxu0 0.0
    %2440 = vmatpush2.msra.mxu0 0.0
    %2441 = vmatprep.subr.mxu0 0.0
    %2442 = vmatpush2.msra.mxu0 0.0
    %2443 = vmatprep.subr.mxu0 0.0
    %2444 = vmatpush2.msra.mxu0 0.0
    %2445 = vmatprep.subr.mxu0 0.0
    %2446 = vmatpush2.msra.mxu0 0.0
    %2447 = vmatprep.subr.mxu0 0.0
    %2448 = vmatpush2.msra.mxu0 0.0
    %2449 = vmatprep.subr.mxu0 0.0
    %2450 = vmatpush2.msra.mxu0 0.0
    %2451 = vmatprep.subr.mxu0 0.0
    %2452 = vmatpush2.msra.mxu0 0.0
    %2453 = vmatprep.subr.mxu0 0.0
    %2454 = vmatpush2.msra.mxu0 0.0
    %2455 = vmatprep.subr.mxu0 0.0
    %2456 = vmatpush2.msra.mxu0 0.0
    %2457 = vmatprep.subr.mxu0 0.0
    %2458 = vmatpush2.msra.mxu0 0.0
    %2459 = vmatprep.subr.mxu0 0.0
    %2460 = vmatpush2.msra.mxu0 0.0
    %2461 = vmatprep.subr.mxu0 0.0
    %2462 = vmatpush2.msra.mxu0 0.0
    %2463 = vmatprep.subr.mxu0 0.0
    %2464 = vmatpush2.msra.mxu0 0.0
    %2465 = vmatprep.subr.mxu0 0.0
    %2466 = vmatpush2.msra.mxu0 0.0
    %2467 = vmatprep.subr.mxu0 0.0
    %2468 = vmatpush2.msra.mxu0 0.0
    %2469 = vmatprep.mubr.f32.mxu0 0.0
    %2470 = vmatmul.mubr.f32.gmra.mxu0 %v2403
    %v2471 = vpop.f32.mrf.mxu0
    %v2472 = vadd.f32 %v488, %v2471
    %v2473 = vpop.f32.mrf.mxu0
    %2474 = vdwg.mxu0
    %v2477 = vunpack.c.l.s4 1966171168
    %v2478 = vunpack.c.0.s8 %v2477
    %v2479 = vlaneseq
    %v2480 = vshrl.u32 %v2479, 7
    %v2481 = vsub.s32 %v2478, %v2480
    %v2482 = vrot.slane %v2472, %v2481
    %v2483 = vcombine.high %v2482, %v2482
    %v2485 = vunpack.c.l.s4 1966171168
    %v2486 = vunpack.c.0.s8 %v2485
    %v2487 = vlaneseq
    %v2488 = vshrl.u32 %v2487, 7
    %v2489 = vsub.s32 %v2486, %v2488
    %v2490 = vrot.slane %v2482, %v2489
    %v2492 = vunpack.c.l.s4 1966171168
    %v2493 = vunpack.c.0.s8 %v2492
    %v2494 = vlaneseq
    %v2495 = vshrl.u32 %v2494, 7
    %v2496 = vsub.s32 %v2493, %v2495
    %v2497 = vrot.slane %v2483, %v2496
    %v2498 = vlaneseq
    %v2499 = vshrl.u32 %v2498, 7
    %v2500 = vsub.s32 0, %v2499
    %v2501 = vrot.slane %v2490, %v2500
    %v2502 = vlaneseq
    %v2503 = vshrl.u32 %v2502, 7
    %v2504 = vsub.s32 0, %v2503
    %v2505 = vrot.slane %v2497, %v2504
    %v2508 = vadd.f32 %v277, %v2501
    %v2509 = vadd.f32 %v282, %v2501
    %v2510 = vadd.f32 %v287, %v2505
    %v2511 = vadd.f32 %v292, %v2505
    %v2512 = vmax.f32 %v2508, 0.0
    %v2513 = vmax.f32 %v2509, 0.0
    %v2514 = vmax.f32 %v2510, 0.0
    %v2515 = vmax.f32 %v2511, 0.0
    %v2516 = vmul.f32 %v2512, %v606
    %v2517 = vmul.f32 %v2513, %v606
    %v2518 = vmul.f32 %v2514, %v606
    %v2519 = vmul.f32 %v2515, %v606
    %v2520 = vsel %vm401, %v2516, 0.0
    %2521 = vadd.xlane.f32.xlu0 %v2520
    %v2522 = vpop.xlane.xlu0 %2521
    %v2523 = vsel %vm401, %v2517, 0.0
    %2524 = vadd.xlane.f32.xlu0 %v2523
    %v2525 = vpop.xlane.xlu0 %2524
    %v2526 = vsel %vm401, %v2518, 0.0
    %2527 = vadd.xlane.f32.xlu0 %v2526
    %v2528 = vpop.xlane.xlu0 %2527
    %v2529 = vsel %vm401, %v2519, 0.0
    %2530 = vadd.xlane.f32.xlu0 %v2529
    %v2531 = vpop.xlane.xlu0 %2530
    %v2532 = vadd.f32 %v2522, %v627
    %v2533 = vadd.f32 %v2525, %v627
    %v2534 = vadd.f32 %v2528, %v627
    %v2535 = vadd.f32 %v2531, %v627
    %v2540 = vlaneseq
    %v2541 = vshrl.u32 %v2540, 7
    %v2542 = vsub.s32 %v638, %v2541
    %v2543 = vrot.slane %v2532, %v2542
    %v2544 = vlaneseq
    %v2545 = vshrl.u32 %v2544, 7
    %v2546 = vsub.s32 %v643, %v2545
    %v2547 = vrot.slane %v2533, %v2546
    %v2548 = vsel %vm648, %v2547, %v2543
    %v2549 = vlaneseq
    %v2550 = vshrl.u32 %v2549, 7
    %v2551 = vsub.s32 %v638, %v2550
    %v2552 = vrot.slane %v2534, %v2551
    %v2553 = vlaneseq
    %v2554 = vshrl.u32 %v2553, 7
    %v2555 = vsub.s32 %v643, %v2554
    %v2556 = vrot.slane %v2535, %v2555
    %v2557 = vsel %vm648, %v2556, %v2552
    %v2558 = vsel %vm659, %v2557, %v2548
    %v2560 = vsel %vm662, %v2558, -inf
    %2561 = vmax.xlane.f32.xlu0 %v2560
    %v2562 = vpop.xlane.xlu0 %2561
    %v2564 = vlaneseq
    %v2565 = vshrl.u32 %v2564, 7
    %v2566 = vsub.s32 0, %v2565
    %v2567 = vrot.slane %v2562, %v2566
    %v2568 = vlaneseq
    %v2569 = vshrl.u32 %v2568, 7
    %v2570 = vsub.s32 1, %v2569
    %v2571 = vrot.slane %v2562, %v2570
    %v2574 = vsub.f32 %v2532, %v2567
    %v2575 = vsub.f32 %v2533, %v2567
    %v2576 = vsub.f32 %v2534, %v2571
    %v2577 = vsub.f32 %v2535, %v2571
    %v2578 = vmul.f32 %v2574, 1.442695
    %v2579 = vpow.pop %v2578
    %v2580 = vmul.f32 %v2575, 1.442695
    %v2581 = vpow.pop %v2580
    %v2582 = vmul.f32 %v2576, 1.442695
    %v2583 = vpow.pop %v2582
    %v2584 = vmul.f32 %v2577, 1.442695
    %v2585 = vpow.pop %v2584
    %2590 = vset.pattern.permute.xlu0 0
    %2591 = vperm.xlu0 %2590, %v2579
    %v2592 = vpop.permute.xlu0 %2591
    %2593 = vset.pattern.permute.xlu0 0
    %2594 = vperm.xlu0 %2593, %v2581
    %v2595 = vpop.permute.xlu0 %2594
    %2596 = vset.pattern.permute.xlu0 0
    %2597 = vperm.xlu0 %2596, %v2583
    %v2598 = vpop.permute.xlu0 %2597
    %2599 = vset.pattern.permute.xlu0 0
    %2600 = vperm.xlu0 %2599, %v2585
    %v2601 = vpop.permute.xlu0 %2600
    %v2602 = vlaneseq
    %v2603 = vshrl.u32 %v2602, 7
    %v2604 = vsub.s32 %v638, %v2603
    %v2605 = vrot.slane %v2592, %v2604
    %v2606 = vlaneseq
    %v2607 = vshrl.u32 %v2606, 7
    %v2608 = vsub.s32 %v643, %v2607
    %v2609 = vrot.slane %v2595, %v2608
    %v2610 = vsel %vm648, %v2609, %v2605
    %v2611 = vlaneseq
    %v2612 = vshrl.u32 %v2611, 7
    %v2613 = vsub.s32 %v638, %v2612
    %v2614 = vrot.slane %v2598, %v2613
    %v2615 = vlaneseq
    %v2616 = vshrl.u32 %v2615, 7
    %v2617 = vsub.s32 %v643, %v2616
    %v2618 = vrot.slane %v2601, %v2617
    %v2619 = vsel %vm648, %v2618, %v2614
    %v2620 = vsel %vm659, %v2619, %v2610
    %v2622 = vsel %vm662, %v2620, 0.0
    %2623 = vadd.xlane.f32.xlu0 %v2622
    %v2624 = vpop.xlane.xlu0 %2623
    %v2625 = vrcp.pop %v2624
    %v2627 = vlaneseq
    %v2628 = vshrl.u32 %v2627, 7
    %v2629 = vsub.s32 0, %v2628
    %v2630 = vrot.slane %v2625, %v2629
    %v2631 = vlaneseq
    %v2632 = vshrl.u32 %v2631, 7
    %v2633 = vsub.s32 1, %v2632
    %v2634 = vrot.slane %v2625, %v2633
    %v2637 = vmul.f32 %v2579, %v2630
    %v2638 = vmul.f32 %v2581, %v2630
    %v2639 = vmul.f32 %v2583, %v2634
    %v2640 = vmul.f32 %v2585, %v2634
    %2643 = vset.pattern.permute.xlu0 0
    %2644 = vperm.xlu0 %2643, %v2637
    %v2645 = vpop.permute.xlu0 %2644
    %2646 = vset.pattern.permute.xlu0 0
    %2647 = vperm.xlu0 %2646, %v2638
    %v2648 = vpop.permute.xlu0 %2647
    %v2649 = vlaneseq
    %v2650 = vshrl.u32 %v2649, 7
    %v2651 = vsub.s32 %v638, %v2650
    %v2652 = vrot.slane %v2645, %v2651
    %v2653 = vlaneseq
    %v2654 = vshrl.u32 %v2653, 7
    %v2655 = vsub.s32 %v643, %v2654
    %v2656 = vrot.slane %v2648, %v2655
    %v2657 = vsel %vm648, %v2656, %v2652
    %v2658 = vsel %vm401, %v2657, 0
    %2660 = vmatprep.subr.mxu0 0.0
    %2661 = vmatpush1.msra.mxu0 0.0
    %2662 = vmatprep.subr.mxu0 0.0
    %2663 = vmatpush1.msra.mxu0 0.0
    %2664 = vmatprep.subr.mxu0 0.0
    %2665 = vmatpush1.msra.mxu0 0.0
    %2666 = vmatprep.subr.mxu0 0.0
    %2667 = vmatpush1.msra.mxu0 0.0
    %2668 = vmatprep.subr.mxu0 0.0
    %2669 = vmatpush1.msra.mxu0 0.0
    %2670 = vmatprep.subr.mxu0 0.0
    %2671 = vmatpush1.msra.mxu0 0.0
    %2672 = vmatprep.subr.mxu0 0.0
    %2673 = vmatpush1.msra.mxu0 0.0
    %2674 = vmatprep.subr.mxu0 0.0
    %2675 = vmatpush1.msra.mxu0 0.0
    %2676 = vmatprep.subr.mxu0 0.0
    %2677 = vmatpush1.msra.mxu0 0.0
    %2678 = vmatprep.subr.mxu0 0.0
    %2679 = vmatpush1.msra.mxu0 0.0
    %2680 = vmatprep.subr.mxu0 0.0
    %2681 = vmatpush1.msra.mxu0 0.0
    %2682 = vmatprep.subr.mxu0 0.0
    %2683 = vmatpush1.msra.mxu0 0.0
    %2684 = vmatprep.subr.mxu0 0.0
    %2685 = vmatpush1.msra.mxu0 0.0
    %2686 = vmatprep.subr.mxu0 0.0
    %2687 = vmatpush1.msra.mxu0 0.0
    %2688 = vmatprep.subr.mxu0 0.0
    %2689 = vmatpush1.msra.mxu0 %v180
    %2690 = vmatprep.subr.mxu0 0.0
    %2691 = vmatpush1.msra.mxu0 %v175
    %2692 = vmatprep.subr.mxu0 0.0
    %2693 = vmatpush2.msra.mxu0 0.0
    %2694 = vmatprep.subr.mxu0 0.0
    %2695 = vmatpush2.msra.mxu0 0.0
    %2696 = vmatprep.subr.mxu0 0.0
    %2697 = vmatpush2.msra.mxu0 0.0
    %2698 = vmatprep.subr.mxu0 0.0
    %2699 = vmatpush2.msra.mxu0 0.0
    %2700 = vmatprep.subr.mxu0 0.0
    %2701 = vmatpush2.msra.mxu0 0.0
    %2702 = vmatprep.subr.mxu0 0.0
    %2703 = vmatpush2.msra.mxu0 0.0
    %2704 = vmatprep.subr.mxu0 0.0
    %2705 = vmatpush2.msra.mxu0 0.0
    %2706 = vmatprep.subr.mxu0 0.0
    %2707 = vmatpush2.msra.mxu0 0.0
    %2708 = vmatprep.subr.mxu0 0.0
    %2709 = vmatpush2.msra.mxu0 0.0
    %2710 = vmatprep.subr.mxu0 0.0
    %2711 = vmatpush2.msra.mxu0 0.0
    %2712 = vmatprep.subr.mxu0 0.0
    %2713 = vmatpush2.msra.mxu0 0.0
    %2714 = vmatprep.subr.mxu0 0.0
    %2715 = vmatpush2.msra.mxu0 0.0
    %2716 = vmatprep.subr.mxu0 0.0
    %2717 = vmatpush2.msra.mxu0 0.0
    %2718 = vmatprep.subr.mxu0 0.0
    %2719 = vmatpush2.msra.mxu0 0.0
    %2720 = vmatprep.subr.mxu0 0.0
    %2721 = vmatpush2.msra.mxu0 0.0
    %2722 = vmatprep.subr.mxu0 0.0
    %2723 = vmatpush2.msra.mxu0 0.0
    %2724 = vmatprep.mubr.f32.mxu0 0.0
    %2725 = vmatmul.mubr.f32.gmra.mxu0 %v2658
    %v2726 = vpop.f32.mrf.mxu0
    %v2727 = vadd.f32 0.0, %v2726
    %v2728 = vpop.f32.mrf.mxu0
    %2729 = vdwg.mxu0
    %2732 = vset.pattern.permute.xlu0 0
    %2733 = vperm.xlu0 %2732, %v2639
    %v2734 = vpop.permute.xlu0 %2733
    %2735 = vset.pattern.permute.xlu0 0
    %2736 = vperm.xlu0 %2735, %v2640
    %v2737 = vpop.permute.xlu0 %2736
    %v2738 = vlaneseq
    %v2739 = vshrl.u32 %v2738, 7
    %v2740 = vsub.s32 %v638, %v2739
    %v2741 = vrot.slane %v2734, %v2740
    %v2742 = vlaneseq
    %v2743 = vshrl.u32 %v2742, 7
    %v2744 = vsub.s32 %v643, %v2743
    %v2745 = vrot.slane %v2737, %v2744
    %v2746 = vsel %vm648, %v2745, %v2741
    %v2747 = vsel %vm401, %v2746, 0
    %2749 = vmatprep.subr.mxu0 0.0
    %2750 = vmatpush1.msra.mxu0 0.0
    %2751 = vmatprep.subr.mxu0 0.0
    %2752 = vmatpush1.msra.mxu0 0.0
    %2753 = vmatprep.subr.mxu0 0.0
    %2754 = vmatpush1.msra.mxu0 0.0
    %2755 = vmatprep.subr.mxu0 0.0
    %2756 = vmatpush1.msra.mxu0 0.0
    %2757 = vmatprep.subr.mxu0 0.0
    %2758 = vmatpush1.msra.mxu0 0.0
    %2759 = vmatprep.subr.mxu0 0.0
    %2760 = vmatpush1.msra.mxu0 0.0
    %2761 = vmatprep.subr.mxu0 0.0
    %2762 = vmatpush1.msra.mxu0 0.0
    %2763 = vmatprep.subr.mxu0 0.0
    %2764 = vmatpush1.msra.mxu0 0.0
    %2765 = vmatprep.subr.mxu0 0.0
    %2766 = vmatpush1.msra.mxu0 0.0
    %2767 = vmatprep.subr.mxu0 0.0
    %2768 = vmatpush1.msra.mxu0 0.0
    %2769 = vmatprep.subr.mxu0 0.0
    %2770 = vmatpush1.msra.mxu0 0.0
    %2771 = vmatprep.subr.mxu0 0.0
    %2772 = vmatpush1.msra.mxu0 0.0
    %2773 = vmatprep.subr.mxu0 0.0
    %2774 = vmatpush1.msra.mxu0 0.0
    %2775 = vmatprep.subr.mxu0 0.0
    %2776 = vmatpush1.msra.mxu0 0.0
    %2777 = vmatprep.subr.mxu0 0.0
    %2778 = vmatpush1.msra.mxu0 %v190
    %2779 = vmatprep.subr.mxu0 0.0
    %2780 = vmatpush1.msra.mxu0 %v185
    %2781 = vmatprep.subr.mxu0 0.0
    %2782 = vmatpush2.msra.mxu0 0.0
    %2783 = vmatprep.subr.mxu0 0.0
    %2784 = vmatpush2.msra.mxu0 0.0
    %2785 = vmatprep.subr.mxu0 0.0
    %2786 = vmatpush2.msra.mxu0 0.0
    %2787 = vmatprep.subr.mxu0 0.0
    %2788 = vmatpush2.msra.mxu0 0.0
    %2789 = vmatprep.subr.mxu0 0.0
    %2790 = vmatpush2.msra.mxu0 0.0
    %2791 = vmatprep.subr.mxu0 0.0
    %2792 = vmatpush2.msra.mxu0 0.0
    %2793 = vmatprep.subr.mxu0 0.0
    %2794 = vmatpush2.msra.mxu0 0.0
    %2795 = vmatprep.subr.mxu0 0.0
    %2796 = vmatpush2.msra.mxu0 0.0
    %2797 = vmatprep.subr.mxu0 0.0
    %2798 = vmatpush2.msra.mxu0 0.0
    %2799 = vmatprep.subr.mxu0 0.0
    %2800 = vmatpush2.msra.mxu0 0.0
    %2801 = vmatprep.subr.mxu0 0.0
    %2802 = vmatpush2.msra.mxu0 0.0
    %2803 = vmatprep.subr.mxu0 0.0
    %2804 = vmatpush2.msra.mxu0 0.0
    %2805 = vmatprep.subr.mxu0 0.0
    %2806 = vmatpush2.msra.mxu0 0.0
    %2807 = vmatprep.subr.mxu0 0.0
    %2808 = vmatpush2.msra.mxu0 0.0
    %2809 = vmatprep.subr.mxu0 0.0
    %2810 = vmatpush2.msra.mxu0 0.0
    %2811 = vmatprep.subr.mxu0 0.0
    %2812 = vmatpush2.msra.mxu0 0.0
    %2813 = vmatprep.mubr.f32.mxu0 0.0
    %2814 = vmatmul.mubr.f32.gmra.mxu0 %v2747
    %v2815 = vpop.f32.mrf.mxu0
    %v2816 = vadd.f32 0.0, %v2815
    %v2817 = vpop.f32.mrf.mxu0
    %2818 = vdwg.mxu0
    %v2820 = vrot.slane %v2816, 7
    %v2822 = vsel %vm316, %v2727, %v2820
    %v2823 = vxor.u32 %v2472, 2147483648
    %v2824 = vmul.f32 %v2823, 1.442695
    %v2825 = vpow.pop %v2824
    %v2826 = vadd.f32 %v2825, 1.0
    %v2827 = vrcp.pop %v2826
    %v2828 = vmul.f32 1.0, %v2827
    %2830 = vrot.lane.b32.xlu0 %v2822, 16
    %v2831 = vpop.permute.xlu0 %2830
    %v2833 = vmul.f32 %v2828, %v2831
    %2835 = vrot.lane.b32.xlu0 %v2833, 112
    %v2836 = vpop.permute.xlu0 %2835
    %v2837 = vsel %vm197, %v2836, 0
    %2839 = vmatprep.subr.mxu0 0.0
    %2840 = vmatpush1.msra.mxu0 0.0
    %2841 = vmatprep.subr.mxu0 0.0
    %2842 = vmatpush1.msra.mxu0 0.0
    %2843 = vmatprep.subr.mxu0 0.0
    %2844 = vmatpush1.msra.mxu0 0.0
    %2845 = vmatprep.subr.mxu0 0.0
    %2846 = vmatpush1.msra.mxu0 0.0
    %2847 = vmatprep.subr.mxu0 0.0
    %2848 = vmatpush1.msra.mxu0 0.0
    %2849 = vmatprep.subr.mxu0 0.0
    %2850 = vmatpush1.msra.mxu0 0.0
    %2851 = vmatprep.subr.mxu0 0.0
    %2852 = vmatpush1.msra.mxu0 0.0
    %2853 = vmatprep.subr.mxu0 0.0
    %2854 = vmatpush1.msra.mxu0 0.0
    %2855 = vmatprep.subr.mxu0 0.0
    %2856 = vmatpush1.msra.mxu0 0.0
    %2857 = vmatprep.subr.mxu0 0.0
    %2858 = vmatpush1.msra.mxu0 0.0
    %2859 = vmatprep.subr.mxu0 0.0
    %2860 = vmatpush1.msra.mxu0 0.0
    %2861 = vmatprep.subr.mxu0 0.0
    %2862 = vmatpush1.msra.mxu0 0.0
    %2863 = vmatprep.subr.mxu0 0.0
    %2864 = vmatpush1.msra.mxu0 %v71
    %2865 = vmatprep.subr.mxu0 0.0
    %2866 = vmatpush1.msra.mxu0 %v70
    %2867 = vmatprep.subr.mxu0 0.0
    %2868 = vmatpush1.msra.mxu0 %v69
    %2869 = vmatprep.subr.mxu0 0.0
    %2870 = vmatpush1.msra.mxu0 %v68
    %2871 = vmatprep.subr.mxu0 0.0
    %2872 = vmatpush2.msra.mxu0 0.0
    %2873 = vmatprep.subr.mxu0 0.0
    %2874 = vmatpush2.msra.mxu0 0.0
    %2875 = vmatprep.subr.mxu0 0.0
    %2876 = vmatpush2.msra.mxu0 0.0
    %2877 = vmatprep.subr.mxu0 0.0
    %2878 = vmatpush2.msra.mxu0 0.0
    %2879 = vmatprep.subr.mxu0 0.0
    %2880 = vmatpush2.msra.mxu0 0.0
    %2881 = vmatprep.subr.mxu0 0.0
    %2882 = vmatpush2.msra.mxu0 0.0
    %2883 = vmatprep.subr.mxu0 0.0
    %2884 = vmatpush2.msra.mxu0 0.0
    %2885 = vmatprep.subr.mxu0 0.0
    %2886 = vmatpush2.msra.mxu0 0.0
    %2887 = vmatprep.subr.mxu0 0.0
    %2888 = vmatpush2.msra.mxu0 0.0
    %2889 = vmatprep.subr.mxu0 0.0
    %2890 = vmatpush2.msra.mxu0 0.0
    %2891 = vmatprep.subr.mxu0 0.0
    %2892 = vmatpush2.msra.mxu0 0.0
    %2893 = vmatprep.subr.mxu0 0.0
    %2894 = vmatpush2.msra.mxu0 0.0
    %2895 = vmatprep.subr.mxu0 0.0
    %2896 = vmatpush2.msra.mxu0 0.0
    %2897 = vmatprep.subr.mxu0 0.0
    %2898 = vmatpush2.msra.mxu0 0.0
    %2899 = vmatprep.subr.mxu0 0.0
    %2900 = vmatpush2.msra.mxu0 0.0
    %2901 = vmatprep.subr.mxu0 0.0
    %2902 = vmatpush2.msra.mxu0 0.0
    %2903 = vmatprep.mubr.f32.mxu0 0.0
    %2904 = vmatmul.mubr.f32.gmra.mxu0 %v2837
    %v2905 = vpop.f32.mrf.mxu0
    %v2906 = vadd.f32 0.0, %v2905
    %v2907 = vpop.f32.mrf.mxu0
    %2908 = vdwg.mxu0
    %v2910 = vrot.slane %v2906, 2
    %v2912 = vadd.f32 %v475, %v2910
    %2913 = vmatprep.subr.mxu0 0.0
    %2914 = vmatpush1.msra.mxu0 0.0
    %2915 = vmatprep.subr.mxu0 0.0
    %2916 = vmatpush1.msra.mxu0 0.0
    %2917 = vmatprep.subr.mxu0 0.0
    %2918 = vmatpush1.msra.mxu0 0.0
    %2919 = vmatprep.subr.mxu0 0.0
    %2920 = vmatpush1.msra.mxu0 0.0
    %2921 = vmatprep.subr.mxu0 0.0
    %2922 = vmatpush1.msra.mxu0 0.0
    %2923 = vmatprep.subr.mxu0 0.0
    %2924 = vmatpush1.msra.mxu0 0.0
    %2925 = vmatprep.subr.mxu0 0.0
    %2926 = vmatpush1.msra.mxu0 0.0
    %2927 = vmatprep.subr.mxu0 0.0
    %2928 = vmatpush1.msra.mxu0 0.0
    %2929 = vmatprep.subr.mxu0 0.0
    %2930 = vmatpush1.msra.mxu0 0.0
    %2931 = vmatprep.subr.mxu0 0.0
    %2932 = vmatpush1.msra.mxu0 0.0
    %2933 = vmatprep.subr.mxu0 0.0
    %2934 = vmatpush1.msra.mxu0 0.0
    %2935 = vmatprep.subr.mxu0 0.0
    %2936 = vmatpush1.msra.mxu0 0.0
    %2937 = vmatprep.subr.mxu0 0.0
    %2938 = vmatpush1.msra.mxu0 %v75
    %2939 = vmatprep.subr.mxu0 0.0
    %2940 = vmatpush1.msra.mxu0 %v74
    %2941 = vmatprep.subr.mxu0 0.0
    %2942 = vmatpush1.msra.mxu0 %v73
    %2943 = vmatprep.subr.mxu0 0.0
    %2944 = vmatpush1.msra.mxu0 %v72
    %2945 = vmatprep.subr.mxu0 0.0
    %2946 = vmatpush2.msra.mxu0 0.0
    %2947 = vmatprep.subr.mxu0 0.0
    %2948 = vmatpush2.msra.mxu0 0.0
    %2949 = vmatprep.subr.mxu0 0.0
    %2950 = vmatpush2.msra.mxu0 0.0
    %2951 = vmatprep.subr.mxu0 0.0
    %2952 = vmatpush2.msra.mxu0 0.0
    %2953 = vmatprep.subr.mxu0 0.0
    %2954 = vmatpush2.msra.mxu0 0.0
    %2955 = vmatprep.subr.mxu0 0.0
    %2956 = vmatpush2.msra.mxu0 0.0
    %2957 = vmatprep.subr.mxu0 0.0
    %2958 = vmatpush2.msra.mxu0 0.0
    %2959 = vmatprep.subr.mxu0 0.0
    %2960 = vmatpush2.msra.mxu0 0.0
    %2961 = vmatprep.subr.mxu0 0.0
    %2962 = vmatpush2.msra.mxu0 0.0
    %2963 = vmatprep.subr.mxu0 0.0
    %2964 = vmatpush2.msra.mxu0 0.0
    %2965 = vmatprep.subr.mxu0 0.0
    %2966 = vmatpush2.msra.mxu0 0.0
    %2967 = vmatprep.subr.mxu0 0.0
    %2968 = vmatpush2.msra.mxu0 0.0
    %2969 = vmatprep.subr.mxu0 0.0
    %2970 = vmatpush2.msra.mxu0 0.0
    %2971 = vmatprep.subr.mxu0 0.0
    %2972 = vmatpush2.msra.mxu0 0.0
    %2973 = vmatprep.subr.mxu0 0.0
    %2974 = vmatpush2.msra.mxu0 0.0
    %2975 = vmatprep.subr.mxu0 0.0
    %2976 = vmatpush2.msra.mxu0 0.0
    %2977 = vmatprep.mubr.f32.mxu0 0.0
    %2978 = vmatmul.mubr.f32.gmra.mxu0 %v2403
    %v2979 = vpop.f32.mrf.mxu0
    %v2980 = vadd.f32 0.0, %v2979
    %v2981 = vpop.f32.mrf.mxu0
    %2982 = vdwg.mxu0
    %v2984 = vrot.slane %v2980, 2
    %v2986 = vadd.f32 %v2912, %v2984
    %v2987 = vxor.u32 %v2986, 2147483648
    %v2988 = vmul.f32 %v2987, 1.442695
    %v2989 = vpow.pop %v2988
    %v2990 = vadd.f32 %v2989, 1.0
    %v2991 = vrcp.pop %v2990
    %v2992 = vmul.f32 1.0, %v2991
    %v2993 = vtanh.pop %v2986
    %v2995 = vrot.slane %v2398, 6
    %v2997 = vmul.f32 %v2992, %v2995
    %2999 = vrot.lane.b32.xlu0 %v2993, 32
    %v3000 = vpop.permute.xlu0 %2999
    %v3002 = vmul.f32 %v2992, %v3000
    %3004 = vrot.lane.b32.xlu0 %v3002, 32
    %v3005 = vpop.permute.xlu0 %3004
    %v3007 = vadd.f32 %v2997, %v3005
    %v3008 = vtanh.pop %v3007
    %3010 = vrot.lane.b32.xlu0 %v3008, 32
    %v3011 = vpop.permute.xlu0 %3010
    %v3013 = vmul.f32 %v2992, %v3011
    %v3014 = vmul.f32 %v1111, %v3013
    %v3015 = vrot.slane %v2388, 6
    %3016 = vrot.lane.b32.xlu0 %v3015, 64
    %v3017 = vpop.permute.xlu0 %3016
    %v3019 = vmul.f32 %v1118, %v3017
    %3021 = vrot.lane.b32.xlu0 %v3019, 64
    %v3022 = vpop.permute.xlu0 %3021
    %v3024 = vadd.f32 %v3014, %v3022
    %v3025 = vmul.f32 %v1111, %v3007
    %3026 = vrot.lane.b32.xlu0 %v2995, 96
    %v3027 = vpop.permute.xlu0 %3026
    %v3029 = vmul.f32 %v1118, %v3027
    %3031 = vrot.lane.b32.xlu0 %v3029, 32
    %v3032 = vpop.permute.xlu0 %3031
    %v3034 = vadd.f32 %v3025, %v3032
    %v3036 = vrot.slane %v3024, 6
    %3037 = vrot.lane.b32.xlu0 %v3036, 64
    %v3038 = vpop.permute.xlu0 %3037
    %v3039 = vsel %vm197, %v3038, 0
    %3041 = vmatprep.subr.mxu0 0.0
    %3042 = vmatpush1.msra.mxu0 0.0
    %3043 = vmatprep.subr.mxu0 0.0
    %3044 = vmatpush1.msra.mxu0 0.0
    %3045 = vmatprep.subr.mxu0 0.0
    %3046 = vmatpush1.msra.mxu0 0.0
    %3047 = vmatprep.subr.mxu0 0.0
    %3048 = vmatpush1.msra.mxu0 0.0
    %3049 = vmatprep.subr.mxu0 0.0
    %3050 = vmatpush1.msra.mxu0 0.0
    %3051 = vmatprep.subr.mxu0 0.0
    %3052 = vmatpush1.msra.mxu0 0.0
    %3053 = vmatprep.subr.mxu0 0.0
    %3054 = vmatpush1.msra.mxu0 0.0
    %3055 = vmatprep.subr.mxu0 0.0
    %3056 = vmatpush1.msra.mxu0 0.0
    %3057 = vmatprep.subr.mxu0 0.0
    %3058 = vmatpush1.msra.mxu0 0.0
    %3059 = vmatprep.subr.mxu0 0.0
    %3060 = vmatpush1.msra.mxu0 0.0
    %3061 = vmatprep.subr.mxu0 0.0
    %3062 = vmatpush1.msra.mxu0 0.0
    %3063 = vmatprep.subr.mxu0 0.0
    %3064 = vmatpush1.msra.mxu0 0.0
    %3065 = vmatprep.subr.mxu0 0.0
    %3066 = vmatpush1.msra.mxu0 %v61
    %3067 = vmatprep.subr.mxu0 0.0
    %3068 = vmatpush1.msra.mxu0 %v60
    %3069 = vmatprep.subr.mxu0 0.0
    %3070 = vmatpush1.msra.mxu0 %v59
    %3071 = vmatprep.subr.mxu0 0.0
    %3072 = vmatpush1.msra.mxu0 %v58
    %3073 = vmatprep.subr.mxu0 0.0
    %3074 = vmatpush2.msra.mxu0 0.0
    %3075 = vmatprep.subr.mxu0 0.0
    %3076 = vmatpush2.msra.mxu0 0.0
    %3077 = vmatprep.subr.mxu0 0.0
    %3078 = vmatpush2.msra.mxu0 0.0
    %3079 = vmatprep.subr.mxu0 0.0
    %3080 = vmatpush2.msra.mxu0 0.0
    %3081 = vmatprep.subr.mxu0 0.0
    %3082 = vmatpush2.msra.mxu0 0.0
    %3083 = vmatprep.subr.mxu0 0.0
    %3084 = vmatpush2.msra.mxu0 0.0
    %3085 = vmatprep.subr.mxu0 0.0
    %3086 = vmatpush2.msra.mxu0 0.0
    %3087 = vmatprep.subr.mxu0 0.0
    %3088 = vmatpush2.msra.mxu0 0.0
    %3089 = vmatprep.subr.mxu0 0.0
    %3090 = vmatpush2.msra.mxu0 0.0
    %3091 = vmatprep.subr.mxu0 0.0
    %3092 = vmatpush2.msra.mxu0 0.0
    %3093 = vmatprep.subr.mxu0 0.0
    %3094 = vmatpush2.msra.mxu0 0.0
    %3095 = vmatprep.subr.mxu0 0.0
    %3096 = vmatpush2.msra.mxu0 0.0
    %3097 = vmatprep.subr.mxu0 0.0
    %3098 = vmatpush2.msra.mxu0 0.0
    %3099 = vmatprep.subr.mxu0 0.0
    %3100 = vmatpush2.msra.mxu0 0.0
    %3101 = vmatprep.subr.mxu0 0.0
    %3102 = vmatpush2.msra.mxu0 0.0
    %3103 = vmatprep.subr.mxu0 0.0
    %3104 = vmatpush2.msra.mxu0 0.0
    %3105 = vmatprep.mubr.f32.mxu0 0.0
    %3106 = vmatmul.mubr.f32.gmra.mxu0 %v3039
    %v3107 = vpop.f32.mrf.mxu0
    %v3108 = vadd.f32 %v488, %v3107
    %v3109 = vpop.f32.mrf.mxu0
    %3110 = vdwg.mxu0
    %v3113 = vunpack.c.l.s4 1966171168
    %v3114 = vunpack.c.0.s8 %v3113
    %v3115 = vlaneseq
    %v3116 = vshrl.u32 %v3115, 7
    %v3117 = vsub.s32 %v3114, %v3116
    %v3118 = vrot.slane %v3108, %v3117
    %v3119 = vcombine.high %v3118, %v3118
    %v3121 = vunpack.c.l.s4 1966171168
    %v3122 = vunpack.c.0.s8 %v3121
    %v3123 = vlaneseq
    %v3124 = vshrl.u32 %v3123, 7
    %v3125 = vsub.s32 %v3122, %v3124
    %v3126 = vrot.slane %v3118, %v3125
    %v3128 = vunpack.c.l.s4 1966171168
    %v3129 = vunpack.c.0.s8 %v3128
    %v3130 = vlaneseq
    %v3131 = vshrl.u32 %v3130, 7
    %v3132 = vsub.s32 %v3129, %v3131
    %v3133 = vrot.slane %v3119, %v3132
    %v3134 = vlaneseq
    %v3135 = vshrl.u32 %v3134, 7
    %v3136 = vsub.s32 0, %v3135
    %v3137 = vrot.slane %v3126, %v3136
    %v3138 = vlaneseq
    %v3139 = vshrl.u32 %v3138, 7
    %v3140 = vsub.s32 0, %v3139
    %v3141 = vrot.slane %v3133, %v3140
    %v3144 = vadd.f32 %v277, %v3137
    %v3145 = vadd.f32 %v282, %v3137
    %v3146 = vadd.f32 %v287, %v3141
    %v3147 = vadd.f32 %v292, %v3141
    %v3148 = vmax.f32 %v3144, 0.0
    %v3149 = vmax.f32 %v3145, 0.0
    %v3150 = vmax.f32 %v3146, 0.0
    %v3151 = vmax.f32 %v3147, 0.0
    %v3152 = vmul.f32 %v3148, %v606
    %v3153 = vmul.f32 %v3149, %v606
    %v3154 = vmul.f32 %v3150, %v606
    %v3155 = vmul.f32 %v3151, %v606
    %v3156 = vsel %vm401, %v3152, 0.0
    %3157 = vadd.xlane.f32.xlu0 %v3156
    %v3158 = vpop.xlane.xlu0 %3157
    %v3159 = vsel %vm401, %v3153, 0.0
    %3160 = vadd.xlane.f32.xlu0 %v3159
    %v3161 = vpop.xlane.xlu0 %3160
    %v3162 = vsel %vm401, %v3154, 0.0
    %3163 = vadd.xlane.f32.xlu0 %v3162
    %v3164 = vpop.xlane.xlu0 %3163
    %v3165 = vsel %vm401, %v3155, 0.0
    %3166 = vadd.xlane.f32.xlu0 %v3165
    %v3167 = vpop.xlane.xlu0 %3166
    %v3168 = vadd.f32 %v3158, %v627
    %v3169 = vadd.f32 %v3161, %v627
    %v3170 = vadd.f32 %v3164, %v627
    %v3171 = vadd.f32 %v3167, %v627
    %v3176 = vlaneseq
    %v3177 = vshrl.u32 %v3176, 7
    %v3178 = vsub.s32 %v638, %v3177
    %v3179 = vrot.slane %v3168, %v3178
    %v3180 = vlaneseq
    %v3181 = vshrl.u32 %v3180, 7
    %v3182 = vsub.s32 %v643, %v3181
    %v3183 = vrot.slane %v3169, %v3182
    %v3184 = vsel %vm648, %v3183, %v3179
    %v3185 = vlaneseq
    %v3186 = vshrl.u32 %v3185, 7
    %v3187 = vsub.s32 %v638, %v3186
    %v3188 = vrot.slane %v3170, %v3187
    %v3189 = vlaneseq
    %v3190 = vshrl.u32 %v3189, 7
    %v3191 = vsub.s32 %v643, %v3190
    %v3192 = vrot.slane %v3171, %v3191
    %v3193 = vsel %vm648, %v3192, %v3188
    %v3194 = vsel %vm659, %v3193, %v3184
    %v3196 = vsel %vm662, %v3194, -inf
    %3197 = vmax.xlane.f32.xlu0 %v3196
    %v3198 = vpop.xlane.xlu0 %3197
    %v3200 = vlaneseq
    %v3201 = vshrl.u32 %v3200, 7
    %v3202 = vsub.s32 0, %v3201
    %v3203 = vrot.slane %v3198, %v3202
    %v3204 = vlaneseq
    %v3205 = vshrl.u32 %v3204, 7
    %v3206 = vsub.s32 1, %v3205
    %v3207 = vrot.slane %v3198, %v3206
    %v3210 = vsub.f32 %v3168, %v3203
    %v3211 = vsub.f32 %v3169, %v3203
    %v3212 = vsub.f32 %v3170, %v3207
    %v3213 = vsub.f32 %v3171, %v3207
    %v3214 = vmul.f32 %v3210, 1.442695
    %v3215 = vpow.pop %v3214
    %v3216 = vmul.f32 %v3211, 1.442695
    %v3217 = vpow.pop %v3216
    %v3218 = vmul.f32 %v3212, 1.442695
    %v3219 = vpow.pop %v3218
    %v3220 = vmul.f32 %v3213, 1.442695
    %v3221 = vpow.pop %v3220
    %3226 = vset.pattern.permute.xlu0 0
    %3227 = vperm.xlu0 %3226, %v3215
    %v3228 = vpop.permute.xlu0 %3227
    %3229 = vset.pattern.permute.xlu0 0
    %3230 = vperm.xlu0 %3229, %v3217
    %v3231 = vpop.permute.xlu0 %3230
    %3232 = vset.pattern.permute.xlu0 0
    %3233 = vperm.xlu0 %3232, %v3219
    %v3234 = vpop.permute.xlu0 %3233
    %3235 = vset.pattern.permute.xlu0 0
    %3236 = vperm.xlu0 %3235, %v3221
    %v3237 = vpop.permute.xlu0 %3236
    %v3238 = vlaneseq
    %v3239 = vshrl.u32 %v3238, 7
    %v3240 = vsub.s32 %v638, %v3239
    %v3241 = vrot.slane %v3228, %v3240
    %v3242 = vlaneseq
    %v3243 = vshrl.u32 %v3242, 7
    %v3244 = vsub.s32 %v643, %v3243
    %v3245 = vrot.slane %v3231, %v3244
    %v3246 = vsel %vm648, %v3245, %v3241
    %v3247 = vlaneseq
    %v3248 = vshrl.u32 %v3247, 7
    %v3249 = vsub.s32 %v638, %v3248
    %v3250 = vrot.slane %v3234, %v3249
    %v3251 = vlaneseq
    %v3252 = vshrl.u32 %v3251, 7
    %v3253 = vsub.s32 %v643, %v3252
    %v3254 = vrot.slane %v3237, %v3253
    %v3255 = vsel %vm648, %v3254, %v3250
    %v3256 = vsel %vm659, %v3255, %v3246
    %v3258 = vsel %vm662, %v3256, 0.0
    %3259 = vadd.xlane.f32.xlu0 %v3258
    %v3260 = vpop.xlane.xlu0 %3259
    %v3261 = vrcp.pop %v3260
    %v3263 = vlaneseq
    %v3264 = vshrl.u32 %v3263, 7
    %v3265 = vsub.s32 0, %v3264
    %v3266 = vrot.slane %v3261, %v3265
    %v3267 = vlaneseq
    %v3268 = vshrl.u32 %v3267, 7
    %v3269 = vsub.s32 1, %v3268
    %v3270 = vrot.slane %v3261, %v3269
    %v3273 = vmul.f32 %v3215, %v3266
    %v3274 = vmul.f32 %v3217, %v3266
    %v3275 = vmul.f32 %v3219, %v3270
    %v3276 = vmul.f32 %v3221, %v3270
    %3279 = vset.pattern.permute.xlu0 0
    %3280 = vperm.xlu0 %3279, %v3273
    %v3281 = vpop.permute.xlu0 %3280
    %3282 = vset.pattern.permute.xlu0 0
    %3283 = vperm.xlu0 %3282, %v3274
    %v3284 = vpop.permute.xlu0 %3283
    %v3285 = vlaneseq
    %v3286 = vshrl.u32 %v3285, 7
    %v3287 = vsub.s32 %v638, %v3286
    %v3288 = vrot.slane %v3281, %v3287
    %v3289 = vlaneseq
    %v3290 = vshrl.u32 %v3289, 7
    %v3291 = vsub.s32 %v643, %v3290
    %v3292 = vrot.slane %v3284, %v3291
    %v3293 = vsel %vm648, %v3292, %v3288
    %v3294 = vsel %vm401, %v3293, 0
    %3296 = vmatprep.subr.mxu0 0.0
    %3297 = vmatpush1.msra.mxu0 0.0
    %3298 = vmatprep.subr.mxu0 0.0
    %3299 = vmatpush1.msra.mxu0 0.0
    %3300 = vmatprep.subr.mxu0 0.0
    %3301 = vmatpush1.msra.mxu0 0.0
    %3302 = vmatprep.subr.mxu0 0.0
    %3303 = vmatpush1.msra.mxu0 0.0
    %3304 = vmatprep.subr.mxu0 0.0
    %3305 = vmatpush1.msra.mxu0 0.0
    %3306 = vmatprep.subr.mxu0 0.0
    %3307 = vmatpush1.msra.mxu0 0.0
    %3308 = vmatprep.subr.mxu0 0.0
    %3309 = vmatpush1.msra.mxu0 0.0
    %3310 = vmatprep.subr.mxu0 0.0
    %3311 = vmatpush1.msra.mxu0 0.0
    %3312 = vmatprep.subr.mxu0 0.0
    %3313 = vmatpush1.msra.mxu0 0.0
    %3314 = vmatprep.subr.mxu0 0.0
    %3315 = vmatpush1.msra.mxu0 0.0
    %3316 = vmatprep.subr.mxu0 0.0
    %3317 = vmatpush1.msra.mxu0 0.0
    %3318 = vmatprep.subr.mxu0 0.0
    %3319 = vmatpush1.msra.mxu0 0.0
    %3320 = vmatprep.subr.mxu0 0.0
    %3321 = vmatpush1.msra.mxu0 0.0
    %3322 = vmatprep.subr.mxu0 0.0
    %3323 = vmatpush1.msra.mxu0 0.0
    %3324 = vmatprep.subr.mxu0 0.0
    %3325 = vmatpush1.msra.mxu0 %v180
    %3326 = vmatprep.subr.mxu0 0.0
    %3327 = vmatpush1.msra.mxu0 %v175
    %3328 = vmatprep.subr.mxu0 0.0
    %3329 = vmatpush2.msra.mxu0 0.0
    %3330 = vmatprep.subr.mxu0 0.0
    %3331 = vmatpush2.msra.mxu0 0.0
    %3332 = vmatprep.subr.mxu0 0.0
    %3333 = vmatpush2.msra.mxu0 0.0
    %3334 = vmatprep.subr.mxu0 0.0
    %3335 = vmatpush2.msra.mxu0 0.0
    %3336 = vmatprep.subr.mxu0 0.0
    %3337 = vmatpush2.msra.mxu0 0.0
    %3338 = vmatprep.subr.mxu0 0.0
    %3339 = vmatpush2.msra.mxu0 0.0
    %3340 = vmatprep.subr.mxu0 0.0
    %3341 = vmatpush2.msra.mxu0 0.0
    %3342 = vmatprep.subr.mxu0 0.0
    %3343 = vmatpush2.msra.mxu0 0.0
    %3344 = vmatprep.subr.mxu0 0.0
    %3345 = vmatpush2.msra.mxu0 0.0
    %3346 = vmatprep.subr.mxu0 0.0
    %3347 = vmatpush2.msra.mxu0 0.0
    %3348 = vmatprep.subr.mxu0 0.0
    %3349 = vmatpush2.msra.mxu0 0.0
    %3350 = vmatprep.subr.mxu0 0.0
    %3351 = vmatpush2.msra.mxu0 0.0
    %3352 = vmatprep.subr.mxu0 0.0
    %3353 = vmatpush2.msra.mxu0 0.0
    %3354 = vmatprep.subr.mxu0 0.0
    %3355 = vmatpush2.msra.mxu0 0.0
    %3356 = vmatprep.subr.mxu0 0.0
    %3357 = vmatpush2.msra.mxu0 0.0
    %3358 = vmatprep.subr.mxu0 0.0
    %3359 = vmatpush2.msra.mxu0 0.0
    %3360 = vmatprep.mubr.f32.mxu0 0.0
    %3361 = vmatmul.mubr.f32.gmra.mxu0 %v3294
    %v3362 = vpop.f32.mrf.mxu0
    %v3363 = vadd.f32 0.0, %v3362
    %v3364 = vpop.f32.mrf.mxu0
    %3365 = vdwg.mxu0
    %3368 = vset.pattern.permute.xlu0 0
    %3369 = vperm.xlu0 %3368, %v3275
    %v3370 = vpop.permute.xlu0 %3369
    %3371 = vset.pattern.permute.xlu0 0
    %3372 = vperm.xlu0 %3371, %v3276
    %v3373 = vpop.permute.xlu0 %3372
    %v3374 = vlaneseq
    %v3375 = vshrl.u32 %v3374, 7
    %v3376 = vsub.s32 %v638, %v3375
    %v3377 = vrot.slane %v3370, %v3376
    %v3378 = vlaneseq
    %v3379 = vshrl.u32 %v3378, 7
    %v3380 = vsub.s32 %v643, %v3379
    %v3381 = vrot.slane %v3373, %v3380
    %v3382 = vsel %vm648, %v3381, %v3377
    %v3383 = vsel %vm401, %v3382, 0
    %3385 = vmatprep.subr.mxu0 0.0
    %3386 = vmatpush1.msra.mxu0 0.0
    %3387 = vmatprep.subr.mxu0 0.0
    %3388 = vmatpush1.msra.mxu0 0.0
    %3389 = vmatprep.subr.mxu0 0.0
    %3390 = vmatpush1.msra.mxu0 0.0
    %3391 = vmatprep.subr.mxu0 0.0
    %3392 = vmatpush1.msra.mxu0 0.0
    %3393 = vmatprep.subr.mxu0 0.0
    %3394 = vmatpush1.msra.mxu0 0.0
    %3395 = vmatprep.subr.mxu0 0.0
    %3396 = vmatpush1.msra.mxu0 0.0
    %3397 = vmatprep.subr.mxu0 0.0
    %3398 = vmatpush1.msra.mxu0 0.0
    %3399 = vmatprep.subr.mxu0 0.0
    %3400 = vmatpush1.msra.mxu0 0.0
    %3401 = vmatprep.subr.mxu0 0.0
    %3402 = vmatpush1.msra.mxu0 0.0
    %3403 = vmatprep.subr.mxu0 0.0
    %3404 = vmatpush1.msra.mxu0 0.0
    %3405 = vmatprep.subr.mxu0 0.0
    %3406 = vmatpush1.msra.mxu0 0.0
    %3407 = vmatprep.subr.mxu0 0.0
    %3408 = vmatpush1.msra.mxu0 0.0
    %3409 = vmatprep.subr.mxu0 0.0
    %3410 = vmatpush1.msra.mxu0 0.0
    %3411 = vmatprep.subr.mxu0 0.0
    %3412 = vmatpush1.msra.mxu0 0.0
    %3413 = vmatprep.subr.mxu0 0.0
    %3414 = vmatpush1.msra.mxu0 %v190
    %3415 = vmatprep.subr.mxu0 0.0
    %3416 = vmatpush1.msra.mxu0 %v185
    %3417 = vmatprep.subr.mxu0 0.0
    %3418 = vmatpush2.msra.mxu0 0.0
    %3419 = vmatprep.subr.mxu0 0.0
    %3420 = vmatpush2.msra.mxu0 0.0
    %3421 = vmatprep.subr.mxu0 0.0
    %3422 = vmatpush2.msra.mxu0 0.0
    %3423 = vmatprep.subr.mxu0 0.0
    %3424 = vmatpush2.msra.mxu0 0.0
    %3425 = vmatprep.subr.mxu0 0.0
    %3426 = vmatpush2.msra.mxu0 0.0
    %3427 = vmatprep.subr.mxu0 0.0
    %3428 = vmatpush2.msra.mxu0 0.0
    %3429 = vmatprep.subr.mxu0 0.0
    %3430 = vmatpush2.msra.mxu0 0.0
    %3431 = vmatprep.subr.mxu0 0.0
    %3432 = vmatpush2.msra.mxu0 0.0
    %3433 = vmatprep.subr.mxu0 0.0
    %3434 = vmatpush2.msra.mxu0 0.0
    %3435 = vmatprep.subr.mxu0 0.0
    %3436 = vmatpush2.msra.mxu0 0.0
    %3437 = vmatprep.subr.mxu0 0.0
    %3438 = vmatpush2.msra.mxu0 0.0
    %3439 = vmatprep.subr.mxu0 0.0
    %3440 = vmatpush2.msra.mxu0 0.0
    %3441 = vmatprep.subr.mxu0 0.0
    %3442 = vmatpush2.msra.mxu0 0.0
    %3443 = vmatprep.subr.mxu0 0.0
    %3444 = vmatpush2.msra.mxu0 0.0
    %3445 = vmatprep.subr.mxu0 0.0
    %3446 = vmatpush2.msra.mxu0 0.0
    %3447 = vmatprep.subr.mxu0 0.0
    %3448 = vmatpush2.msra.mxu0 0.0
    %3449 = vmatprep.mubr.f32.mxu0 0.0
    %3450 = vmatmul.mubr.f32.gmra.mxu0 %v3383
    %v3451 = vpop.f32.mrf.mxu0
    %v3452 = vadd.f32 0.0, %v3451
    %v3453 = vpop.f32.mrf.mxu0
    %3454 = vdwg.mxu0
    %v3456 = vrot.slane %v3452, 7
    %v3458 = vsel %vm316, %v3363, %v3456
    %v3459 = vxor.u32 %v3108, 2147483648
    %v3460 = vmul.f32 %v3459, 1.442695
    %v3461 = vpow.pop %v3460
    %v3462 = vadd.f32 %v3461, 1.0
    %v3463 = vrcp.pop %v3462
    %v3464 = vmul.f32 1.0, %v3463
    %3466 = vrot.lane.b32.xlu0 %v3458, 16
    %v3467 = vpop.permute.xlu0 %3466
    %v3469 = vmul.f32 %v3464, %v3467
    %3471 = vrot.lane.b32.xlu0 %v3469, 112
    %v3472 = vpop.permute.xlu0 %3471
    %v3473 = vsel %vm197, %v3472, 0
    %3475 = vmatprep.subr.mxu0 0.0
    %3476 = vmatpush1.msra.mxu0 0.0
    %3477 = vmatprep.subr.mxu0 0.0
    %3478 = vmatpush1.msra.mxu0 0.0
    %3479 = vmatprep.subr.mxu0 0.0
    %3480 = vmatpush1.msra.mxu0 0.0
    %3481 = vmatprep.subr.mxu0 0.0
    %3482 = vmatpush1.msra.mxu0 0.0
    %3483 = vmatprep.subr.mxu0 0.0
    %3484 = vmatpush1.msra.mxu0 0.0
    %3485 = vmatprep.subr.mxu0 0.0
    %3486 = vmatpush1.msra.mxu0 0.0
    %3487 = vmatprep.subr.mxu0 0.0
    %3488 = vmatpush1.msra.mxu0 0.0
    %3489 = vmatprep.subr.mxu0 0.0
    %3490 = vmatpush1.msra.mxu0 0.0
    %3491 = vmatprep.subr.mxu0 0.0
    %3492 = vmatpush1.msra.mxu0 0.0
    %3493 = vmatprep.subr.mxu0 0.0
    %3494 = vmatpush1.msra.mxu0 0.0
    %3495 = vmatprep.subr.mxu0 0.0
    %3496 = vmatpush1.msra.mxu0 0.0
    %3497 = vmatprep.subr.mxu0 0.0
    %3498 = vmatpush1.msra.mxu0 0.0
    %3499 = vmatprep.subr.mxu0 0.0
    %3500 = vmatpush1.msra.mxu0 %v71
    %3501 = vmatprep.subr.mxu0 0.0
    %3502 = vmatpush1.msra.mxu0 %v70
    %3503 = vmatprep.subr.mxu0 0.0
    %3504 = vmatpush1.msra.mxu0 %v69
    %3505 = vmatprep.subr.mxu0 0.0
    %3506 = vmatpush1.msra.mxu0 %v68
    %3507 = vmatprep.subr.mxu0 0.0
    %3508 = vmatpush2.msra.mxu0 0.0
    %3509 = vmatprep.subr.mxu0 0.0
    %3510 = vmatpush2.msra.mxu0 0.0
    %3511 = vmatprep.subr.mxu0 0.0
    %3512 = vmatpush2.msra.mxu0 0.0
    %3513 = vmatprep.subr.mxu0 0.0
    %3514 = vmatpush2.msra.mxu0 0.0
    %3515 = vmatprep.subr.mxu0 0.0
    %3516 = vmatpush2.msra.mxu0 0.0
    %3517 = vmatprep.subr.mxu0 0.0
    %3518 = vmatpush2.msra.mxu0 0.0
    %3519 = vmatprep.subr.mxu0 0.0
    %3520 = vmatpush2.msra.mxu0 0.0
    %3521 = vmatprep.subr.mxu0 0.0
    %3522 = vmatpush2.msra.mxu0 0.0
    %3523 = vmatprep.subr.mxu0 0.0
    %3524 = vmatpush2.msra.mxu0 0.0
    %3525 = vmatprep.subr.mxu0 0.0
    %3526 = vmatpush2.msra.mxu0 0.0
    %3527 = vmatprep.subr.mxu0 0.0
    %3528 = vmatpush2.msra.mxu0 0.0
    %3529 = vmatprep.subr.mxu0 0.0
    %3530 = vmatpush2.msra.mxu0 0.0
    %3531 = vmatprep.subr.mxu0 0.0
    %3532 = vmatpush2.msra.mxu0 0.0
    %3533 = vmatprep.subr.mxu0 0.0
    %3534 = vmatpush2.msra.mxu0 0.0
    %3535 = vmatprep.subr.mxu0 0.0
    %3536 = vmatpush2.msra.mxu0 0.0
    %3537 = vmatprep.subr.mxu0 0.0
    %3538 = vmatpush2.msra.mxu0 0.0
    %3539 = vmatprep.mubr.f32.mxu0 0.0
    %3540 = vmatmul.mubr.f32.gmra.mxu0 %v3473
    %v3541 = vpop.f32.mrf.mxu0
    %v3542 = vadd.f32 0.0, %v3541
    %v3543 = vpop.f32.mrf.mxu0
    %3544 = vdwg.mxu0
    %v3545 = vadd.f32 %v480, %v3542
    %3546 = vmatprep.subr.mxu0 0.0
    %3547 = vmatpush1.msra.mxu0 0.0
    %3548 = vmatprep.subr.mxu0 0.0
    %3549 = vmatpush1.msra.mxu0 0.0
    %3550 = vmatprep.subr.mxu0 0.0
    %3551 = vmatpush1.msra.mxu0 0.0
    %3552 = vmatprep.subr.mxu0 0.0
    %3553 = vmatpush1.msra.mxu0 0.0
    %3554 = vmatprep.subr.mxu0 0.0
    %3555 = vmatpush1.msra.mxu0 0.0
    %3556 = vmatprep.subr.mxu0 0.0
    %3557 = vmatpush1.msra.mxu0 0.0
    %3558 = vmatprep.subr.mxu0 0.0
    %3559 = vmatpush1.msra.mxu0 0.0
    %3560 = vmatprep.subr.mxu0 0.0
    %3561 = vmatpush1.msra.mxu0 0.0
    %3562 = vmatprep.subr.mxu0 0.0
    %3563 = vmatpush1.msra.mxu0 0.0
    %3564 = vmatprep.subr.mxu0 0.0
    %3565 = vmatpush1.msra.mxu0 0.0
    %3566 = vmatprep.subr.mxu0 0.0
    %3567 = vmatpush1.msra.mxu0 0.0
    %3568 = vmatprep.subr.mxu0 0.0
    %3569 = vmatpush1.msra.mxu0 0.0
    %3570 = vmatprep.subr.mxu0 0.0
    %3571 = vmatpush1.msra.mxu0 %v75
    %3572 = vmatprep.subr.mxu0 0.0
    %3573 = vmatpush1.msra.mxu0 %v74
    %3574 = vmatprep.subr.mxu0 0.0
    %3575 = vmatpush1.msra.mxu0 %v73
    %3576 = vmatprep.subr.mxu0 0.0
    %3577 = vmatpush1.msra.mxu0 %v72
    %3578 = vmatprep.subr.mxu0 0.0
    %3579 = vmatpush2.msra.mxu0 0.0
    %3580 = vmatprep.subr.mxu0 0.0
    %3581 = vmatpush2.msra.mxu0 0.0
    %3582 = vmatprep.subr.mxu0 0.0
    %3583 = vmatpush2.msra.mxu0 0.0
    %3584 = vmatprep.subr.mxu0 0.0
    %3585 = vmatpush2.msra.mxu0 0.0
    %3586 = vmatprep.subr.mxu0 0.0
    %3587 = vmatpush2.msra.mxu0 0.0
    %3588 = vmatprep.subr.mxu0 0.0
    %3589 = vmatpush2.msra.mxu0 0.0
    %3590 = vmatprep.subr.mxu0 0.0
    %3591 = vmatpush2.msra.mxu0 0.0
    %3592 = vmatprep.subr.mxu0 0.0
    %3593 = vmatpush2.msra.mxu0 0.0
    %3594 = vmatprep.subr.mxu0 0.0
    %3595 = vmatpush2.msra.mxu0 0.0
    %3596 = vmatprep.subr.mxu0 0.0
    %3597 = vmatpush2.msra.mxu0 0.0
    %3598 = vmatprep.subr.mxu0 0.0
    %3599 = vmatpush2.msra.mxu0 0.0
    %3600 = vmatprep.subr.mxu0 0.0
    %3601 = vmatpush2.msra.mxu0 0.0
    %3602 = vmatprep.subr.mxu0 0.0
    %3603 = vmatpush2.msra.mxu0 0.0
    %3604 = vmatprep.subr.mxu0 0.0
    %3605 = vmatpush2.msra.mxu0 0.0
    %3606 = vmatprep.subr.mxu0 0.0
    %3607 = vmatpush2.msra.mxu0 0.0
    %3608 = vmatprep.subr.mxu0 0.0
    %3609 = vmatpush2.msra.mxu0 0.0
    %3610 = vmatprep.mubr.f32.mxu0 0.0
    %3611 = vmatmul.mubr.f32.gmra.mxu0 %v3039
    %v3612 = vpop.f32.mrf.mxu0
    %v3613 = vadd.f32 0.0, %v3612
    %v3614 = vpop.f32.mrf.mxu0
    %3615 = vdwg.mxu0
    %v3616 = vadd.f32 %v3545, %v3613
    %v3617 = vxor.u32 %v3616, 2147483648
    %v3618 = vmul.f32 %v3617, 1.442695
    %v3619 = vpow.pop %v3618
    %v3620 = vadd.f32 %v3619, 1.0
    %v3621 = vrcp.pop %v3620
    %v3622 = vmul.f32 1.0, %v3621
    %v3623 = vtanh.pop %v3616
    %v3625 = vrot.slane %v3034, 6
    %v3627 = vmul.f32 %v3622, %v3625
    %3629 = vrot.lane.b32.xlu0 %v3623, 32
    %v3630 = vpop.permute.xlu0 %3629
    %v3632 = vmul.f32 %v3622, %v3630
    %3634 = vrot.lane.b32.xlu0 %v3632, 32
    %v3635 = vpop.permute.xlu0 %3634
    %v3637 = vadd.f32 %v3627, %v3635
    %v3638 = vtanh.pop %v3637
    %3640 = vrot.lane.b32.xlu0 %v3638, 32
    %v3641 = vpop.permute.xlu0 %3640
    %v3643 = vmul.f32 %v3622, %v3641
    %3645 = vset.pattern.permute.xlu0 0
    %3646 = vperm.xlu0 %3645, %v484
    %v3647 = vpop.permute.xlu0 %3646
    %v3649 = vmul.f32 %v3647, %v3643
    %v3650 = vsub.f32 1.0, %v484
    %3652 = vset.pattern.permute.xlu0 0
    %3653 = vperm.xlu0 %3652, %v3650
    %v3654 = vpop.permute.xlu0 %3653
    %v3657 = vmul.f32 %v3654, %v3038
    %3659 = vrot.lane.b32.xlu0 %v3657, 64
    %v3660 = vpop.permute.xlu0 %3659
    %v3662 = vadd.f32 %v3649, %v3660
    %v3663 = vmul.f32 %v3647, %v3637
    %3664 = vrot.lane.b32.xlu0 %v3625, 96
    %v3665 = vpop.permute.xlu0 %3664
    %v3667 = vmul.f32 %v3654, %v3665
    %3669 = vrot.lane.b32.xlu0 %v3667, 32
    %v3670 = vpop.permute.xlu0 %3669
    %v3672 = vadd.f32 %v3663, %v3670
    %3674 = vrot.lane.b32.xlu0 %v3662, 64
    %v3675 = vpop.permute.xlu0 %3674
    %v3676 = vsel %vm197, %v3675, 0
    %3678 = vmatprep.subr.mxu0 0.0
    %3679 = vmatpush1.msra.mxu0 0.0
    %3680 = vmatprep.subr.mxu0 0.0
    %3681 = vmatpush1.msra.mxu0 0.0
    %3682 = vmatprep.subr.mxu0 0.0
    %3683 = vmatpush1.msra.mxu0 0.0
    %3684 = vmatprep.subr.mxu0 0.0
    %3685 = vmatpush1.msra.mxu0 0.0
    %3686 = vmatprep.subr.mxu0 0.0
    %3687 = vmatpush1.msra.mxu0 0.0
    %3688 = vmatprep.subr.mxu0 0.0
    %3689 = vmatpush1.msra.mxu0 0.0
    %3690 = vmatprep.subr.mxu0 0.0
    %3691 = vmatpush1.msra.mxu0 0.0
    %3692 = vmatprep.subr.mxu0 0.0
    %3693 = vmatpush1.msra.mxu0 0.0
    %3694 = vmatprep.subr.mxu0 0.0
    %3695 = vmatpush1.msra.mxu0 0.0
    %3696 = vmatprep.subr.mxu0 0.0
    %3697 = vmatpush1.msra.mxu0 0.0
    %3698 = vmatprep.subr.mxu0 0.0
    %3699 = vmatpush1.msra.mxu0 0.0
    %3700 = vmatprep.subr.mxu0 0.0
    %3701 = vmatpush1.msra.mxu0 0.0
    %3702 = vmatprep.subr.mxu0 0.0
    %3703 = vmatpush1.msra.mxu0 %v61
    %3704 = vmatprep.subr.mxu0 0.0
    %3705 = vmatpush1.msra.mxu0 %v60
    %3706 = vmatprep.subr.mxu0 0.0
    %3707 = vmatpush1.msra.mxu0 %v59
    %3708 = vmatprep.subr.mxu0 0.0
    %3709 = vmatpush1.msra.mxu0 %v58
    %3710 = vmatprep.subr.mxu0 0.0
    %3711 = vmatpush2.msra.mxu0 0.0
    %3712 = vmatprep.subr.mxu0 0.0
    %3713 = vmatpush2.msra.mxu0 0.0
    %3714 = vmatprep.subr.mxu0 0.0
    %3715 = vmatpush2.msra.mxu0 0.0
    %3716 = vmatprep.subr.mxu0 0.0
    %3717 = vmatpush2.msra.mxu0 0.0
    %3718 = vmatprep.subr.mxu0 0.0
    %3719 = vmatpush2.msra.mxu0 0.0
    %3720 = vmatprep.subr.mxu0 0.0
    %3721 = vmatpush2.msra.mxu0 0.0
    %3722 = vmatprep.subr.mxu0 0.0
    %3723 = vmatpush2.msra.mxu0 0.0
    %3724 = vmatprep.subr.mxu0 0.0
    %3725 = vmatpush2.msra.mxu0 0.0
    %3726 = vmatprep.subr.mxu0 0.0
    %3727 = vmatpush2.msra.mxu0 0.0
    %3728 = vmatprep.subr.mxu0 0.0
    %3729 = vmatpush2.msra.mxu0 0.0
    %3730 = vmatprep.subr.mxu0 0.0
    %3731 = vmatpush2.msra.mxu0 0.0
    %3732 = vmatprep.subr.mxu0 0.0
    %3733 = vmatpush2.msra.mxu0 0.0
    %3734 = vmatprep.subr.mxu0 0.0
    %3735 = vmatpush2.msra.mxu0 0.0
    %3736 = vmatprep.subr.mxu0 0.0
    %3737 = vmatpush2.msra.mxu0 0.0
    %3738 = vmatprep.subr.mxu0 0.0
    %3739 = vmatpush2.msra.mxu0 0.0
    %3740 = vmatprep.subr.mxu0 0.0
    %3741 = vmatpush2.msra.mxu0 0.0
    %3742 = vmatprep.mubr.f32.mxu0 0.0
    %3743 = vmatmul.mubr.f32.gmra.mxu0 %v3676
    %v3744 = vpop.f32.mrf.mxu0
    %v3745 = vadd.f32 %v488, %v3744
    %v3746 = vpop.f32.mrf.mxu0
    %3747 = vdwg.mxu0
    %v3750 = vunpack.c.l.s4 1966171168
    %v3751 = vunpack.c.0.s8 %v3750
    %v3752 = vlaneseq
    %v3753 = vshrl.u32 %v3752, 7
    %v3754 = vsub.s32 %v3751, %v3753
    %v3755 = vrot.slane %v3745, %v3754
    %v3756 = vcombine.high %v3755, %v3755
    %v3758 = vunpack.c.l.s4 1966171168
    %v3759 = vunpack.c.0.s8 %v3758
    %v3760 = vlaneseq
    %v3761 = vshrl.u32 %v3760, 7
    %v3762 = vsub.s32 %v3759, %v3761
    %v3763 = vrot.slane %v3755, %v3762
    %v3765 = vunpack.c.l.s4 1966171168
    %v3766 = vunpack.c.0.s8 %v3765
    %v3767 = vlaneseq
    %v3768 = vshrl.u32 %v3767, 7
    %v3769 = vsub.s32 %v3766, %v3768
    %v3770 = vrot.slane %v3756, %v3769
    %v3771 = vlaneseq
    %v3772 = vshrl.u32 %v3771, 7
    %v3773 = vsub.s32 0, %v3772
    %v3774 = vrot.slane %v3763, %v3773
    %v3775 = vlaneseq
    %v3776 = vshrl.u32 %v3775, 7
    %v3777 = vsub.s32 0, %v3776
    %v3778 = vrot.slane %v3770, %v3777
    %v3781 = vadd.f32 %v277, %v3774
    %v3782 = vadd.f32 %v282, %v3774
    %v3783 = vadd.f32 %v287, %v3778
    %v3784 = vadd.f32 %v292, %v3778
    %v3785 = vmax.f32 %v3781, 0.0
    %v3786 = vmax.f32 %v3782, 0.0
    %v3787 = vmax.f32 %v3783, 0.0
    %v3788 = vmax.f32 %v3784, 0.0
    %v3789 = vmul.f32 %v3785, %v606
    %v3790 = vmul.f32 %v3786, %v606
    %v3791 = vmul.f32 %v3787, %v606
    %v3792 = vmul.f32 %v3788, %v606
    %v3793 = vsel %vm401, %v3789, 0.0
    %3794 = vadd.xlane.f32.xlu0 %v3793
    %v3795 = vpop.xlane.xlu0 %3794
    %v3796 = vsel %vm401, %v3790, 0.0
    %3797 = vadd.xlane.f32.xlu0 %v3796
    %v3798 = vpop.xlane.xlu0 %3797
    %v3799 = vsel %vm401, %v3791, 0.0
    %3800 = vadd.xlane.f32.xlu0 %v3799
    %v3801 = vpop.xlane.xlu0 %3800
    %v3802 = vsel %vm401, %v3792, 0.0
    %3803 = vadd.xlane.f32.xlu0 %v3802
    %v3804 = vpop.xlane.xlu0 %3803
    %v3805 = vadd.f32 %v3795, %v627
    %v3806 = vadd.f32 %v3798, %v627
    %v3807 = vadd.f32 %v3801, %v627
    %v3808 = vadd.f32 %v3804, %v627
    %v3813 = vlaneseq
    %v3814 = vshrl.u32 %v3813, 7
    %v3815 = vsub.s32 %v638, %v3814
    %v3816 = vrot.slane %v3805, %v3815
    %v3817 = vlaneseq
    %v3818 = vshrl.u32 %v3817, 7
    %v3819 = vsub.s32 %v643, %v3818
    %v3820 = vrot.slane %v3806, %v3819
    %v3821 = vsel %vm648, %v3820, %v3816
    %v3822 = vlaneseq
    %v3823 = vshrl.u32 %v3822, 7
    %v3824 = vsub.s32 %v638, %v3823
    %v3825 = vrot.slane %v3807, %v3824
    %v3826 = vlaneseq
    %v3827 = vshrl.u32 %v3826, 7
    %v3828 = vsub.s32 %v643, %v3827
    %v3829 = vrot.slane %v3808, %v3828
    %v3830 = vsel %vm648, %v3829, %v3825
    %v3831 = vsel %vm659, %v3830, %v3821
    %v3833 = vsel %vm662, %v3831, -inf
    %3834 = vmax.xlane.f32.xlu0 %v3833
    %v3835 = vpop.xlane.xlu0 %3834
    %v3837 = vlaneseq
    %v3838 = vshrl.u32 %v3837, 7
    %v3839 = vsub.s32 0, %v3838
    %v3840 = vrot.slane %v3835, %v3839
    %v3841 = vlaneseq
    %v3842 = vshrl.u32 %v3841, 7
    %v3843 = vsub.s32 1, %v3842
    %v3844 = vrot.slane %v3835, %v3843
    %v3847 = vsub.f32 %v3805, %v3840
    %v3848 = vsub.f32 %v3806, %v3840
    %v3849 = vsub.f32 %v3807, %v3844
    %v3850 = vsub.f32 %v3808, %v3844
    %v3851 = vmul.f32 %v3847, 1.442695
    %v3852 = vpow.pop %v3851
    %v3853 = vmul.f32 %v3848, 1.442695
    %v3854 = vpow.pop %v3853
    %v3855 = vmul.f32 %v3849, 1.442695
    %v3856 = vpow.pop %v3855
    %v3857 = vmul.f32 %v3850, 1.442695
    %v3858 = vpow.pop %v3857
    %3863 = vset.pattern.permute.xlu0 0
    %3864 = vperm.xlu0 %3863, %v3852
    %v3865 = vpop.permute.xlu0 %3864
    %3866 = vset.pattern.permute.xlu0 0
    %3867 = vperm.xlu0 %3866, %v3854
    %v3868 = vpop.permute.xlu0 %3867
    %3869 = vset.pattern.permute.xlu0 0
    %3870 = vperm.xlu0 %3869, %v3856
    %v3871 = vpop.permute.xlu0 %3870
    %3872 = vset.pattern.permute.xlu0 0
    %3873 = vperm.xlu0 %3872, %v3858
    %v3874 = vpop.permute.xlu0 %3873
    %v3875 = vlaneseq
    %v3876 = vshrl.u32 %v3875, 7
    %v3877 = vsub.s32 %v638, %v3876
    %v3878 = vrot.slane %v3865, %v3877
    %v3879 = vlaneseq
    %v3880 = vshrl.u32 %v3879, 7
    %v3881 = vsub.s32 %v643, %v3880
    %v3882 = vrot.slane %v3868, %v3881
    %v3883 = vsel %vm648, %v3882, %v3878
    %v3884 = vlaneseq
    %v3885 = vshrl.u32 %v3884, 7
    %v3886 = vsub.s32 %v638, %v3885
    %v3887 = vrot.slane %v3871, %v3886
    %v3888 = vlaneseq
    %v3889 = vshrl.u32 %v3888, 7
    %v3890 = vsub.s32 %v643, %v3889
    %v3891 = vrot.slane %v3874, %v3890
    %v3892 = vsel %vm648, %v3891, %v3887
    %v3893 = vsel %vm659, %v3892, %v3883
    %v3895 = vsel %vm662, %v3893, 0.0
    %3896 = vadd.xlane.f32.xlu0 %v3895
    %v3897 = vpop.xlane.xlu0 %3896
    %v3898 = vrcp.pop %v3897
    %v3900 = vlaneseq
    %v3901 = vshrl.u32 %v3900, 7
    %v3902 = vsub.s32 0, %v3901
    %v3903 = vrot.slane %v3898, %v3902
    %v3904 = vlaneseq
    %v3905 = vshrl.u32 %v3904, 7
    %v3906 = vsub.s32 1, %v3905
    %v3907 = vrot.slane %v3898, %v3906
    %v3910 = vmul.f32 %v3852, %v3903
    %v3911 = vmul.f32 %v3854, %v3903
    %v3912 = vmul.f32 %v3856, %v3907
    %v3913 = vmul.f32 %v3858, %v3907
    %3916 = vset.pattern.permute.xlu0 0
    %3917 = vperm.xlu0 %3916, %v3910
    %v3918 = vpop.permute.xlu0 %3917
    %3919 = vset.pattern.permute.xlu0 0
    %3920 = vperm.xlu0 %3919, %v3911
    %v3921 = vpop.permute.xlu0 %3920
    %v3922 = vlaneseq
    %v3923 = vshrl.u32 %v3922, 7
    %v3924 = vsub.s32 %v638, %v3923
    %v3925 = vrot.slane %v3918, %v3924
    %v3926 = vlaneseq
    %v3927 = vshrl.u32 %v3926, 7
    %v3928 = vsub.s32 %v643, %v3927
    %v3929 = vrot.slane %v3921, %v3928
    %v3930 = vsel %vm648, %v3929, %v3925
    %v3931 = vsel %vm401, %v3930, 0
    %3933 = vmatprep.subr.mxu0 0.0
    %3934 = vmatpush1.msra.mxu0 0.0
    %3935 = vmatprep.subr.mxu0 0.0
    %3936 = vmatpush1.msra.mxu0 0.0
    %3937 = vmatprep.subr.mxu0 0.0
    %3938 = vmatpush1.msra.mxu0 0.0
    %3939 = vmatprep.subr.mxu0 0.0
    %3940 = vmatpush1.msra.mxu0 0.0
    %3941 = vmatprep.subr.mxu0 0.0
    %3942 = vmatpush1.msra.mxu0 0.0
    %3943 = vmatprep.subr.mxu0 0.0
    %3944 = vmatpush1.msra.mxu0 0.0
    %3945 = vmatprep.subr.mxu0 0.0
    %3946 = vmatpush1.msra.mxu0 0.0
    %3947 = vmatprep.subr.mxu0 0.0
    %3948 = vmatpush1.msra.mxu0 0.0
    %3949 = vmatprep.subr.mxu0 0.0
    %3950 = vmatpush1.msra.mxu0 0.0
    %3951 = vmatprep.subr.mxu0 0.0
    %3952 = vmatpush1.msra.mxu0 0.0
    %3953 = vmatprep.subr.mxu0 0.0
    %3954 = vmatpush1.msra.mxu0 0.0
    %3955 = vmatprep.subr.mxu0 0.0
    %3956 = vmatpush1.msra.mxu0 0.0
    %3957 = vmatprep.subr.mxu0 0.0
    %3958 = vmatpush1.msra.mxu0 0.0
    %3959 = vmatprep.subr.mxu0 0.0
    %3960 = vmatpush1.msra.mxu0 0.0
    %3961 = vmatprep.subr.mxu0 0.0
    %3962 = vmatpush1.msra.mxu0 %v180
    %3963 = vmatprep.subr.mxu0 0.0
    %3964 = vmatpush1.msra.mxu0 %v175
    %3965 = vmatprep.subr.mxu0 0.0
    %3966 = vmatpush2.msra.mxu0 0.0
    %3967 = vmatprep.subr.mxu0 0.0
    %3968 = vmatpush2.msra.mxu0 0.0
    %3969 = vmatprep.subr.mxu0 0.0
    %3970 = vmatpush2.msra.mxu0 0.0
    %3971 = vmatprep.subr.mxu0 0.0
    %3972 = vmatpush2.msra.mxu0 0.0
    %3973 = vmatprep.subr.mxu0 0.0
    %3974 = vmatpush2.msra.mxu0 0.0
    %3975 = vmatprep.subr.mxu0 0.0
    %3976 = vmatpush2.msra.mxu0 0.0
    %3977 = vmatprep.subr.mxu0 0.0
    %3978 = vmatpush2.msra.mxu0 0.0
    %3979 = vmatprep.subr.mxu0 0.0
    %3980 = vmatpush2.msra.mxu0 0.0
    %3981 = vmatprep.subr.mxu0 0.0
    %3982 = vmatpush2.msra.mxu0 0.0
    %3983 = vmatprep.subr.mxu0 0.0
    %3984 = vmatpush2.msra.mxu0 0.0
    %3985 = vmatprep.subr.mxu0 0.0
    %3986 = vmatpush2.msra.mxu0 0.0
    %3987 = vmatprep.subr.mxu0 0.0
    %3988 = vmatpush2.msra.mxu0 0.0
    %3989 = vmatprep.subr.mxu0 0.0
    %3990 = vmatpush2.msra.mxu0 0.0
    %3991 = vmatprep.subr.mxu0 0.0
    %3992 = vmatpush2.msra.mxu0 0.0
    %3993 = vmatprep.subr.mxu0 0.0
    %3994 = vmatpush2.msra.mxu0 0.0
    %3995 = vmatprep.subr.mxu0 0.0
    %3996 = vmatpush2.msra.mxu0 0.0
    %3997 = vmatprep.mubr.f32.mxu0 0.0
    %3998 = vmatmul.mubr.f32.gmra.mxu0 %v3931
    %v3999 = vpop.f32.mrf.mxu0
    %v4000 = vadd.f32 0.0, %v3999
    %v4001 = vpop.f32.mrf.mxu0
    %4002 = vdwg.mxu0
    %4005 = vset.pattern.permute.xlu0 0
    %4006 = vperm.xlu0 %4005, %v3912
    %v4007 = vpop.permute.xlu0 %4006
    %4008 = vset.pattern.permute.xlu0 0
    %4009 = vperm.xlu0 %4008, %v3913
    %v4010 = vpop.permute.xlu0 %4009
    %v4011 = vlaneseq
    %v4012 = vshrl.u32 %v4011, 7
    %v4013 = vsub.s32 %v638, %v4012
    %v4014 = vrot.slane %v4007, %v4013
    %v4015 = vlaneseq
    %v4016 = vshrl.u32 %v4015, 7
    %v4017 = vsub.s32 %v643, %v4016
    %v4018 = vrot.slane %v4010, %v4017
    %v4019 = vsel %vm648, %v4018, %v4014
    %v4020 = vsel %vm401, %v4019, 0
    %4022 = vmatprep.subr.mxu0 0.0
    %4023 = vmatpush1.msra.mxu0 0.0
    %4024 = vmatprep.subr.mxu0 0.0
    %4025 = vmatpush1.msra.mxu0 0.0
    %4026 = vmatprep.subr.mxu0 0.0
    %4027 = vmatpush1.msra.mxu0 0.0
    %4028 = vmatprep.subr.mxu0 0.0
    %4029 = vmatpush1.msra.mxu0 0.0
    %4030 = vmatprep.subr.mxu0 0.0
    %4031 = vmatpush1.msra.mxu0 0.0
    %4032 = vmatprep.subr.mxu0 0.0
    %4033 = vmatpush1.msra.mxu0 0.0
    %4034 = vmatprep.subr.mxu0 0.0
    %4035 = vmatpush1.msra.mxu0 0.0
    %4036 = vmatprep.subr.mxu0 0.0
    %4037 = vmatpush1.msra.mxu0 0.0
    %4038 = vmatprep.subr.mxu0 0.0
    %4039 = vmatpush1.msra.mxu0 0.0
    %4040 = vmatprep.subr.mxu0 0.0
    %4041 = vmatpush1.msra.mxu0 0.0
    %4042 = vmatprep.subr.mxu0 0.0
    %4043 = vmatpush1.msra.mxu0 0.0
    %4044 = vmatprep.subr.mxu0 0.0
    %4045 = vmatpush1.msra.mxu0 0.0
    %4046 = vmatprep.subr.mxu0 0.0
    %4047 = vmatpush1.msra.mxu0 0.0
    %4048 = vmatprep.subr.mxu0 0.0
    %4049 = vmatpush1.msra.mxu0 0.0
    %4050 = vmatprep.subr.mxu0 0.0
    %4051 = vmatpush1.msra.mxu0 %v190
    %4052 = vmatprep.subr.mxu0 0.0
    %4053 = vmatpush1.msra.mxu0 %v185
    %4054 = vmatprep.subr.mxu0 0.0
    %4055 = vmatpush2.msra.mxu0 0.0
    %4056 = vmatprep.subr.mxu0 0.0
    %4057 = vmatpush2.msra.mxu0 0.0
    %4058 = vmatprep.subr.mxu0 0.0
    %4059 = vmatpush2.msra.mxu0 0.0
    %4060 = vmatprep.subr.mxu0 0.0
    %4061 = vmatpush2.msra.mxu0 0.0
    %4062 = vmatprep.subr.mxu0 0.0
    %4063 = vmatpush2.msra.mxu0 0.0
    %4064 = vmatprep.subr.mxu0 0.0
    %4065 = vmatpush2.msra.mxu0 0.0
    %4066 = vmatprep.subr.mxu0 0.0
    %4067 = vmatpush2.msra.mxu0 0.0
    %4068 = vmatprep.subr.mxu0 0.0
    %4069 = vmatpush2.msra.mxu0 0.0
    %4070 = vmatprep.subr.mxu0 0.0
    %4071 = vmatpush2.msra.mxu0 0.0
    %4072 = vmatprep.subr.mxu0 0.0
    %4073 = vmatpush2.msra.mxu0 0.0
    %4074 = vmatprep.subr.mxu0 0.0
    %4075 = vmatpush2.msra.mxu0 0.0
    %4076 = vmatprep.subr.mxu0 0.0
    %4077 = vmatpush2.msra.mxu0 0.0
    %4078 = vmatprep.subr.mxu0 0.0
    %4079 = vmatpush2.msra.mxu0 0.0
    %4080 = vmatprep.subr.mxu0 0.0
    %4081 = vmatpush2.msra.mxu0 0.0
    %4082 = vmatprep.subr.mxu0 0.0
    %4083 = vmatpush2.msra.mxu0 0.0
    %4084 = vmatprep.subr.mxu0 0.0
    %4085 = vmatpush2.msra.mxu0 0.0
    %4086 = vmatprep.mubr.f32.mxu0 0.0
    %4087 = vmatmul.mubr.f32.gmra.mxu0 %v4020
    %v4088 = vpop.f32.mrf.mxu0
    %v4089 = vadd.f32 0.0, %v4088
    %v4090 = vpop.f32.mrf.mxu0
    %4091 = vdwg.mxu0
    %v4093 = vrot.slane %v4089, 7
    %v4095 = vsel %vm316, %v4000, %v4093
    %v4096 = vxor.u32 %v3745, 2147483648
    %v4097 = vmul.f32 %v4096, 1.442695
    %v4098 = vpow.pop %v4097
    %v4099 = vadd.f32 %v4098, 1.0
    %v4100 = vrcp.pop %v4099
    %v4101 = vmul.f32 1.0, %v4100
    %4103 = vrot.lane.b32.xlu0 %v4095, 16
    %v4104 = vpop.permute.xlu0 %4103
    %v4106 = vmul.f32 %v4101, %v4104
    %4108 = vrot.lane.b32.xlu0 %v4106, 112
    %v4109 = vpop.permute.xlu0 %4108
    %v4110 = vsel %vm197, %v4109, 0
    %4112 = vmatprep.subr.mxu0 0.0
    %4113 = vmatpush1.msra.mxu0 0.0
    %4114 = vmatprep.subr.mxu0 0.0
    %4115 = vmatpush1.msra.mxu0 0.0
    %4116 = vmatprep.subr.mxu0 0.0
    %4117 = vmatpush1.msra.mxu0 0.0
    %4118 = vmatprep.subr.mxu0 0.0
    %4119 = vmatpush1.msra.mxu0 0.0
    %4120 = vmatprep.subr.mxu0 0.0
    %4121 = vmatpush1.msra.mxu0 0.0
    %4122 = vmatprep.subr.mxu0 0.0
    %4123 = vmatpush1.msra.mxu0 0.0
    %4124 = vmatprep.subr.mxu0 0.0
    %4125 = vmatpush1.msra.mxu0 0.0
    %4126 = vmatprep.subr.mxu0 0.0
    %4127 = vmatpush1.msra.mxu0 0.0
    %4128 = vmatprep.subr.mxu0 0.0
    %4129 = vmatpush1.msra.mxu0 0.0
    %4130 = vmatprep.subr.mxu0 0.0
    %4131 = vmatpush1.msra.mxu0 0.0
    %4132 = vmatprep.subr.mxu0 0.0
    %4133 = vmatpush1.msra.mxu0 0.0
    %4134 = vmatprep.subr.mxu0 0.0
    %4135 = vmatpush1.msra.mxu0 0.0
    %4136 = vmatprep.subr.mxu0 0.0
    %4137 = vmatpush1.msra.mxu0 %v71
    %4138 = vmatprep.subr.mxu0 0.0
    %4139 = vmatpush1.msra.mxu0 %v70
    %4140 = vmatprep.subr.mxu0 0.0
    %4141 = vmatpush1.msra.mxu0 %v69
    %4142 = vmatprep.subr.mxu0 0.0
    %4143 = vmatpush1.msra.mxu0 %v68
    %4144 = vmatprep.subr.mxu0 0.0
    %4145 = vmatpush2.msra.mxu0 0.0
    %4146 = vmatprep.subr.mxu0 0.0
    %4147 = vmatpush2.msra.mxu0 0.0
    %4148 = vmatprep.subr.mxu0 0.0
    %4149 = vmatpush2.msra.mxu0 0.0
    %4150 = vmatprep.subr.mxu0 0.0
    %4151 = vmatpush2.msra.mxu0 0.0
    %4152 = vmatprep.subr.mxu0 0.0
    %4153 = vmatpush2.msra.mxu0 0.0
    %4154 = vmatprep.subr.mxu0 0.0
    %4155 = vmatpush2.msra.mxu0 0.0
    %4156 = vmatprep.subr.mxu0 0.0
    %4157 = vmatpush2.msra.mxu0 0.0
    %4158 = vmatprep.subr.mxu0 0.0
    %4159 = vmatpush2.msra.mxu0 0.0
    %4160 = vmatprep.subr.mxu0 0.0
    %4161 = vmatpush2.msra.mxu0 0.0
    %4162 = vmatprep.subr.mxu0 0.0
    %4163 = vmatpush2.msra.mxu0 0.0
    %4164 = vmatprep.subr.mxu0 0.0
    %4165 = vmatpush2.msra.mxu0 0.0
    %4166 = vmatprep.subr.mxu0 0.0
    %4167 = vmatpush2.msra.mxu0 0.0
    %4168 = vmatprep.subr.mxu0 0.0
    %4169 = vmatpush2.msra.mxu0 0.0
    %4170 = vmatprep.subr.mxu0 0.0
    %4171 = vmatpush2.msra.mxu0 0.0
    %4172 = vmatprep.subr.mxu0 0.0
    %4173 = vmatpush2.msra.mxu0 0.0
    %4174 = vmatprep.subr.mxu0 0.0
    %4175 = vmatpush2.msra.mxu0 0.0
    %4176 = vmatprep.mubr.f32.mxu0 0.0
    %4177 = vmatmul.mubr.f32.gmra.mxu0 %v4110
    %v4178 = vpop.f32.mrf.mxu0
    %v4179 = vadd.f32 0.0, %v4178
    %v4180 = vpop.f32.mrf.mxu0
    %4181 = vdwg.mxu0
    %v4183 = vrot.slane %v4179, 6
    %v4185 = vadd.f32 %v480, %v4183
    %4186 = vmatprep.subr.mxu0 0.0
    %4187 = vmatpush1.msra.mxu0 0.0
    %4188 = vmatprep.subr.mxu0 0.0
    %4189 = vmatpush1.msra.mxu0 0.0
    %4190 = vmatprep.subr.mxu0 0.0
    %4191 = vmatpush1.msra.mxu0 0.0
    %4192 = vmatprep.subr.mxu0 0.0
    %4193 = vmatpush1.msra.mxu0 0.0
    %4194 = vmatprep.subr.mxu0 0.0
    %4195 = vmatpush1.msra.mxu0 0.0
    %4196 = vmatprep.subr.mxu0 0.0
    %4197 = vmatpush1.msra.mxu0 0.0
    %4198 = vmatprep.subr.mxu0 0.0
    %4199 = vmatpush1.msra.mxu0 0.0
    %4200 = vmatprep.subr.mxu0 0.0
    %4201 = vmatpush1.msra.mxu0 0.0
    %4202 = vmatprep.subr.mxu0 0.0
    %4203 = vmatpush1.msra.mxu0 0.0
    %4204 = vmatprep.subr.mxu0 0.0
    %4205 = vmatpush1.msra.mxu0 0.0
    %4206 = vmatprep.subr.mxu0 0.0
    %4207 = vmatpush1.msra.mxu0 0.0
    %4208 = vmatprep.subr.mxu0 0.0
    %4209 = vmatpush1.msra.mxu0 0.0
    %4210 = vmatprep.subr.mxu0 0.0
    %4211 = vmatpush1.msra.mxu0 %v75
    %4212 = vmatprep.subr.mxu0 0.0
    %4213 = vmatpush1.msra.mxu0 %v74
    %4214 = vmatprep.subr.mxu0 0.0
    %4215 = vmatpush1.msra.mxu0 %v73
    %4216 = vmatprep.subr.mxu0 0.0
    %4217 = vmatpush1.msra.mxu0 %v72
    %4218 = vmatprep.subr.mxu0 0.0
    %4219 = vmatpush2.msra.mxu0 0.0
    %4220 = vmatprep.subr.mxu0 0.0
    %4221 = vmatpush2.msra.mxu0 0.0
    %4222 = vmatprep.subr.mxu0 0.0
    %4223 = vmatpush2.msra.mxu0 0.0
    %4224 = vmatprep.subr.mxu0 0.0
    %4225 = vmatpush2.msra.mxu0 0.0
    %4226 = vmatprep.subr.mxu0 0.0
    %4227 = vmatpush2.msra.mxu0 0.0
    %4228 = vmatprep.subr.mxu0 0.0
    %4229 = vmatpush2.msra.mxu0 0.0
    %4230 = vmatprep.subr.mxu0 0.0
    %4231 = vmatpush2.msra.mxu0 0.0
    %4232 = vmatprep.subr.mxu0 0.0
    %4233 = vmatpush2.msra.mxu0 0.0
    %4234 = vmatprep.subr.mxu0 0.0
    %4235 = vmatpush2.msra.mxu0 0.0
    %4236 = vmatprep.subr.mxu0 0.0
    %4237 = vmatpush2.msra.mxu0 0.0
    %4238 = vmatprep.subr.mxu0 0.0
    %4239 = vmatpush2.msra.mxu0 0.0
    %4240 = vmatprep.subr.mxu0 0.0
    %4241 = vmatpush2.msra.mxu0 0.0
    %4242 = vmatprep.subr.mxu0 0.0
    %4243 = vmatpush2.msra.mxu0 0.0
    %4244 = vmatprep.subr.mxu0 0.0
    %4245 = vmatpush2.msra.mxu0 0.0
    %4246 = vmatprep.subr.mxu0 0.0
    %4247 = vmatpush2.msra.mxu0 0.0
    %4248 = vmatprep.subr.mxu0 0.0
    %4249 = vmatpush2.msra.mxu0 0.0
    %4250 = vmatprep.mubr.f32.mxu0 0.0
    %4251 = vmatmul.mubr.f32.gmra.mxu0 %v3676
    %v4252 = vpop.f32.mrf.mxu0
    %v4253 = vadd.f32 0.0, %v4252
    %v4254 = vpop.f32.mrf.mxu0
    %4255 = vdwg.mxu0
    %v4257 = vrot.slane %v4253, 6
    %v4259 = vadd.f32 %v4185, %v4257
    %v4260 = vxor.u32 %v4259, 2147483648
    %v4261 = vmul.f32 %v4260, 1.442695
    %v4262 = vpow.pop %v4261
    %v4263 = vadd.f32 %v4262, 1.0
    %v4264 = vrcp.pop %v4263
    %v4265 = vmul.f32 1.0, %v4264
    %v4266 = vtanh.pop %v4259
    %v4268 = vrot.slane %v3672, 6
    %v4270 = vmul.f32 %v4265, %v4268
    %4272 = vrot.lane.b32.xlu0 %v4266, 32
    %v4273 = vpop.permute.xlu0 %4272
    %v4275 = vmul.f32 %v4265, %v4273
    %4277 = vrot.lane.b32.xlu0 %v4275, 32
    %v4278 = vpop.permute.xlu0 %4277
    %v4280 = vadd.f32 %v4270, %v4278
    %v4281 = vtanh.pop %v4280
    %4283 = vrot.lane.b32.xlu0 %v4281, 32
    %v4284 = vpop.permute.xlu0 %4283
    %v4286 = vmul.f32 %v4265, %v4284
    %v4287 = vmul.f32 %v3647, %v4286
    %v4288 = vrot.slane %v3662, 6
    %4289 = vrot.lane.b32.xlu0 %v4288, 64
    %v4290 = vpop.permute.xlu0 %4289
    %v4292 = vmul.f32 %v3654, %v4290
    %4294 = vrot.lane.b32.xlu0 %v4292, 64
    %v4295 = vpop.permute.xlu0 %4294
    %v4297 = vadd.f32 %v4287, %v4295
    %v4298 = vmul.f32 %v3647, %v4280
    %4299 = vrot.lane.b32.xlu0 %v4268, 96
    %v4300 = vpop.permute.xlu0 %4299
    %v4302 = vmul.f32 %v3654, %v4300
    %4304 = vrot.lane.b32.xlu0 %v4302, 32
    %v4305 = vpop.permute.xlu0 %4304
    %v4307 = vadd.f32 %v4298, %v4305
    %v4309 = vrot.slane %v4297, 2
    %4310 = vrot.lane.b32.xlu0 %v4309, 64
    %v4311 = vpop.permute.xlu0 %4310
    %v4312 = vsel %vm197, %v4311, 0
    %4314 = vmatprep.subr.mxu0 0.0
    %4315 = vmatpush1.msra.mxu0 0.0
    %4316 = vmatprep.subr.mxu0 0.0
    %4317 = vmatpush1.msra.mxu0 0.0
    %4318 = vmatprep.subr.mxu0 0.0
    %4319 = vmatpush1.msra.mxu0 0.0
    %4320 = vmatprep.subr.mxu0 0.0
    %4321 = vmatpush1.msra.mxu0 0.0
    %4322 = vmatprep.subr.mxu0 0.0
    %4323 = vmatpush1.msra.mxu0 0.0
    %4324 = vmatprep.subr.mxu0 0.0
    %4325 = vmatpush1.msra.mxu0 0.0
    %4326 = vmatprep.subr.mxu0 0.0
    %4327 = vmatpush1.msra.mxu0 0.0
    %4328 = vmatprep.subr.mxu0 0.0
    %4329 = vmatpush1.msra.mxu0 0.0
    %4330 = vmatprep.subr.mxu0 0.0
    %4331 = vmatpush1.msra.mxu0 0.0
    %4332 = vmatprep.subr.mxu0 0.0
    %4333 = vmatpush1.msra.mxu0 0.0
    %4334 = vmatprep.subr.mxu0 0.0
    %4335 = vmatpush1.msra.mxu0 0.0
    %4336 = vmatprep.subr.mxu0 0.0
    %4337 = vmatpush1.msra.mxu0 0.0
    %4338 = vmatprep.subr.mxu0 0.0
    %4339 = vmatpush1.msra.mxu0 %v61
    %4340 = vmatprep.subr.mxu0 0.0
    %4341 = vmatpush1.msra.mxu0 %v60
    %4342 = vmatprep.subr.mxu0 0.0
    %4343 = vmatpush1.msra.mxu0 %v59
    %4344 = vmatprep.subr.mxu0 0.0
    %4345 = vmatpush1.msra.mxu0 %v58
    %4346 = vmatprep.subr.mxu0 0.0
    %4347 = vmatpush2.msra.mxu0 0.0
    %4348 = vmatprep.subr.mxu0 0.0
    %4349 = vmatpush2.msra.mxu0 0.0
    %4350 = vmatprep.subr.mxu0 0.0
    %4351 = vmatpush2.msra.mxu0 0.0
    %4352 = vmatprep.subr.mxu0 0.0
    %4353 = vmatpush2.msra.mxu0 0.0
    %4354 = vmatprep.subr.mxu0 0.0
    %4355 = vmatpush2.msra.mxu0 0.0
    %4356 = vmatprep.subr.mxu0 0.0
    %4357 = vmatpush2.msra.mxu0 0.0
    %4358 = vmatprep.subr.mxu0 0.0
    %4359 = vmatpush2.msra.mxu0 0.0
    %4360 = vmatprep.subr.mxu0 0.0
    %4361 = vmatpush2.msra.mxu0 0.0
    %4362 = vmatprep.subr.mxu0 0.0
    %4363 = vmatpush2.msra.mxu0 0.0
    %4364 = vmatprep.subr.mxu0 0.0
    %4365 = vmatpush2.msra.mxu0 0.0
    %4366 = vmatprep.subr.mxu0 0.0
    %4367 = vmatpush2.msra.mxu0 0.0
    %4368 = vmatprep.subr.mxu0 0.0
    %4369 = vmatpush2.msra.mxu0 0.0
    %4370 = vmatprep.subr.mxu0 0.0
    %4371 = vmatpush2.msra.mxu0 0.0
    %4372 = vmatprep.subr.mxu0 0.0
    %4373 = vmatpush2.msra.mxu0 0.0
    %4374 = vmatprep.subr.mxu0 0.0
    %4375 = vmatpush2.msra.mxu0 0.0
    %4376 = vmatprep.subr.mxu0 0.0
    %4377 = vmatpush2.msra.mxu0 0.0
    %4378 = vmatprep.mubr.f32.mxu0 0.0
    %4379 = vmatmul.mubr.f32.gmra.mxu0 %v4312
    %v4380 = vpop.f32.mrf.mxu0
    %v4381 = vadd.f32 %v488, %v4380
    %v4382 = vpop.f32.mrf.mxu0
    %4383 = vdwg.mxu0
    %v4386 = vunpack.c.l.s4 1966171168
    %v4387 = vunpack.c.0.s8 %v4386
    %v4388 = vlaneseq
    %v4389 = vshrl.u32 %v4388, 7
    %v4390 = vsub.s32 %v4387, %v4389
    %v4391 = vrot.slane %v4381, %v4390
    %v4392 = vcombine.high %v4391, %v4391
    %v4394 = vunpack.c.l.s4 1966171168
    %v4395 = vunpack.c.0.s8 %v4394
    %v4396 = vlaneseq
    %v4397 = vshrl.u32 %v4396, 7
    %v4398 = vsub.s32 %v4395, %v4397
    %v4399 = vrot.slane %v4391, %v4398
    %v4401 = vunpack.c.l.s4 1966171168
    %v4402 = vunpack.c.0.s8 %v4401
    %v4403 = vlaneseq
    %v4404 = vshrl.u32 %v4403, 7
    %v4405 = vsub.s32 %v4402, %v4404
    %v4406 = vrot.slane %v4392, %v4405
    %v4407 = vlaneseq
    %v4408 = vshrl.u32 %v4407, 7
    %v4409 = vsub.s32 0, %v4408
    %v4410 = vrot.slane %v4399, %v4409
    %v4411 = vlaneseq
    %v4412 = vshrl.u32 %v4411, 7
    %v4413 = vsub.s32 0, %v4412
    %v4414 = vrot.slane %v4406, %v4413
    %v4417 = vadd.f32 %v277, %v4410
    %v4418 = vadd.f32 %v282, %v4410
    %v4419 = vadd.f32 %v287, %v4414
    %v4420 = vadd.f32 %v292, %v4414
    %v4421 = vmax.f32 %v4417, 0.0
    %v4422 = vmax.f32 %v4418, 0.0
    %v4423 = vmax.f32 %v4419, 0.0
    %v4424 = vmax.f32 %v4420, 0.0
    %v4425 = vmul.f32 %v4421, %v606
    %v4426 = vmul.f32 %v4422, %v606
    %v4427 = vmul.f32 %v4423, %v606
    %v4428 = vmul.f32 %v4424, %v606
    %v4429 = vsel %vm401, %v4425, 0.0
    %4430 = vadd.xlane.f32.xlu0 %v4429
    %v4431 = vpop.xlane.xlu0 %4430
    %v4432 = vsel %vm401, %v4426, 0.0
    %4433 = vadd.xlane.f32.xlu0 %v4432
    %v4434 = vpop.xlane.xlu0 %4433
    %v4435 = vsel %vm401, %v4427, 0.0
    %4436 = vadd.xlane.f32.xlu0 %v4435
    %v4437 = vpop.xlane.xlu0 %4436
    %v4438 = vsel %vm401, %v4428, 0.0
    %4439 = vadd.xlane.f32.xlu0 %v4438
    %v4440 = vpop.xlane.xlu0 %4439
    %v4441 = vadd.f32 %v4431, %v627
    %v4442 = vadd.f32 %v4434, %v627
    %v4443 = vadd.f32 %v4437, %v627
    %v4444 = vadd.f32 %v4440, %v627
    %v4449 = vlaneseq
    %v4450 = vshrl.u32 %v4449, 7
    %v4451 = vsub.s32 %v638, %v4450
    %v4452 = vrot.slane %v4441, %v4451
    %v4453 = vlaneseq
    %v4454 = vshrl.u32 %v4453, 7
    %v4455 = vsub.s32 %v643, %v4454
    %v4456 = vrot.slane %v4442, %v4455
    %v4457 = vsel %vm648, %v4456, %v4452
    %v4458 = vlaneseq
    %v4459 = vshrl.u32 %v4458, 7
    %v4460 = vsub.s32 %v638, %v4459
    %v4461 = vrot.slane %v4443, %v4460
    %v4462 = vlaneseq
    %v4463 = vshrl.u32 %v4462, 7
    %v4464 = vsub.s32 %v643, %v4463
    %v4465 = vrot.slane %v4444, %v4464
    %v4466 = vsel %vm648, %v4465, %v4461
    %v4467 = vsel %vm659, %v4466, %v4457
    %v4469 = vsel %vm662, %v4467, -inf
    %4470 = vmax.xlane.f32.xlu0 %v4469
    %v4471 = vpop.xlane.xlu0 %4470
    %v4473 = vlaneseq
    %v4474 = vshrl.u32 %v4473, 7
    %v4475 = vsub.s32 0, %v4474
    %v4476 = vrot.slane %v4471, %v4475
    %v4477 = vlaneseq
    %v4478 = vshrl.u32 %v4477, 7
    %v4479 = vsub.s32 1, %v4478
    %v4480 = vrot.slane %v4471, %v4479
    %v4483 = vsub.f32 %v4441, %v4476
    %v4484 = vsub.f32 %v4442, %v4476
    %v4485 = vsub.f32 %v4443, %v4480
    %v4486 = vsub.f32 %v4444, %v4480
    %v4487 = vmul.f32 %v4483, 1.442695
    %v4488 = vpow.pop %v4487
    %v4489 = vmul.f32 %v4484, 1.442695
    %v4490 = vpow.pop %v4489
    %v4491 = vmul.f32 %v4485, 1.442695
    %v4492 = vpow.pop %v4491
    %v4493 = vmul.f32 %v4486, 1.442695
    %v4494 = vpow.pop %v4493
    %4499 = vset.pattern.permute.xlu0 0
    %4500 = vperm.xlu0 %4499, %v4488
    %v4501 = vpop.permute.xlu0 %4500
    %4502 = vset.pattern.permute.xlu0 0
    %4503 = vperm.xlu0 %4502, %v4490
    %v4504 = vpop.permute.xlu0 %4503
    %4505 = vset.pattern.permute.xlu0 0
    %4506 = vperm.xlu0 %4505, %v4492
    %v4507 = vpop.permute.xlu0 %4506
    %4508 = vset.pattern.permute.xlu0 0
    %4509 = vperm.xlu0 %4508, %v4494
    %v4510 = vpop.permute.xlu0 %4509
    %v4511 = vlaneseq
    %v4512 = vshrl.u32 %v4511, 7
    %v4513 = vsub.s32 %v638, %v4512
    %v4514 = vrot.slane %v4501, %v4513
    %v4515 = vlaneseq
    %v4516 = vshrl.u32 %v4515, 7
    %v4517 = vsub.s32 %v643, %v4516
    %v4518 = vrot.slane %v4504, %v4517
    %v4519 = vsel %vm648, %v4518, %v4514
    %v4520 = vlaneseq
    %v4521 = vshrl.u32 %v4520, 7
    %v4522 = vsub.s32 %v638, %v4521
    %v4523 = vrot.slane %v4507, %v4522
    %v4524 = vlaneseq
    %v4525 = vshrl.u32 %v4524, 7
    %v4526 = vsub.s32 %v643, %v4525
    %v4527 = vrot.slane %v4510, %v4526
    %v4528 = vsel %vm648, %v4527, %v4523
    %v4529 = vsel %vm659, %v4528, %v4519
    %v4531 = vsel %vm662, %v4529, 0.0
    %4532 = vadd.xlane.f32.xlu0 %v4531
    %v4533 = vpop.xlane.xlu0 %4532
    %v4534 = vrcp.pop %v4533
    %v4536 = vlaneseq
    %v4537 = vshrl.u32 %v4536, 7
    %v4538 = vsub.s32 0, %v4537
    %v4539 = vrot.slane %v4534, %v4538
    %v4540 = vlaneseq
    %v4541 = vshrl.u32 %v4540, 7
    %v4542 = vsub.s32 1, %v4541
    %v4543 = vrot.slane %v4534, %v4542
    %v4546 = vmul.f32 %v4488, %v4539
    %v4547 = vmul.f32 %v4490, %v4539
    %v4548 = vmul.f32 %v4492, %v4543
    %v4549 = vmul.f32 %v4494, %v4543
    %4552 = vset.pattern.permute.xlu0 0
    %4553 = vperm.xlu0 %4552, %v4546
    %v4554 = vpop.permute.xlu0 %4553
    %4555 = vset.pattern.permute.xlu0 0
    %4556 = vperm.xlu0 %4555, %v4547
    %v4557 = vpop.permute.xlu0 %4556
    %v4558 = vlaneseq
    %v4559 = vshrl.u32 %v4558, 7
    %v4560 = vsub.s32 %v638, %v4559
    %v4561 = vrot.slane %v4554, %v4560
    %v4562 = vlaneseq
    %v4563 = vshrl.u32 %v4562, 7
    %v4564 = vsub.s32 %v643, %v4563
    %v4565 = vrot.slane %v4557, %v4564
    %v4566 = vsel %vm648, %v4565, %v4561
    %v4567 = vsel %vm401, %v4566, 0
    %4569 = vmatprep.subr.mxu0 0.0
    %4570 = vmatpush1.msra.mxu0 0.0
    %4571 = vmatprep.subr.mxu0 0.0
    %4572 = vmatpush1.msra.mxu0 0.0
    %4573 = vmatprep.subr.mxu0 0.0
    %4574 = vmatpush1.msra.mxu0 0.0
    %4575 = vmatprep.subr.mxu0 0.0
    %4576 = vmatpush1.msra.mxu0 0.0
    %4577 = vmatprep.subr.mxu0 0.0
    %4578 = vmatpush1.msra.mxu0 0.0
    %4579 = vmatprep.subr.mxu0 0.0
    %4580 = vmatpush1.msra.mxu0 0.0
    %4581 = vmatprep.subr.mxu0 0.0
    %4582 = vmatpush1.msra.mxu0 0.0
    %4583 = vmatprep.subr.mxu0 0.0
    %4584 = vmatpush1.msra.mxu0 0.0
    %4585 = vmatprep.subr.mxu0 0.0
    %4586 = vmatpush1.msra.mxu0 0.0
    %4587 = vmatprep.subr.mxu0 0.0
    %4588 = vmatpush1.msra.mxu0 0.0
    %4589 = vmatprep.subr.mxu0 0.0
    %4590 = vmatpush1.msra.mxu0 0.0
    %4591 = vmatprep.subr.mxu0 0.0
    %4592 = vmatpush1.msra.mxu0 0.0
    %4593 = vmatprep.subr.mxu0 0.0
    %4594 = vmatpush1.msra.mxu0 0.0
    %4595 = vmatprep.subr.mxu0 0.0
    %4596 = vmatpush1.msra.mxu0 0.0
    %4597 = vmatprep.subr.mxu0 0.0
    %4598 = vmatpush1.msra.mxu0 %v180
    %4599 = vmatprep.subr.mxu0 0.0
    %4600 = vmatpush1.msra.mxu0 %v175
    %4601 = vmatprep.subr.mxu0 0.0
    %4602 = vmatpush2.msra.mxu0 0.0
    %4603 = vmatprep.subr.mxu0 0.0
    %4604 = vmatpush2.msra.mxu0 0.0
    %4605 = vmatprep.subr.mxu0 0.0
    %4606 = vmatpush2.msra.mxu0 0.0
    %4607 = vmatprep.subr.mxu0 0.0
    %4608 = vmatpush2.msra.mxu0 0.0
    %4609 = vmatprep.subr.mxu0 0.0
    %4610 = vmatpush2.msra.mxu0 0.0
    %4611 = vmatprep.subr.mxu0 0.0
    %4612 = vmatpush2.msra.mxu0 0.0
    %4613 = vmatprep.subr.mxu0 0.0
    %4614 = vmatpush2.msra.mxu0 0.0
    %4615 = vmatprep.subr.mxu0 0.0
    %4616 = vmatpush2.msra.mxu0 0.0
    %4617 = vmatprep.subr.mxu0 0.0
    %4618 = vmatpush2.msra.mxu0 0.0
    %4619 = vmatprep.subr.mxu0 0.0
    %4620 = vmatpush2.msra.mxu0 0.0
    %4621 = vmatprep.subr.mxu0 0.0
    %4622 = vmatpush2.msra.mxu0 0.0
    %4623 = vmatprep.subr.mxu0 0.0
    %4624 = vmatpush2.msra.mxu0 0.0
    %4625 = vmatprep.subr.mxu0 0.0
    %4626 = vmatpush2.msra.mxu0 0.0
    %4627 = vmatprep.subr.mxu0 0.0
    %4628 = vmatpush2.msra.mxu0 0.0
    %4629 = vmatprep.subr.mxu0 0.0
    %4630 = vmatpush2.msra.mxu0 0.0
    %4631 = vmatprep.subr.mxu0 0.0
    %4632 = vmatpush2.msra.mxu0 0.0
    %4633 = vmatprep.mubr.f32.mxu0 0.0
    %4634 = vmatmul.mubr.f32.gmra.mxu0 %v4567
    %v4635 = vpop.f32.mrf.mxu0
    %v4636 = vadd.f32 0.0, %v4635
    %v4637 = vpop.f32.mrf.mxu0
    %4638 = vdwg.mxu0
    %4641 = vset.pattern.permute.xlu0 0
    %4642 = vperm.xlu0 %4641, %v4548
    %v4643 = vpop.permute.xlu0 %4642
    %4644 = vset.pattern.permute.xlu0 0
    %4645 = vperm.xlu0 %4644, %v4549
    %v4646 = vpop.permute.xlu0 %4645
    %v4647 = vlaneseq
    %v4648 = vshrl.u32 %v4647, 7
    %v4649 = vsub.s32 %v638, %v4648
    %v4650 = vrot.slane %v4643, %v4649
    %v4651 = vlaneseq
    %v4652 = vshrl.u32 %v4651, 7
    %v4653 = vsub.s32 %v643, %v4652
    %v4654 = vrot.slane %v4646, %v4653
    %v4655 = vsel %vm648, %v4654, %v4650
    %v4656 = vsel %vm401, %v4655, 0
    %4658 = vmatprep.subr.mxu0 0.0
    %4659 = vmatpush1.msra.mxu0 0.0
    %4660 = vmatprep.subr.mxu0 0.0
    %4661 = vmatpush1.msra.mxu0 0.0
    %4662 = vmatprep.subr.mxu0 0.0
    %4663 = vmatpush1.msra.mxu0 0.0
    %4664 = vmatprep.subr.mxu0 0.0
    %4665 = vmatpush1.msra.mxu0 0.0
    %4666 = vmatprep.subr.mxu0 0.0
    %4667 = vmatpush1.msra.mxu0 0.0
    %4668 = vmatprep.subr.mxu0 0.0
    %4669 = vmatpush1.msra.mxu0 0.0
    %4670 = vmatprep.subr.mxu0 0.0
    %4671 = vmatpush1.msra.mxu0 0.0
    %4672 = vmatprep.subr.mxu0 0.0
    %4673 = vmatpush1.msra.mxu0 0.0
    %4674 = vmatprep.subr.mxu0 0.0
    %4675 = vmatpush1.msra.mxu0 0.0
    %4676 = vmatprep.subr.mxu0 0.0
    %4677 = vmatpush1.msra.mxu0 0.0
    %4678 = vmatprep.subr.mxu0 0.0
    %4679 = vmatpush1.msra.mxu0 0.0
    %4680 = vmatprep.subr.mxu0 0.0
    %4681 = vmatpush1.msra.mxu0 0.0
    %4682 = vmatprep.subr.mxu0 0.0
    %4683 = vmatpush1.msra.mxu0 0.0
    %4684 = vmatprep.subr.mxu0 0.0
    %4685 = vmatpush1.msra.mxu0 0.0
    %4686 = vmatprep.subr.mxu0 0.0
    %4687 = vmatpush1.msra.mxu0 %v190
    %4688 = vmatprep.subr.mxu0 0.0
    %4689 = vmatpush1.msra.mxu0 %v185
    %4690 = vmatprep.subr.mxu0 0.0
    %4691 = vmatpush2.msra.mxu0 0.0
    %4692 = vmatprep.subr.mxu0 0.0
    %4693 = vmatpush2.msra.mxu0 0.0
    %4694 = vmatprep.subr.mxu0 0.0
    %4695 = vmatpush2.msra.mxu0 0.0
    %4696 = vmatprep.subr.mxu0 0.0
    %4697 = vmatpush2.msra.mxu0 0.0
    %4698 = vmatprep.subr.mxu0 0.0
    %4699 = vmatpush2.msra.mxu0 0.0
    %4700 = vmatprep.subr.mxu0 0.0
    %4701 = vmatpush2.msra.mxu0 0.0
    %4702 = vmatprep.subr.mxu0 0.0
    %4703 = vmatpush2.msra.mxu0 0.0
    %4704 = vmatprep.subr.mxu0 0.0
    %4705 = vmatpush2.msra.mxu0 0.0
    %4706 = vmatprep.subr.mxu0 0.0
    %4707 = vmatpush2.msra.mxu0 0.0
    %4708 = vmatprep.subr.mxu0 0.0
    %4709 = vmatpush2.msra.mxu0 0.0
    %4710 = vmatprep.subr.mxu0 0.0
    %4711 = vmatpush2.msra.mxu0 0.0
    %4712 = vmatprep.subr.mxu0 0.0
    %4713 = vmatpush2.msra.mxu0 0.0
    %4714 = vmatprep.subr.mxu0 0.0
    %4715 = vmatpush2.msra.mxu0 0.0
    %4716 = vmatprep.subr.mxu0 0.0
    %4717 = vmatpush2.msra.mxu0 0.0
    %4718 = vmatprep.subr.mxu0 0.0
    %4719 = vmatpush2.msra.mxu0 0.0
    %4720 = vmatprep.subr.mxu0 0.0
    %4721 = vmatpush2.msra.mxu0 0.0
    %4722 = vmatprep.mubr.f32.mxu0 0.0
    %4723 = vmatmul.mubr.f32.gmra.mxu0 %v4656
    %v4724 = vpop.f32.mrf.mxu0
    %v4725 = vadd.f32 0.0, %v4724
    %v4726 = vpop.f32.mrf.mxu0
    %4727 = vdwg.mxu0
    %v4729 = vrot.slane %v4725, 7
    %v4731 = vsel %vm316, %v4636, %v4729
    %v4732 = vxor.u32 %v4381, 2147483648
    %v4733 = vmul.f32 %v4732, 1.442695
    %v4734 = vpow.pop %v4733
    %v4735 = vadd.f32 %v4734, 1.0
    %v4736 = vrcp.pop %v4735
    %v4737 = vmul.f32 1.0, %v4736
    %4739 = vrot.lane.b32.xlu0 %v4731, 16
    %v4740 = vpop.permute.xlu0 %4739
    %v4742 = vmul.f32 %v4737, %v4740
    %4744 = vrot.lane.b32.xlu0 %v4742, 112
    %v4745 = vpop.permute.xlu0 %4744
    %v4746 = vsel %vm197, %v4745, 0
    %4748 = vmatprep.subr.mxu0 0.0
    %4749 = vmatpush1.msra.mxu0 0.0
    %4750 = vmatprep.subr.mxu0 0.0
    %4751 = vmatpush1.msra.mxu0 0.0
    %4752 = vmatprep.subr.mxu0 0.0
    %4753 = vmatpush1.msra.mxu0 0.0
    %4754 = vmatprep.subr.mxu0 0.0
    %4755 = vmatpush1.msra.mxu0 0.0
    %4756 = vmatprep.subr.mxu0 0.0
    %4757 = vmatpush1.msra.mxu0 0.0
    %4758 = vmatprep.subr.mxu0 0.0
    %4759 = vmatpush1.msra.mxu0 0.0
    %4760 = vmatprep.subr.mxu0 0.0
    %4761 = vmatpush1.msra.mxu0 0.0
    %4762 = vmatprep.subr.mxu0 0.0
    %4763 = vmatpush1.msra.mxu0 0.0
    %4764 = vmatprep.subr.mxu0 0.0
    %4765 = vmatpush1.msra.mxu0 0.0
    %4766 = vmatprep.subr.mxu0 0.0
    %4767 = vmatpush1.msra.mxu0 0.0
    %4768 = vmatprep.subr.mxu0 0.0
    %4769 = vmatpush1.msra.mxu0 0.0
    %4770 = vmatprep.subr.mxu0 0.0
    %4771 = vmatpush1.msra.mxu0 0.0
    %4772 = vmatprep.subr.mxu0 0.0
    %4773 = vmatpush1.msra.mxu0 %v71
    %4774 = vmatprep.subr.mxu0 0.0
    %4775 = vmatpush1.msra.mxu0 %v70
    %4776 = vmatprep.subr.mxu0 0.0
    %4777 = vmatpush1.msra.mxu0 %v69
    %4778 = vmatprep.subr.mxu0 0.0
    %4779 = vmatpush1.msra.mxu0 %v68
    %4780 = vmatprep.subr.mxu0 0.0
    %4781 = vmatpush2.msra.mxu0 0.0
    %4782 = vmatprep.subr.mxu0 0.0
    %4783 = vmatpush2.msra.mxu0 0.0
    %4784 = vmatprep.subr.mxu0 0.0
    %4785 = vmatpush2.msra.mxu0 0.0
    %4786 = vmatprep.subr.mxu0 0.0
    %4787 = vmatpush2.msra.mxu0 0.0
    %4788 = vmatprep.subr.mxu0 0.0
    %4789 = vmatpush2.msra.mxu0 0.0
    %4790 = vmatprep.subr.mxu0 0.0
    %4791 = vmatpush2.msra.mxu0 0.0
    %4792 = vmatprep.subr.mxu0 0.0
    %4793 = vmatpush2.msra.mxu0 0.0
    %4794 = vmatprep.subr.mxu0 0.0
    %4795 = vmatpush2.msra.mxu0 0.0
    %4796 = vmatprep.subr.mxu0 0.0
    %4797 = vmatpush2.msra.mxu0 0.0
    %4798 = vmatprep.subr.mxu0 0.0
    %4799 = vmatpush2.msra.mxu0 0.0
    %4800 = vmatprep.subr.mxu0 0.0
    %4801 = vmatpush2.msra.mxu0 0.0
    %4802 = vmatprep.subr.mxu0 0.0
    %4803 = vmatpush2.msra.mxu0 0.0
    %4804 = vmatprep.subr.mxu0 0.0
    %4805 = vmatpush2.msra.mxu0 0.0
    %4806 = vmatprep.subr.mxu0 0.0
    %4807 = vmatpush2.msra.mxu0 0.0
    %4808 = vmatprep.subr.mxu0 0.0
    %4809 = vmatpush2.msra.mxu0 0.0
    %4810 = vmatprep.subr.mxu0 0.0
    %4811 = vmatpush2.msra.mxu0 0.0
    %4812 = vmatprep.mubr.f32.mxu0 0.0
    %4813 = vmatmul.mubr.f32.gmra.mxu0 %v4746
    %v4814 = vpop.f32.mrf.mxu0
    %v4815 = vadd.f32 0.0, %v4814
    %v4816 = vpop.f32.mrf.mxu0
    %4817 = vdwg.mxu0
    %v4819 = vrot.slane %v4815, 4
    %v4821 = vadd.f32 %v480, %v4819
    %4822 = vmatprep.subr.mxu0 0.0
    %4823 = vmatpush1.msra.mxu0 0.0
    %4824 = vmatprep.subr.mxu0 0.0
    %4825 = vmatpush1.msra.mxu0 0.0
    %4826 = vmatprep.subr.mxu0 0.0
    %4827 = vmatpush1.msra.mxu0 0.0
    %4828 = vmatprep.subr.mxu0 0.0
    %4829 = vmatpush1.msra.mxu0 0.0
    %4830 = vmatprep.subr.mxu0 0.0
    %4831 = vmatpush1.msra.mxu0 0.0
    %4832 = vmatprep.subr.mxu0 0.0
    %4833 = vmatpush1.msra.mxu0 0.0
    %4834 = vmatprep.subr.mxu0 0.0
    %4835 = vmatpush1.msra.mxu0 0.0
    %4836 = vmatprep.subr.mxu0 0.0
    %4837 = vmatpush1.msra.mxu0 0.0
    %4838 = vmatprep.subr.mxu0 0.0
    %4839 = vmatpush1.msra.mxu0 0.0
    %4840 = vmatprep.subr.mxu0 0.0
    %4841 = vmatpush1.msra.mxu0 0.0
    %4842 = vmatprep.subr.mxu0 0.0
    %4843 = vmatpush1.msra.mxu0 0.0
    %4844 = vmatprep.subr.mxu0 0.0
    %4845 = vmatpush1.msra.mxu0 0.0
    %4846 = vmatprep.subr.mxu0 0.0
    %4847 = vmatpush1.msra.mxu0 %v75
    %4848 = vmatprep.subr.mxu0 0.0
    %4849 = vmatpush1.msra.mxu0 %v74
    %4850 = vmatprep.subr.mxu0 0.0
    %4851 = vmatpush1.msra.mxu0 %v73
    %4852 = vmatprep.subr.mxu0 0.0
    %4853 = vmatpush1.msra.mxu0 %v72
    %4854 = vmatprep.subr.mxu0 0.0
    %4855 = vmatpush2.msra.mxu0 0.0
    %4856 = vmatprep.subr.mxu0 0.0
    %4857 = vmatpush2.msra.mxu0 0.0
    %4858 = vmatprep.subr.mxu0 0.0
    %4859 = vmatpush2.msra.mxu0 0.0
    %4860 = vmatprep.subr.mxu0 0.0
    %4861 = vmatpush2.msra.mxu0 0.0
    %4862 = vmatprep.subr.mxu0 0.0
    %4863 = vmatpush2.msra.mxu0 0.0
    %4864 = vmatprep.subr.mxu0 0.0
    %4865 = vmatpush2.msra.mxu0 0.0
    %4866 = vmatprep.subr.mxu0 0.0
    %4867 = vmatpush2.msra.mxu0 0.0
    %4868 = vmatprep.subr.mxu0 0.0
    %4869 = vmatpush2.msra.mxu0 0.0
    %4870 = vmatprep.subr.mxu0 0.0
    %4871 = vmatpush2.msra.mxu0 0.0
    %4872 = vmatprep.subr.mxu0 0.0
    %4873 = vmatpush2.msra.mxu0 0.0
    %4874 = vmatprep.subr.mxu0 0.0
    %4875 = vmatpush2.msra.mxu0 0.0
    %4876 = vmatprep.subr.mxu0 0.0
    %4877 = vmatpush2.msra.mxu0 0.0
    %4878 = vmatprep.subr.mxu0 0.0
    %4879 = vmatpush2.msra.mxu0 0.0
    %4880 = vmatprep.subr.mxu0 0.0
    %4881 = vmatpush2.msra.mxu0 0.0
    %4882 = vmatprep.subr.mxu0 0.0
    %4883 = vmatpush2.msra.mxu0 0.0
    %4884 = vmatprep.subr.mxu0 0.0
    %4885 = vmatpush2.msra.mxu0 0.0
    %4886 = vmatprep.mubr.f32.mxu0 0.0
    %4887 = vmatmul.mubr.f32.gmra.mxu0 %v4312
    %v4888 = vpop.f32.mrf.mxu0
    %v4889 = vadd.f32 0.0, %v4888
    %v4890 = vpop.f32.mrf.mxu0
    %4891 = vdwg.mxu0
    %v4893 = vrot.slane %v4889, 4
    %v4895 = vadd.f32 %v4821, %v4893
    %v4896 = vxor.u32 %v4895, 2147483648
    %v4897 = vmul.f32 %v4896, 1.442695
    %v4898 = vpow.pop %v4897
    %v4899 = vadd.f32 %v4898, 1.0
    %v4900 = vrcp.pop %v4899
    %v4901 = vmul.f32 1.0, %v4900
    %v4902 = vtanh.pop %v4895
    %v4904 = vrot.slane %v4307, 6
    %v4906 = vmul.f32 %v4901, %v4904
    %4908 = vrot.lane.b32.xlu0 %v4902, 32
    %v4909 = vpop.permute.xlu0 %4908
    %v4911 = vmul.f32 %v4901, %v4909
    %4913 = vrot.lane.b32.xlu0 %v4911, 32
    %v4914 = vpop.permute.xlu0 %4913
    %v4916 = vadd.f32 %v4906, %v4914
    %v4917 = vtanh.pop %v4916
    %4919 = vrot.lane.b32.xlu0 %v4917, 32
    %v4920 = vpop.permute.xlu0 %4919
    %v4922 = vmul.f32 %v4901, %v4920
    %vm4923 = vcmask 1041408
    %v4924 = vsel %vm4923, %v1107, %v1741
    %vm4925 = vcmask 1043456
    %v4926 = vsel %vm4925, %v4924, %v2377
    %vm4927 = vcmask 1045504
    %v4928 = vsel %vm4927, %v4926, %v3013
    %v4929 = vsel %vm4923, %v3643, %v4286
    %v4930 = vsel %vm4925, %v4929, %v4922
    %v4931 = vsel %vm659, %v849, %v760
    %vm4933 = vcmask 1043459
    %v4934 = vsel %vm4933, %v1474, %v1385
    %vm4936 = vcmask 1045509
    %v4937 = vsel %vm4936, %v2110, %v2021
    %vm4939 = vcmask 1047559
    %v4940 = vsel %vm4939, %v2746, %v2657
    %v4942 = vsel %vm659, %v3382, %v3293
    %v4944 = vsel %vm4933, %v4019, %v3930
    %v4946 = vsel %vm4936, %v4655, %v4566
    %v4948 = vsel %vm4923, %v4931, %v4934
    %v4949 = vsel %vm4925, %v4948, %v4937
    %v4950 = vsel %vm4927, %v4949, %v4940
    %v4951 = vsel %vm4923, %v4942, %v4944
    %v4952 = vsel %vm4925, %v4951, %v4946
    %v4953 = vlaneseq
    %v4954 = vshrl.u32 %v4953, 7
    %v4955 = vsub.s32 0, %v4954
    %v4956 = vrot.slane %v86, %v4955
    %4959 = vrot.lane.b32.xlu0 %v4928, 64
    %v4960 = vpop.permute.xlu0 %4959
    %4961 = vrot.lane.b32.xlu0 %v4930, 64
    %v4962 = vpop.permute.xlu0 %4961
    %v4963 = vsel %vm197, %v4960, 0
    %v4965 = vsel %vm197, %v4962, 0
    %4967 = vmatprep.subr.mxu0 0.0
    %4968 = vmatpush1.msra.mxu0 0.0
    %4969 = vmatprep.subr.mxu0 0.0
    %4970 = vmatpush1.msra.mxu0 0.0
    %4971 = vmatprep.subr.mxu0 0.0
    %4972 = vmatpush1.msra.mxu0 0.0
    %4973 = vmatprep.subr.mxu0 0.0
    %4974 = vmatpush1.msra.mxu0 0.0
    %4975 = vmatprep.subr.mxu0 0.0
    %4976 = vmatpush1.msra.mxu0 0.0
    %4977 = vmatprep.subr.mxu0 0.0
    %4978 = vmatpush1.msra.mxu0 0.0
    %4979 = vmatprep.subr.mxu0 0.0
    %4980 = vmatpush1.msra.mxu0 0.0
    %4981 = vmatprep.subr.mxu0 0.0
    %4982 = vmatpush1.msra.mxu0 0.0
    %4983 = vmatprep.subr.mxu0 0.0
    %4984 = vmatpush1.msra.mxu0 0.0
    %4985 = vmatprep.subr.mxu0 0.0
    %4986 = vmatpush1.msra.mxu0 0.0
    %4987 = vmatprep.subr.mxu0 0.0
    %4988 = vmatpush1.msra.mxu0 0.0
    %4989 = vmatprep.subr.mxu0 0.0
    %4990 = vmatpush1.msra.mxu0 0.0
    %4991 = vmatprep.subr.mxu0 0.0
    %4992 = vmatpush1.msra.mxu0 %v79
    %4993 = vmatprep.subr.mxu0 0.0
    %4994 = vmatpush1.msra.mxu0 %v78
    %4995 = vmatprep.subr.mxu0 0.0
    %4996 = vmatpush1.msra.mxu0 %v77
    %4997 = vmatprep.subr.mxu0 0.0
    %4998 = vmatpush1.msra.mxu0 %v76
    %4999 = vmatprep.subr.mxu0 0.0
    %5000 = vmatpush2.msra.mxu0 0.0
    %5001 = vmatprep.subr.mxu0 0.0
    %5002 = vmatpush2.msra.mxu0 0.0
    %5003 = vmatprep.subr.mxu0 0.0
    %5004 = vmatpush2.msra.mxu0 0.0
    %5005 = vmatprep.subr.mxu0 0.0
    %5006 = vmatpush2.msra.mxu0 0.0
    %5007 = vmatprep.subr.mxu0 0.0
    %5008 = vmatpush2.msra.mxu0 0.0
    %5009 = vmatprep.subr.mxu0 0.0
    %5010 = vmatpush2.msra.mxu0 0.0
    %5011 = vmatprep.subr.mxu0 0.0
    %5012 = vmatpush2.msra.mxu0 0.0
    %5013 = vmatprep.subr.mxu0 0.0
    %5014 = vmatpush2.msra.mxu0 0.0
    %5015 = vmatprep.subr.mxu0 0.0
    %5016 = vmatpush2.msra.mxu0 0.0
    %5017 = vmatprep.subr.mxu0 0.0
    %5018 = vmatpush2.msra.mxu0 0.0
    %5019 = vmatprep.subr.mxu0 0.0
    %5020 = vmatpush2.msra.mxu0 0.0
    %5021 = vmatprep.subr.mxu0 0.0
    %5022 = vmatpush2.msra.mxu0 0.0
    %5023 = vmatprep.subr.mxu0 0.0
    %5024 = vmatpush2.msra.mxu0 0.0
    %5025 = vmatprep.subr.mxu0 0.0
    %5026 = vmatpush2.msra.mxu0 0.0
    %5027 = vmatprep.subr.mxu0 0.0
    %5028 = vmatpush2.msra.mxu0 0.0
    %5029 = vmatprep.subr.mxu0 0.0
    %5030 = vmatpush2.msra.mxu0 0.0
    %5031 = vmatprep.mubr.f32.mxu0 0.0
    %5032 = vmatmul.mubr.f32.gmra.mxu0 %v4963
    %v5033 = vpop.f32.mrf.mxu0
    %v5034 = vadd.f32 %v4956, %v5033
    %v5035 = vpop.f32.mrf.mxu0
    %5036 = vmatprep.mubr.f32.mxu0 0.0
    %5037 = vmatmul.mubr.f32.gmra.mxu0 %v4965
    %v5038 = vpop.f32.mrf.mxu0
    %v5039 = vadd.f32 %v4956, %v5038
    %v5040 = vpop.f32.mrf.mxu0
    %5041 = vdwg.mxu0
    %5044 = vrot.lane.b32.xlu0 %v4950, 64
    %v5045 = vpop.permute.xlu0 %5044
    %5046 = vrot.lane.b32.xlu0 %v4952, 64
    %v5047 = vpop.permute.xlu0 %5046
    %v5050 = vsel %vm95, %v5034, %v5045
    %v5051 = vsel %vm95, %v5039, %v5047
    %vm5052 = vcmask 654336
    %v5053 = vsel %vm5052, %v5050, 0.0
    %v5054 = vsel %vm5052, %v5051, 0.0
    %v5055 = vmul.f32 %v1111, %v5053
    %v5056 = vmul.f32 %v3647, %v5054
    %5057 = vst [vmem:[#allocation7] sm:$0xff] %v5055
    %5058 = vst [vmem:[#allocation7 + $0x8] sm:$0x3f] %v5056
    // Predicated region
    $region26: #{tpu_custom_call.1} parent=1 // pred_check
      _
    $region27: #{tpu_custom_call.1} parent=1 // pred_check_branch
      %5060 = sbr.rel (0) target = $region29
    $region28: #{tpu_custom_call.1} parent=1 // pred_region
      %s5062 = ssub.s32 256, 256
      %5063 = vsyncadd [#allocation4], %s5062
      %s5064 = sshll.u32 [#allocation7], 4
      %s5065 = int_to_ptr.vmem [resolvable:$true] %s5064
      %5070 = dma.vmem_to_hbm [thread:$0]  %s5065, 256, %s4, [#allocation4], 128, 128, 8
    $region29: #{tpu_custom_call.1} parent=1 // pred_fallthru
      _
    // Predicated region
    $region30: #{tpu_custom_call.1} parent=1 // pred_check
      _
    $region31: #{tpu_custom_call.1} parent=1 // pred_check_branch
      %5072 = sbr.rel (0) target = $region33
    $region32: #{tpu_custom_call.1} parent=1 // pred_region
      %5073 = dma.done [#allocation4], 256
    $region33: #{tpu_custom_call.1} parent=1 // pred_fallthru
      _
    %5074 = vsyncpa [#allocation3], 1
    %5075 = vsyncpa [#allocation6], 1
    %5076 = vsyncpa [#allocation4], 1

</llo_original>
